<compile_context>
chip_gen: v6e
topology: v6e:2x2x1
jax: 0.10.0
libtpu: 0.0.40
codegen_flags: <defaults>
</compile_context>

<pallas_src>
import functools
import math

import jax
import jax.numpy as jnp
from jax import lax
from jax.experimental import pallas as pl
from jax.experimental.pallas import tpu as pltpu

_VMEM_LIMIT = 32 * 1024 * 1024  # explicit scoped-VMEM budget: safe on v5e/v6e/v7x


def _round_up(x, m):
    return ((x + m - 1) // m) * m


# ---------------------------------------------------------------------------
# Tiled linear kernel: y = x @ W + b (optional fused ReLU), bf16 MXU / f32 accumulate
# ---------------------------------------------------------------------------

def _linear_kernel(x_ref, w_ref, b_ref, o_ref, acc_ref, *, activation):
    k = pl.program_id(2)

    @pl.when(k == 0)
    def _():
        acc_ref[...] = jnp.zeros_like(acc_ref)

    acc_ref[...] += jnp.dot(
        x_ref[...].astype(jnp.bfloat16),
        w_ref[...].astype(jnp.bfloat16),
        preferred_element_type=jnp.float32)

    @pl.when(k == pl.num_programs(2) - 1)
    def _():
        y = acc_ref[...] + b_ref[...]
        if activation == "relu":
            y = jnp.maximum(y, 0.0)
        o_ref[...] = y.astype(o_ref.dtype)


def linear(x2d, w, b, activation="none"):
    M, K = x2d.shape
    K2, N = w.shape
    assert K == K2
    # tile selection: full dim when small (always legal), 8/128-aligned tiles + zero pad when big
    tm = M if M <= 256 else 256
    tk = K if K <= 512 else 512
    tn = N if N <= 256 else 256
    Mp, Kp, Np = _round_up(M, tm), _round_up(K, tk), _round_up(N, tn)
    xp = x2d if (Mp, Kp) == (M, K) else jnp.pad(x2d, ((0, Mp - M), (0, Kp - K)))
    wp = w if (Kp, Np) == (K, N) else jnp.pad(w, ((0, Kp - K), (0, Np - N)))
    bp = b.reshape(1, N)
    if Np != N:
        bp = jnp.pad(bp, ((0, 0), (0, Np - N)))

    out = pl.pallas_call(
        functools.partial(_linear_kernel, activation=activation),
        out_shape=jax.ShapeDtypeStruct((Mp, Np), x2d.dtype),
        grid=(Mp // tm, Np // tn, Kp // tk),
        in_specs=[
            pl.BlockSpec((tm, tk), lambda i, j, k: (i, k)),
            pl.BlockSpec((tk, tn), lambda i, j, k: (k, j)),
            pl.BlockSpec((1, tn), lambda i, j, k: (0, j)),
        ],
        out_specs=pl.BlockSpec((tm, tn), lambda i, j, k: (i, j)),
        scratch_shapes=[pltpu.VMEM((tm, tn), jnp.float32)],
        compiler_params=pltpu.CompilerParams(
            dimension_semantics=("parallel", "parallel", "arbitrary"),
            vmem_limit_bytes=_VMEM_LIMIT),
    )(xp, wp, bp)
    if (Mp, Np) != (M, N):
        out = out[:M, :N]
    return out


# ---------------------------------------------------------------------------
# Fused multi-head attention kernel:
#   head split -> scores + mask -> f32 softmax -> context -> out-proj -> +residual -> LayerNorm
# One grid step per batch element; all heads processed inside a single step.
# ---------------------------------------------------------------------------

def _attn_out_ln(q, k, v, res_ref, mask_ref, wo_ref, bo_ref, g_ref, b_ref, o_ref,
                 heads, scale, eps):
    S, E = q.shape
    Dh = E // heads
    mask = mask_ref[...]                       # (S, S) additive f32 mask
    wo = wo_ref[...]                           # (E, E)
    y = jnp.zeros((S, E), jnp.float32)
    for h in range(heads):                     # static unrolled loop over heads
        sl = slice(h * Dh, (h + 1) * Dh)
        qh, kh, vh = q[:, sl], k[:, sl], v[:, sl]
        # scores: bf16 on MXU, f32 accumulate; mask add + softmax in f32
        s = lax.dot_general(qh.astype(jnp.bfloat16), kh.astype(jnp.bfloat16),
                            (((1,), (1,)), ((), ())),
                            preferred_element_type=jnp.float32) * scale + mask
        m = jnp.max(s, axis=-1, keepdims=True)
        p = jnp.exp(s - m)
        p = p * pl.reciprocal(jnp.sum(p, axis=-1, keepdims=True), approx=True)
        ctx = jnp.dot(p.astype(jnp.bfloat16), vh.astype(jnp.bfloat16),
                      preferred_element_type=jnp.float32)          # (S, Dh)
        # fused out-projection: accumulate ctx_h @ Wo[rows of head h]
        y = y + jnp.dot(ctx.astype(jnp.bfloat16), wo[sl, :].astype(jnp.bfloat16),
                        preferred_element_type=jnp.float32)        # (S, E)
    # residual add + LayerNorm (f32 statistics)
    z = y + bo_ref[...] + res_ref[0].astype(jnp.float32)
    mean = jnp.mean(z, axis=-1, keepdims=True)
    zc = z - mean
    var = jnp.mean(zc * zc, axis=-1, keepdims=True)
    o_ref[0] = ((zc * lax.rsqrt(var + eps)) * g_ref[...] + b_ref[...]).astype(o_ref.dtype)


def _mha_self_kernel(qkv_ref, res_ref, mask_ref, wo_ref, bo_ref, g_ref, b_ref, o_ref,
                     *, heads, scale, eps):
    E = res_ref.shape[-1]
    x = qkv_ref[0].astype(jnp.float32)         # (S, 3E) packed [Q|K|V]
    _attn_out_ln(x[:, :E], x[:, E:2 * E], x[:, 2 * E:3 * E],
                 res_ref, mask_ref, wo_ref, bo_ref, g_ref, b_ref, o_ref, heads, scale, eps)


def _mha_cross_kernel(qk_ref, v_ref, res_ref, mask_ref, wo_ref, bo_ref, g_ref, b_ref, o_ref,
                      *, heads, scale, eps):
    E = res_ref.shape[-1]
    x = qk_ref[0].astype(jnp.float32)          # (S, 2E) packed [Q|K]
    _attn_out_ln(x[:, :E], x[:, E:2 * E], v_ref[0].astype(jnp.float32),
                 res_ref, mask_ref, wo_ref, bo_ref, g_ref, b_ref, o_ref, heads, scale, eps)


def mha_core(packed, v_proj, residual, mask, wo, bo, gamma, beta, heads, eps=1e-5):
    """LayerNorm(MHA(...) + residual). packed = [Q|K|V] (v_proj None) or [Q|K] (+ separate V)."""
    B, S, E = residual.shape
    scale = 1.0 / math.sqrt(E // heads)
    bo2, g2, b2 = bo.reshape(1, E), gamma.reshape(1, E), beta.reshape(1, E)

    common_specs = [
        pl.BlockSpec((1, S, E), lambda b: (b, 0, 0)),   # residual
        pl.BlockSpec((S, S), lambda b: (0, 0)),         # additive mask
        pl.BlockSpec((E, E), lambda b: (0, 0)),         # Wo
        pl.BlockSpec((1, E), lambda b: (0, 0)),         # bo
        pl.BlockSpec((1, E), lambda b: (0, 0)),         # gamma
        pl.BlockSpec((1, E), lambda b: (0, 0)),         # beta
    ]
    if v_proj is None:
        kernel = functools.partial(_mha_self_kernel, heads=heads, scale=scale, eps=eps)
        in_specs = [pl.BlockSpec((1, S, 3 * E), lambda b: (b, 0, 0))] + common_specs
        args = (packed, residual, mask, wo, bo2, g2, b2)
    else:
        kernel = functools.partial(_mha_cross_kernel, heads=heads, scale=scale, eps=eps)
        in_specs = [pl.BlockSpec((1, S, 2 * E), lambda b: (b, 0, 0)),
                    pl.BlockSpec((1, S, E), lambda b: (b, 0, 0))] + common_specs
        args = (packed, v_proj, residual, mask, wo, bo2, g2, b2)

    return pl.pallas_call(
        kernel,
        out_shape=jax.ShapeDtypeStruct((B, S, E), residual.dtype),
        grid=(B,),
        in_specs=in_specs,
        out_specs=pl.BlockSpec((1, S, E), lambda b: (b, 0, 0)),
        compiler_params=pltpu.CompilerParams(
            dimension_semantics=("parallel",),
            vmem_limit_bytes=_VMEM_LIMIT),
    )(*args)


# ---------------------------------------------------------------------------
# Fused FFN kernel: LayerNorm(relu(x @ W1 + b1) @ W2 + b2 + x)
# ---------------------------------------------------------------------------

def _ffn_kernel(x_ref, w1_ref, b1_ref, w2_ref, b2_ref, g_ref, be_ref, o_ref, *, eps):
    x = x_ref[...].astype(jnp.float32)
    h = jnp.dot(x.astype(jnp.bfloat16), w1_ref[...].astype(jnp.bfloat16),
                preferred_element_type=jnp.float32) + b1_ref[...]
    h = jnp.maximum(h, 0.0)
    y = jnp.dot(h.astype(jnp.bfloat16), w2_ref[...].astype(jnp.bfloat16),
                preferred_element_type=jnp.float32) + b2_ref[...]
    z = y + x
    mean = jnp.mean(z, axis=-1, keepdims=True)
    zc = z - mean
    var = jnp.mean(zc * zc, axis=-1, keepdims=True)
    o_ref[...] = ((zc * lax.rsqrt(var + eps)) * g_ref[...] + be_ref[...]).astype(o_ref.dtype)


def ffn_residual_ln(x2d, w1, b1, w2, b2, gamma, beta, eps=1e-5):
    M, E = x2d.shape
    H = w1.shape[1]
    tm = M if M <= 256 else 256
    Mp = _round_up(M, tm)
    xp = x2d if Mp == M else jnp.pad(x2d, ((0, Mp - M), (0, 0)))
    out = pl.pallas_call(
        functools.partial(_ffn_kernel, eps=eps),
        out_shape=jax.ShapeDtypeStruct((Mp, E), x2d.dtype),
        grid=(Mp // tm,),
        in_specs=[
            pl.BlockSpec((tm, E), lambda i: (i, 0)),
            pl.BlockSpec((E, H), lambda i: (0, 0)),
            pl.BlockSpec((1, H), lambda i: (0, 0)),
            pl.BlockSpec((H, E), lambda i: (0, 0)),
            pl.BlockSpec((1, E), lambda i: (0, 0)),
            pl.BlockSpec((1, E), lambda i: (0, 0)),
            pl.BlockSpec((1, E), lambda i: (0, 0)),
        ],
        out_specs=pl.BlockSpec((tm, E), lambda i: (i, 0)),
        compiler_params=pltpu.CompilerParams(
            dimension_semantics=("parallel",),
            vmem_limit_bytes=_VMEM_LIMIT),
    )(xp, w1, b1.reshape(1, H), w2, b2.reshape(1, E), gamma.reshape(1, E), beta.reshape(1, E))
    return out[:M] if Mp != M else out


# ---------------------------------------------------------------------------
# Position-embedding add (once per forward)
# ---------------------------------------------------------------------------

def _add_kernel(x_ref, p_ref, o_ref):
    o_ref[...] = x_ref[...] + p_ref[...]


def add_position_embedding(x, pos):
    N, S, D = x.shape
    return pl.pallas_call(
        _add_kernel,
        out_shape=jax.ShapeDtypeStruct((N, S, D), x.dtype),
        grid=(1,),
        in_specs=[
            pl.BlockSpec((N, S, D), lambda i: (0, 0, 0)),
            pl.BlockSpec((1, S, D), lambda i: (0, 0, 0)),
        ],
        out_specs=pl.BlockSpec((N, S, D), lambda i: (0, 0, 0)),
    )(x, pos)


# ---------------------------------------------------------------------------
# Model glue
# ---------------------------------------------------------------------------

def self_attention_block(x, mask, p, heads, ln_g, ln_b):
    """LayerNorm(MHA(x, x, x) + x) with fully fused QKV projection (one matmul)."""
    B, S, E = x.shape
    packed = linear(x.reshape(B * S, E), p["wqkv"], p["bqkv"]).reshape(B, S, 3 * E)
    return mha_core(packed, None, x, mask, p["wo"], p["bo"], ln_g, ln_b, heads)


def cross_attention_block(qk_src, v_src, residual, mask, p, heads, ln_g, ln_b):
    """LayerNorm(MHA(Q=qk_src, K=qk_src, V=v_src) + residual); Q/K projections fused."""
    B, S, E = residual.shape
    packed = linear(qk_src.reshape(B * S, E), p["wqk"], p["bqk"]).reshape(B, S, 2 * E)
    v_proj = linear(v_src.reshape(B * S, E), p["wv"], p["bv"]).reshape(B, S, E)
    return mha_core(packed, v_proj, residual, mask, p["wo"], p["bo"], ln_g, ln_b, heads)


def decoder_block(x, enc_out, src_mask, trg_mask, p, heads):
    B, S, E = x.shape
    # query = dropout(norm(self_attn(x, x, x, trg_mask) + x))     [dropout = identity]
    query = self_attention_block(x, trg_mask, p["self_attn"], heads, p["ln_g"], p["ln_b"])
    tb = p["tb"]
    # TransformerBlock with (value=enc_out, key=enc_out, query=query):
    #   attn = MHA(Q=value=enc_out, K=key=enc_out, V=query);  x1 = norm1(attn + query)
    x1 = cross_attention_block(enc_out, query, query, src_mask, tb["attn"], heads,
                               tb["ln1_g"], tb["ln1_b"])
    #   out = norm2(ff(x1) + x1)   -- fused FFN kernel, hidden never hits HBM
    out = ffn_residual_ln(x1.reshape(B * S, E), tb["ff_w1"], tb["ff_b1"],
                          tb["ff_w2"], tb["ff_b2"], tb["ln2_g"], tb["ln2_b"])
    return out.reshape(B, S, E)


@functools.partial(jax.jit, static_argnames=("heads",))
def decoder_forward(x, enc_out, src_mask, trg_mask, params, heads):
    N, S, E = x.shape
    pos = params["pos_emb"][:S][None]          # positions = arange(S); dropout identity (eval)
    x = add_position_embedding(x, pos)
    for lp in params["layers"]:
        x = decoder_block(x, enc_out, src_mask, trg_mask, lp, heads)
    out = linear(x.reshape(N * S, E), params["fc_w"], params["fc_b"])
    return out.reshape(N, S, -1)


# ---------------------------------------------------------------------------
# Deterministic parameter init (synthetic weights; projection weights stored pre-fused)
# ---------------------------------------------------------------------------

def init_decoder(key, output_dim, input_dim, num_layers, heads, forward_expansion, max_length):
    E = input_dim

    def nrm(k, shape, s=0.02):
        return jax.random.normal(k, shape, jnp.float32) * s

    def init_mha_self(k):
        ks = jax.random.split(k, 2)
        return {"wqkv": nrm(ks[0], (E, 3 * E)), "bqkv": jnp.zeros((3 * E,), jnp.float32),
                "wo": nrm(ks[1], (E, E)), "bo": jnp.zeros((E,), jnp.float32)}

    def init_mha_cross(k):
        ks = jax.random.split(k, 3)
        return {"wqk": nrm(ks[0], (E, 2 * E)), "bqk": jnp.zeros((2 * E,), jnp.float32),
                "wv": nrm(ks[1], (E, E)), "bv": jnp.zeros((E,), jnp.float32),
                "wo": nrm(ks[2], (E, E)), "bo": jnp.zeros((E,), jnp.float32)}

    def init_layer(k):
        ks = jax.random.split(k, 4)
        return {
            "self_attn": init_mha_self(ks[0]),
            "ln_g": jnp.ones((E,), jnp.float32), "ln_b": jnp.zeros((E,), jnp.float32),
            "tb": {
                "attn": init_mha_cross(ks[1]),
                "ln1_g": jnp.ones((E,), jnp.float32), "ln1_b": jnp.zeros((E,), jnp.float32),
                "ln2_g": jnp.ones((E,), jnp.float32), "ln2_b": jnp.zeros((E,), jnp.float32),
                "ff_w1": nrm(ks[2], (E, forward_expansion * E)),
                "ff_b1": jnp.zeros((forward_expansion * E,), jnp.float32),
                "ff_w2": nrm(ks[3], (forward_expansion * E, E)),
                "ff_b2": jnp.zeros((E,), jnp.float32),
            },
        }

    keys = jax.random.split(key, num_layers + 2)
    layers = [init_layer(keys[i]) for i in range(num_layers)]
    pos_emb = nrm(keys[num_layers], (max_length, E), 1.0)
    fc_w = nrm(keys[num_layers + 1], (E, output_dim))
    fc_b = jnp.zeros((output_dim,), jnp.float32)
    return {"pos_emb": pos_emb, "layers": layers, "fc_w": fc_w, "fc_b": fc_b}


# ---------------------------------------------------------------------------
# Demo
# ---------------------------------------------------------------------------

if __name__ == "__main__":
    output_dim, input_dim = 16, 32
    num_layers, heads, forward_expansion = 2, 4, 4
    max_length = 16
    N, S = 2, 8

    root = jax.random.PRNGKey(0)
    k_params, k_x, k_enc = jax.random.split(root, 3)

    params = init_decoder(k_params, output_dim, input_dim, num_layers, heads,
                          forward_expansion, max_length)

    x = jax.random.normal(k_x, (N, S, input_dim), jnp.float32)
    enc_out = jax.random.normal(k_enc, (N, S, input_dim), jnp.float32)

    # additive float masks (PyTorch attn_mask float semantics): 0 = keep, -1e9 = masked
    src_mask = jnp.zeros((S, S), jnp.float32)
    trg_mask = jnp.where(jnp.tril(jnp.ones((S, S), dtype=bool)), 0.0, -1e9).astype(jnp.float32)

    out = decoder_forward(x, enc_out, src_mask, trg_mask, params, heads=heads)
    out = jax.block_until_ready(out)
    assert out.shape == (N, S, output_dim)
    assert bool(jnp.all(jnp.isfinite(out)))
    print("KERNEL_OK")
</pallas_src>

<mosaic_0001>
module attributes {stable_mosaic.version = 11 : i64} {
  func.func @_add_kernel(%arg0: i32, %arg1: memref<2x8x32xf32, #tpu.memory_space<vmem>>, %arg2: memref<1x8x32xf32, #tpu.memory_space<vmem>>, %arg3: memref<2x8x32xf32, #tpu.memory_space<vmem>>) attributes {dimension_semantics = [#tpu.dimension_semantics<arbitrary>], iteration_bounds = array<i64: 1>, scalar_prefetch = 0 : i64, scratch_operands = 0 : i64, tpu.core_type = #tpu.core_type<tc>, window_params = [{pipeline_mode = #tpu.pipeline_mode<synchronous>, transform_indices = @transform_0, window_bounds = array<i64: 2, 8, 32>}, {pipeline_mode = #tpu.pipeline_mode<synchronous>, transform_indices = @transform_1, window_bounds = array<i64: 1, 8, 32>}, {pipeline_mode = #tpu.pipeline_mode<synchronous>, transform_indices = @transform_2, window_bounds = array<i64: 2, 8, 32>}]} {
    %c0 = arith.constant 0 : index
    %c0_0 = arith.constant 0 : index
    %c0_1 = arith.constant 0 : index
    %0 = vector.load %arg1[%c0, %c0_0, %c0_1] : memref<2x8x32xf32, #tpu.memory_space<vmem>>, vector<2x8x32xf32>
    %c0_2 = arith.constant 0 : index
    %c0_3 = arith.constant 0 : index
    %c0_4 = arith.constant 0 : index
    %1 = vector.load %arg2[%c0_2, %c0_3, %c0_4] : memref<1x8x32xf32, #tpu.memory_space<vmem>>, vector<1x8x32xf32>
    %2 = vector.broadcast %1 : vector<1x8x32xf32> to vector<2x8x32xf32>
    %3 = arith.addf %0, %2 : vector<2x8x32xf32>
    %c0_5 = arith.constant 0 : index
    %c0_6 = arith.constant 0 : index
    %c0_7 = arith.constant 0 : index
    %4 = vector.load %arg3[%c0_5, %c0_6, %c0_7] : memref<2x8x32xf32, #tpu.memory_space<vmem>>, vector<2x8x32xf32>
    tpu.vector_store %arg3[%c0_5, %c0_6, %c0_7], %3 {strides = array<i32>} : memref<2x8x32xf32, #tpu.memory_space<vmem>>, vector<2x8x32xf32>,
    return
  }
  func.func @transform_0(%arg0: i32) -> (i32, i32, i32) {
    %c0_i32 = arith.constant 0 : i32
    %c0_i32_0 = arith.constant 0 : i32
    %c0_i32_1 = arith.constant 0 : i32
    %c0_i32_2 = arith.constant 0 : i32
    return %c0_i32, %c0_i32_0, %c0_i32_1 : i32, i32, i32
  }
  func.func @transform_1(%arg0: i32) -> (i32, i32, i32) {
    %c0_i32 = arith.constant 0 : i32
    %c0_i32_0 = arith.constant 0 : i32
    %c0_i32_1 = arith.constant 0 : i32
    %c0_i32_2 = arith.constant 0 : i32
    return %c0_i32, %c0_i32_0, %c0_i32_1 : i32, i32, i32
  }
  func.func @transform_2(%arg0: i32) -> (i32, i32, i32) {
    %c0_i32 = arith.constant 0 : i32
    %c0_i32_0 = arith.constant 0 : i32
    %c0_i32_1 = arith.constant 0 : i32
    %c0_i32_2 = arith.constant 0 : i32
    return %c0_i32, %c0_i32_0, %c0_i32_1 : i32, i32, i32
  }
}

module attributes {stable_mosaic.version = 11 : i64} {
  func.func @_linear_kernel(%arg0: i32, %arg1: i32, %arg2: i32, %arg3: memref<16x32xf32, #tpu.memory_space<vmem>>, %arg4: memref<32x96xf32, #tpu.memory_space<vmem>>, %arg5: memref<1x96xf32, #tpu.memory_space<vmem>>, %arg6: memref<16x96xf32, #tpu.memory_space<vmem>>, %arg7: memref<16x96xf32, #tpu.memory_space<vmem>>) attributes {dimension_semantics = [#tpu.dimension_semantics<parallel>, #tpu.dimension_semantics<parallel>, #tpu.dimension_semantics<arbitrary>], iteration_bounds = array<i64: 1, 1, 1>, scalar_prefetch = 0 : i64, scratch_operands = 1 : i64, tpu.core_type = #tpu.core_type<tc>, window_params = [{transform_indices = @transform_0, window_bounds = array<i64: 16, 32>}, {transform_indices = @transform_1, window_bounds = array<i64: 32, 96>}, {transform_indices = @transform_2, window_bounds = array<i64: 1, 96>}, {transform_indices = @transform_3, window_bounds = array<i64: 16, 96>}]} {
    %c0_i32 = arith.constant 0 : i32
    %0 = arith.cmpi eq, %arg2, %c0_i32 : i32
    %1 = arith.extui %0 : i1 to i32
    %c0_i32_0 = arith.constant 0 : i32
    %2 = arith.cmpi ne, %1, %c0_i32_0 : i32
    scf.if %2 {
      %cst_10 = arith.constant 0.000000e+00 : f32
      %14 = vector.broadcast %cst_10 : f32 to vector<16x96xf32>
      %c0_11 = arith.constant 0 : index
      %c0_12 = arith.constant 0 : index
      %15 = vector.load %arg7[%c0_11, %c0_12] : memref<16x96xf32, #tpu.memory_space<vmem>>, vector<16x96xf32>
      tpu.vector_store %arg7[%c0_11, %c0_12], %14 {strides = array<i32>} : memref<16x96xf32, #tpu.memory_space<vmem>>, vector<16x96xf32>,
    } else {
    }
    %c0 = arith.constant 0 : index
    %c0_1 = arith.constant 0 : index
    %3 = vector.load %arg7[%c0, %c0_1] : memref<16x96xf32, #tpu.memory_space<vmem>>, vector<16x96xf32>
    %c0_2 = arith.constant 0 : index
    %c0_3 = arith.constant 0 : index
    %4 = vector.load %arg3[%c0_2, %c0_3] : memref<16x32xf32, #tpu.memory_space<vmem>>, vector<16x32xf32>
    %5 = arith.truncf %4 : vector<16x32xf32> to vector<16x32xbf16>
    %c0_4 = arith.constant 0 : index
    %c0_5 = arith.constant 0 : index
    %6 = vector.load %arg4[%c0_4, %c0_5] : memref<32x96xf32, #tpu.memory_space<vmem>>, vector<32x96xf32>
    %7 = arith.truncf %6 : vector<32x96xf32> to vector<32x96xbf16>
    %cst = arith.constant dense<0.000000e+00> : vector<16x96xf32>
    %8 = tpu.matmul %5, %7, %cst {dimension_numbers = #tpu.dot_dimension_numbers<[1], [0], [0], [1], [0, 0, 1, 1], [], []>} : vector<16x32xbf16>, vector<32x96xbf16>, vector<16x96xf32> -> vector<16x96xf32>
    %9 = arith.addf %3, %8 : vector<16x96xf32>
    %c0_6 = arith.constant 0 : index
    %c0_7 = arith.constant 0 : index
    %10 = vector.load %arg7[%c0_6, %c0_7] : memref<16x96xf32, #tpu.memory_space<vmem>>, vector<16x96xf32>
    tpu.vector_store %arg7[%c0_6, %c0_7], %9 {strides = array<i32>} : memref<16x96xf32, #tpu.memory_space<vmem>>, vector<16x96xf32>,
    %c0_i32_8 = arith.constant 0 : i32
    %11 = arith.cmpi eq, %arg2, %c0_i32_8 : i32
    %12 = arith.extui %11 : i1 to i32
    %c0_i32_9 = arith.constant 0 : i32
    %13 = arith.cmpi ne, %12, %c0_i32_9 : i32
    scf.if %13 {
      %c0_10 = arith.constant 0 : index
      %c0_11 = arith.constant 0 : index
      %14 = vector.load %arg7[%c0_10, %c0_11] : memref<16x96xf32, #tpu.memory_space<vmem>>, vector<16x96xf32>
      %c0_12 = arith.constant 0 : index
      %c0_13 = arith.constant 0 : index
      %15 = vector.load %arg5[%c0_12, %c0_13] : memref<1x96xf32, #tpu.memory_space<vmem>>, vector<1x96xf32>
      %16 = vector.broadcast %15 : vector<1x96xf32> to vector<16x96xf32>
      %17 = arith.addf %14, %16 : vector<16x96xf32>
      %c0_14 = arith.constant 0 : index
      %c0_15 = arith.constant 0 : index
      %18 = vector.load %arg6[%c0_14, %c0_15] : memref<16x96xf32, #tpu.memory_space<vmem>>, vector<16x96xf32>
      tpu.vector_store %arg6[%c0_14, %c0_15], %17 {strides = array<i32>} : memref<16x96xf32, #tpu.memory_space<vmem>>, vector<16x96xf32>,
    } else {
    }
    return
  }
  func.func @transform_0(%arg0: i32, %arg1: i32, %arg2: i32) -> (i32, i32) {
    %c0_i32 = arith.constant 0 : i32
    return %arg0, %arg2 : i32, i32
  }
  func.func @transform_1(%arg0: i32, %arg1: i32, %arg2: i32) -> (i32, i32) {
    %c0_i32 = arith.constant 0 : i32
    return %arg2, %arg1 : i32, i32
  }
  func.func @transform_2(%arg0: i32, %arg1: i32, %arg2: i32) -> (i32, i32) {
    %c0_i32 = arith.constant 0 : i32
    %c0_i32_0 = arith.constant 0 : i32
    return %c0_i32, %arg1 : i32, i32
  }
  func.func @transform_3(%arg0: i32, %arg1: i32, %arg2: i32) -> (i32, i32) {
    %c0_i32 = arith.constant 0 : i32
    return %arg0, %arg1 : i32, i32
  }
}

module attributes {stable_mosaic.version = 11 : i64} {
  func.func @_mha_self_kernel(%arg0: i32, %arg1: memref<1x8x96xf32, #tpu.memory_space<vmem>>, %arg2: memref<1x8x32xf32, #tpu.memory_space<vmem>>, %arg3: memref<8x8xf32, #tpu.memory_space<vmem>>, %arg4: memref<32x32xf32, #tpu.memory_space<vmem>>, %arg5: memref<1x32xf32, #tpu.memory_space<vmem>>, %arg6: memref<1x32xf32, #tpu.memory_space<vmem>>, %arg7: memref<1x32xf32, #tpu.memory_space<vmem>>, %arg8: memref<1x8x32xf32, #tpu.memory_space<vmem>>) attributes {dimension_semantics = [#tpu.dimension_semantics<parallel>], iteration_bounds = array<i64: 2>, scalar_prefetch = 0 : i64, scratch_operands = 0 : i64, tpu.core_type = #tpu.core_type<tc>, window_params = [{transform_indices = @transform_0, window_bounds = array<i64: 1, 8, 96>}, {transform_indices = @transform_1, window_bounds = array<i64: 1, 8, 32>}, {pipeline_mode = #tpu.pipeline_mode<synchronous>, transform_indices = @transform_2, window_bounds = array<i64: 8, 8>}, {pipeline_mode = #tpu.pipeline_mode<synchronous>, transform_indices = @transform_3, window_bounds = array<i64: 32, 32>}, {pipeline_mode = #tpu.pipeline_mode<synchronous>, transform_indices = @transform_4, window_bounds = array<i64: 1, 32>}, {pipeline_mode = #tpu.pipeline_mode<synchronous>, transform_indices = @transform_5, window_bounds = array<i64: 1, 32>}, {pipeline_mode = #tpu.pipeline_mode<synchronous>, transform_indices = @transform_6, window_bounds = array<i64: 1, 32>}, {transform_indices = @transform_7, window_bounds = array<i64: 1, 8, 32>}]} {
    %c0 = arith.constant 0 : index
    %c0_0 = arith.constant 0 : index
    %c0_1 = arith.constant 0 : index
    %0 = vector.load %arg1[%c0, %c0_0, %c0_1] : memref<1x8x96xf32, #tpu.memory_space<vmem>>, vector<1x8x96xf32>
    %1 = vector.shape_cast %0 : vector<1x8x96xf32> to vector<8x96xf32>
    %2 = vector.extract_strided_slice %1 {offsets = [0, 0], sizes = [8, 32], strides = [1, 1]} : vector<8x96xf32> to vector<8x32xf32>
    %3 = vector.extract_strided_slice %1 {offsets = [0, 32], sizes = [8, 32], strides = [1, 1]} : vector<8x96xf32> to vector<8x32xf32>
    %4 = vector.extract_strided_slice %1 {offsets = [0, 64], sizes = [8, 32], strides = [1, 1]} : vector<8x96xf32> to vector<8x32xf32>
    %c0_2 = arith.constant 0 : index
    %c0_3 = arith.constant 0 : index
    %5 = vector.load %arg3[%c0_2, %c0_3] : memref<8x8xf32, #tpu.memory_space<vmem>>, vector<8x8xf32>
    %c0_4 = arith.constant 0 : index
    %c0_5 = arith.constant 0 : index
    %6 = vector.load %arg4[%c0_4, %c0_5] : memref<32x32xf32, #tpu.memory_space<vmem>>, vector<32x32xf32>
    %cst = arith.constant 0.000000e+00 : f32
    %7 = vector.broadcast %cst : f32 to vector<8x32xf32>
    %8 = vector.extract_strided_slice %2 {offsets = [0, 0], sizes = [8, 8], strides = [1, 1]} : vector<8x32xf32> to vector<8x8xf32>
    %9 = vector.extract_strided_slice %3 {offsets = [0, 0], sizes = [8, 8], strides = [1, 1]} : vector<8x32xf32> to vector<8x8xf32>
    %10 = vector.extract_strided_slice %4 {offsets = [0, 0], sizes = [8, 8], strides = [1, 1]} : vector<8x32xf32> to vector<8x8xf32>
    %11 = arith.truncf %8 : vector<8x8xf32> to vector<8x8xbf16>
    %12 = arith.truncf %9 : vector<8x8xf32> to vector<8x8xbf16>
    %cst_6 = arith.constant dense<0.000000e+00> : vector<8x8xf32>
    %13 = tpu.matmul %11, %12, %cst_6 {dimension_numbers = #tpu.dot_dimension_numbers<[1], [1], [0], [0], [0, 0, 1, 0], [], []>} : vector<8x8xbf16>, vector<8x8xbf16>, vector<8x8xf32> -> vector<8x8xf32>
    %cst_7 = arith.constant 0.353553385 : f32
    %14 = vector.broadcast %cst_7 : f32 to vector<8x8xf32>
    %15 = arith.mulf %13, %14 : vector<8x8xf32>
    %16 = arith.addf %15, %5 : vector<8x8xf32>
    %cst_8 = arith.constant dense<0xFF800000> : vector<8xf32>
    %17 = vector.multi_reduction <maximumf>, %16, %cst_8 [1] : vector<8x8xf32> to vector<8xf32>
    %18 = vector.shape_cast %17 : vector<8xf32> to vector<8x1xf32>
    %19 = vector.broadcast %18 : vector<8x1xf32> to vector<8x8xf32>
    %20 = arith.subf %16, %19 : vector<8x8xf32>
    %21 = math.exp %20 : vector<8x8xf32>
    %cst_9 = arith.constant dense<0.000000e+00> : vector<8xf32>
    %22 = vector.multi_reduction <add>, %21, %cst_9 [1] : vector<8x8xf32> to vector<8xf32>
    %23 = vector.shape_cast %22 : vector<8xf32> to vector<8x1xf32>
    %24 = tpu.reciprocal %23 {approx = true} : vector<8x1xf32> -> vector<8x1xf32>
    %25 = vector.broadcast %24 : vector<8x1xf32> to vector<8x8xf32>
    %26 = arith.mulf %21, %25 : vector<8x8xf32>
    %27 = arith.truncf %26 : vector<8x8xf32> to vector<8x8xbf16>
    %28 = arith.truncf %10 : vector<8x8xf32> to vector<8x8xbf16>
    %cst_10 = arith.constant dense<0.000000e+00> : vector<8x8xf32>
    %29 = tpu.matmul %27, %28, %cst_10 {dimension_numbers = #tpu.dot_dimension_numbers<[1], [0], [0], [1], [0, 0, 1, 1], [], []>} : vector<8x8xbf16>, vector<8x8xbf16>, vector<8x8xf32> -> vector<8x8xf32>
    %30 = arith.truncf %29 : vector<8x8xf32> to vector<8x8xbf16>
    %31 = vector.extract_strided_slice %6 {offsets = [0, 0], sizes = [8, 32], strides = [1, 1]} : vector<32x32xf32> to vector<8x32xf32>
    %32 = arith.truncf %31 : vector<8x32xf32> to vector<8x32xbf16>
    %cst_11 = arith.constant dense<0.000000e+00> : vector<8x32xf32>
    %33 = tpu.matmul %30, %32, %cst_11 {dimension_numbers = #tpu.dot_dimension_numbers<[1], [0], [0], [1], [0, 0, 1, 1], [], []>} : vector<8x8xbf16>, vector<8x32xbf16>, vector<8x32xf32> -> vector<8x32xf32>
    %34 = arith.addf %7, %33 : vector<8x32xf32>
    %35 = vector.extract_strided_slice %2 {offsets = [0, 8], sizes = [8, 8], strides = [1, 1]} : vector<8x32xf32> to vector<8x8xf32>
    %36 = vector.extract_strided_slice %3 {offsets = [0, 8], sizes = [8, 8], strides = [1, 1]} : vector<8x32xf32> to vector<8x8xf32>
    %37 = vector.extract_strided_slice %4 {offsets = [0, 8], sizes = [8, 8], strides = [1, 1]} : vector<8x32xf32> to vector<8x8xf32>
    %38 = arith.truncf %35 : vector<8x8xf32> to vector<8x8xbf16>
    %39 = arith.truncf %36 : vector<8x8xf32> to vector<8x8xbf16>
    %cst_12 = arith.constant dense<0.000000e+00> : vector<8x8xf32>
    %40 = tpu.matmul %38, %39, %cst_12 {dimension_numbers = #tpu.dot_dimension_numbers<[1], [1], [0], [0], [0, 0, 1, 0], [], []>} : vector<8x8xbf16>, vector<8x8xbf16>, vector<8x8xf32> -> vector<8x8xf32>
    %cst_13 = arith.constant 0.353553385 : f32
    %41 = vector.broadcast %cst_13 : f32 to vector<8x8xf32>
    %42 = arith.mulf %40, %41 : vector<8x8xf32>
    %43 = arith.addf %42, %5 : vector<8x8xf32>
    %cst_14 = arith.constant dense<0xFF800000> : vector<8xf32>
    %44 = vector.multi_reduction <maximumf>, %43, %cst_14 [1] : vector<8x8xf32> to vector<8xf32>
    %45 = vector.shape_cast %44 : vector<8xf32> to vector<8x1xf32>
    %46 = vector.broadcast %45 : vector<8x1xf32> to vector<8x8xf32>
    %47 = arith.subf %43, %46 : vector<8x8xf32>
    %48 = math.exp %47 : vector<8x8xf32>
    %cst_15 = arith.constant dense<0.000000e+00> : vector<8xf32>
    %49 = vector.multi_reduction <add>, %48, %cst_15 [1] : vector<8x8xf32> to vector<8xf32>
    %50 = vector.shape_cast %49 : vector<8xf32> to vector<8x1xf32>
    %51 = tpu.reciprocal %50 {approx = true} : vector<8x1xf32> -> vector<8x1xf32>
    %52 = vector.broadcast %51 : vector<8x1xf32> to vector<8x8xf32>
    %53 = arith.mulf %48, %52 : vector<8x8xf32>
    %54 = arith.truncf %53 : vector<8x8xf32> to vector<8x8xbf16>
    %55 = arith.truncf %37 : vector<8x8xf32> to vector<8x8xbf16>
    %cst_16 = arith.constant dense<0.000000e+00> : vector<8x8xf32>
    %56 = tpu.matmul %54, %55, %cst_16 {dimension_numbers = #tpu.dot_dimension_numbers<[1], [0], [0], [1], [0, 0, 1, 1], [], []>} : vector<8x8xbf16>, vector<8x8xbf16>, vector<8x8xf32> -> vector<8x8xf32>
    %57 = arith.truncf %56 : vector<8x8xf32> to vector<8x8xbf16>
    %58 = vector.extract_strided_slice %6 {offsets = [8, 0], sizes = [8, 32], strides = [1, 1]} : vector<32x32xf32> to vector<8x32xf32>
    %59 = arith.truncf %58 : vector<8x32xf32> to vector<8x32xbf16>
    %cst_17 = arith.constant dense<0.000000e+00> : vector<8x32xf32>
    %60 = tpu.matmul %57, %59, %cst_17 {dimension_numbers = #tpu.dot_dimension_numbers<[1], [0], [0], [1], [0, 0, 1, 1], [], []>} : vector<8x8xbf16>, vector<8x32xbf16>, vector<8x32xf32> -> vector<8x32xf32>
    %61 = arith.addf %34, %60 : vector<8x32xf32>
    %62 = vector.extract_strided_slice %2 {offsets = [0, 16], sizes = [8, 8], strides = [1, 1]} : vector<8x32xf32> to vector<8x8xf32>
    %63 = vector.extract_strided_slice %3 {offsets = [0, 16], sizes = [8, 8], strides = [1, 1]} : vector<8x32xf32> to vector<8x8xf32>
    %64 = vector.extract_strided_slice %4 {offsets = [0, 16], sizes = [8, 8], strides = [1, 1]} : vector<8x32xf32> to vector<8x8xf32>
    %65 = arith.truncf %62 : vector<8x8xf32> to vector<8x8xbf16>
    %66 = arith.truncf %63 : vector<8x8xf32> to vector<8x8xbf16>
    %cst_18 = arith.constant dense<0.000000e+00> : vector<8x8xf32>
    %67 = tpu.matmul %65, %66, %cst_18 {dimension_numbers = #tpu.dot_dimension_numbers<[1], [1], [0], [0], [0, 0, 1, 0], [], []>} : vector<8x8xbf16>, vector<8x8xbf16>, vector<8x8xf32> -> vector<8x8xf32>
    %cst_19 = arith.constant 0.353553385 : f32
    %68 = vector.broadcast %cst_19 : f32 to vector<8x8xf32>
    %69 = arith.mulf %67, %68 : vector<8x8xf32>
    %70 = arith.addf %69, %5 : vector<8x8xf32>
    %cst_20 = arith.constant dense<0xFF800000> : vector<8xf32>
    %71 = vector.multi_reduction <maximumf>, %70, %cst_20 [1] : vector<8x8xf32> to vector<8xf32>
    %72 = vector.shape_cast %71 : vector<8xf32> to vector<8x1xf32>
    %73 = vector.broadcast %72 : vector<8x1xf32> to vector<8x8xf32>
    %74 = arith.subf %70, %73 : vector<8x8xf32>
    %75 = math.exp %74 : vector<8x8xf32>
    %cst_21 = arith.constant dense<0.000000e+00> : vector<8xf32>
    %76 = vector.multi_reduction <add>, %75, %cst_21 [1] : vector<8x8xf32> to vector<8xf32>
    %77 = vector.shape_cast %76 : vector<8xf32> to vector<8x1xf32>
    %78 = tpu.reciprocal %77 {approx = true} : vector<8x1xf32> -> vector<8x1xf32>
    %79 = vector.broadcast %78 : vector<8x1xf32> to vector<8x8xf32>
    %80 = arith.mulf %75, %79 : vector<8x8xf32>
    %81 = arith.truncf %80 : vector<8x8xf32> to vector<8x8xbf16>
    %82 = arith.truncf %64 : vector<8x8xf32> to vector<8x8xbf16>
    %cst_22 = arith.constant dense<0.000000e+00> : vector<8x8xf32>
    %83 = tpu.matmul %81, %82, %cst_22 {dimension_numbers = #tpu.dot_dimension_numbers<[1], [0], [0], [1], [0, 0, 1, 1], [], []>} : vector<8x8xbf16>, vector<8x8xbf16>, vector<8x8xf32> -> vector<8x8xf32>
    %84 = arith.truncf %83 : vector<8x8xf32> to vector<8x8xbf16>
    %85 = vector.extract_strided_slice %6 {offsets = [16, 0], sizes = [8, 32], strides = [1, 1]} : vector<32x32xf32> to vector<8x32xf32>
    %86 = arith.truncf %85 : vector<8x32xf32> to vector<8x32xbf16>
    %cst_23 = arith.constant dense<0.000000e+00> : vector<8x32xf32>
    %87 = tpu.matmul %84, %86, %cst_23 {dimension_numbers = #tpu.dot_dimension_numbers<[1], [0], [0], [1], [0, 0, 1, 1], [], []>} : vector<8x8xbf16>, vector<8x32xbf16>, vector<8x32xf32> -> vector<8x32xf32>
    %88 = arith.addf %61, %87 : vector<8x32xf32>
    %89 = vector.extract_strided_slice %2 {offsets = [0, 24], sizes = [8, 8], strides = [1, 1]} : vector<8x32xf32> to vector<8x8xf32>
    %90 = vector.extract_strided_slice %3 {offsets = [0, 24], sizes = [8, 8], strides = [1, 1]} : vector<8x32xf32> to vector<8x8xf32>
    %91 = vector.extract_strided_slice %4 {offsets = [0, 24], sizes = [8, 8], strides = [1, 1]} : vector<8x32xf32> to vector<8x8xf32>
    %92 = arith.truncf %89 : vector<8x8xf32> to vector<8x8xbf16>
    %93 = arith.truncf %90 : vector<8x8xf32> to vector<8x8xbf16>
    %cst_24 = arith.constant dense<0.000000e+00> : vector<8x8xf32>
    %94 = tpu.matmul %92, %93, %cst_24 {dimension_numbers = #tpu.dot_dimension_numbers<[1], [1], [0], [0], [0, 0, 1, 0], [], []>} : vector<8x8xbf16>, vector<8x8xbf16>, vector<8x8xf32> -> vector<8x8xf32>
    %cst_25 = arith.constant 0.353553385 : f32
    %95 = vector.broadcast %cst_25 : f32 to vector<8x8xf32>
    %96 = arith.mulf %94, %95 : vector<8x8xf32>
    %97 = arith.addf %96, %5 : vector<8x8xf32>
    %cst_26 = arith.constant dense<0xFF800000> : vector<8xf32>
    %98 = vector.multi_reduction <maximumf>, %97, %cst_26 [1] : vector<8x8xf32> to vector<8xf32>
    %99 = vector.shape_cast %98 : vector<8xf32> to vector<8x1xf32>
    %100 = vector.broadcast %99 : vector<8x1xf32> to vector<8x8xf32>
    %101 = arith.subf %97, %100 : vector<8x8xf32>
    %102 = math.exp %101 : vector<8x8xf32>
    %cst_27 = arith.constant dense<0.000000e+00> : vector<8xf32>
    %103 = vector.multi_reduction <add>, %102, %cst_27 [1] : vector<8x8xf32> to vector<8xf32>
    %104 = vector.shape_cast %103 : vector<8xf32> to vector<8x1xf32>
    %105 = tpu.reciprocal %104 {approx = true} : vector<8x1xf32> -> vector<8x1xf32>
    %106 = vector.broadcast %105 : vector<8x1xf32> to vector<8x8xf32>
    %107 = arith.mulf %102, %106 : vector<8x8xf32>
    %108 = arith.truncf %107 : vector<8x8xf32> to vector<8x8xbf16>
    %109 = arith.truncf %91 : vector<8x8xf32> to vector<8x8xbf16>
    %cst_28 = arith.constant dense<0.000000e+00> : vector<8x8xf32>
    %110 = tpu.matmul %108, %109, %cst_28 {dimension_numbers = #tpu.dot_dimension_numbers<[1], [0], [0], [1], [0, 0, 1, 1], [], []>} : vector<8x8xbf16>, vector<8x8xbf16>, vector<8x8xf32> -> vector<8x8xf32>
    %111 = arith.truncf %110 : vector<8x8xf32> to vector<8x8xbf16>
    %112 = vector.extract_strided_slice %6 {offsets = [24, 0], sizes = [8, 32], strides = [1, 1]} : vector<32x32xf32> to vector<8x32xf32>
    %113 = arith.truncf %112 : vector<8x32xf32> to vector<8x32xbf16>
    %cst_29 = arith.constant dense<0.000000e+00> : vector<8x32xf32>
    %114 = tpu.matmul %111, %113, %cst_29 {dimension_numbers = #tpu.dot_dimension_numbers<[1], [0], [0], [1], [0, 0, 1, 1], [], []>} : vector<8x8xbf16>, vector<8x32xbf16>, vector<8x32xf32> -> vector<8x32xf32>
    %115 = arith.addf %88, %114 : vector<8x32xf32>
    %c0_30 = arith.constant 0 : index
    %c0_31 = arith.constant 0 : index
    %116 = vector.load %arg5[%c0_30, %c0_31] : memref<1x32xf32, #tpu.memory_space<vmem>>, vector<1x32xf32>
    %117 = vector.broadcast %116 : vector<1x32xf32> to vector<8x32xf32>
    %118 = arith.addf %115, %117 : vector<8x32xf32>
    %c0_32 = arith.constant 0 : index
    %c0_33 = arith.constant 0 : index
    %c0_34 = arith.constant 0 : index
    %119 = vector.load %arg2[%c0_32, %c0_33, %c0_34] : memref<1x8x32xf32, #tpu.memory_space<vmem>>, vector<1x8x32xf32>
    %120 = vector.shape_cast %119 : vector<1x8x32xf32> to vector<8x32xf32>
    %121 = arith.addf %118, %120 : vector<8x32xf32>
    %cst_35 = arith.constant dense<0.000000e+00> : vector<8xf32>
    %122 = vector.multi_reduction <add>, %121, %cst_35 [1] : vector<8x32xf32> to vector<8xf32>
    %123 = vector.shape_cast %122 : vector<8xf32> to vector<8x1xf32>
    %cst_36 = arith.constant 3.200000e+01 : f32
    %124 = vector.broadcast %cst_36 : f32 to vector<8x1xf32>
    %125 = arith.divf %123, %124 : vector<8x1xf32>
    %126 = vector.broadcast %125 : vector<8x1xf32> to vector<8x32xf32>
    %127 = arith.subf %121, %126 : vector<8x32xf32>
    %128 = arith.mulf %127, %127 : vector<8x32xf32>
    %cst_37 = arith.constant dense<0.000000e+00> : vector<8xf32>
    %129 = vector.multi_reduction <add>, %128, %cst_37 [1] : vector<8x32xf32> to vector<8xf32>
    %130 = vector.shape_cast %129 : vector<8xf32> to vector<8x1xf32>
    %cst_38 = arith.constant 3.200000e+01 : f32
    %131 = vector.broadcast %cst_38 : f32 to vector<8x1xf32>
    %132 = arith.divf %130, %131 : vector<8x1xf32>
    %cst_39 = arith.constant 9.99999974E-6 : f32
    %133 = vector.broadcast %cst_39 : f32 to vector<8x1xf32>
    %134 = arith.addf %132, %133 : vector<8x1xf32>
    %135 = math.rsqrt %134 : vector<8x1xf32>
    %136 = vector.broadcast %135 : vector<8x1xf32> to vector<8x32xf32>
    %137 = arith.mulf %127, %136 : vector<8x32xf32>
    %c0_40 = arith.constant 0 : index
    %c0_41 = arith.constant 0 : index
    %138 = vector.load %arg6[%c0_40, %c0_41] : memref<1x32xf32, #tpu.memory_space<vmem>>, vector<1x32xf32>
    %139 = vector.broadcast %138 : vector<1x32xf32> to vector<8x32xf32>
    %140 = arith.mulf %137, %139 : vector<8x32xf32>
    %c0_42 = arith.constant 0 : index
    %c0_43 = arith.constant 0 : index
    %141 = vector.load %arg7[%c0_42, %c0_43] : memref<1x32xf32, #tpu.memory_space<vmem>>, vector<1x32xf32>
    %142 = vector.broadcast %141 : vector<1x32xf32> to vector<8x32xf32>
    %143 = arith.addf %140, %142 : vector<8x32xf32>
    %c0_44 = arith.constant 0 : index
    %c0_45 = arith.constant 0 : index
    %c0_46 = arith.constant 0 : index
    %144 = vector.load %arg8[%c0_44, %c0_45, %c0_46] : memref<1x8x32xf32, #tpu.memory_space<vmem>>, vector<1x8x32xf32>
    %145 = vector.shape_cast %144 : vector<1x8x32xf32> to vector<8x32xf32>
    %146 = vector.shape_cast %143 : vector<8x32xf32> to vector<1x8x32xf32>
    tpu.vector_store %arg8[%c0_44, %c0_45, %c0_46], %146 {strides = array<i32>} : memref<1x8x32xf32, #tpu.memory_space<vmem>>, vector<1x8x32xf32>,
    return
  }
  func.func @transform_0(%arg0: i32) -> (i32, i32, i32) {
    %c0_i32 = arith.constant 0 : i32
    %c0_i32_0 = arith.constant 0 : i32
    %c0_i32_1 = arith.constant 0 : i32
    return %arg0, %c0_i32, %c0_i32_0 : i32, i32, i32
  }
  func.func @transform_1(%arg0: i32) -> (i32, i32, i32) {
    %c0_i32 = arith.constant 0 : i32
    %c0_i32_0 = arith.constant 0 : i32
    %c0_i32_1 = arith.constant 0 : i32
    return %arg0, %c0_i32, %c0_i32_0 : i32, i32, i32
  }
  func.func @transform_2(%arg0: i32) -> (i32, i32) {
    %c0_i32 = arith.constant 0 : i32
    %c0_i32_0 = arith.constant 0 : i32
    %c0_i32_1 = arith.constant 0 : i32
    return %c0_i32, %c0_i32_0 : i32, i32
  }
  func.func @transform_3(%arg0: i32) -> (i32, i32) {
    %c0_i32 = arith.constant 0 : i32
    %c0_i32_0 = arith.constant 0 : i32
    %c0_i32_1 = arith.constant 0 : i32
    return %c0_i32, %c0_i32_0 : i32, i32
  }
  func.func @transform_4(%arg0: i32) -> (i32, i32) {
    %c0_i32 = arith.constant 0 : i32
    %c0_i32_0 = arith.constant 0 : i32
    %c0_i32_1 = arith.constant 0 : i32
    return %c0_i32, %c0_i32_0 : i32, i32
  }
  func.func @transform_5(%arg0: i32) -> (i32, i32) {
    %c0_i32 = arith.constant 0 : i32
    %c0_i32_0 = arith.constant 0 : i32
    %c0_i32_1 = arith.constant 0 : i32
    return %c0_i32, %c0_i32_0 : i32, i32
  }
  func.func @transform_6(%arg0: i32) -> (i32, i32) {
    %c0_i32 = arith.constant 0 : i32
    %c0_i32_0 = arith.constant 0 : i32
    %c0_i32_1 = arith.constant 0 : i32
    return %c0_i32, %c0_i32_0 : i32, i32
  }
  func.func @transform_7(%arg0: i32) -> (i32, i32, i32) {
    %c0_i32 = arith.constant 0 : i32
    %c0_i32_0 = arith.constant 0 : i32
    %c0_i32_1 = arith.constant 0 : i32
    return %arg0, %c0_i32, %c0_i32_0 : i32, i32, i32
  }
}

module attributes {stable_mosaic.version = 11 : i64} {
  func.func @_linear_kernel(%arg0: i32, %arg1: i32, %arg2: i32, %arg3: memref<16x32xf32, #tpu.memory_space<vmem>>, %arg4: memref<32x32xf32, #tpu.memory_space<vmem>>, %arg5: memref<1x32xf32, #tpu.memory_space<vmem>>, %arg6: memref<16x32xf32, #tpu.memory_space<vmem>>, %arg7: memref<16x32xf32, #tpu.memory_space<vmem>>) attributes {dimension_semantics = [#tpu.dimension_semantics<parallel>, #tpu.dimension_semantics<parallel>, #tpu.dimension_semantics<arbitrary>], iteration_bounds = array<i64: 1, 1, 1>, scalar_prefetch = 0 : i64, scratch_operands = 1 : i64, tpu.core_type = #tpu.core_type<tc>, window_params = [{transform_indices = @transform_0, window_bounds = array<i64: 16, 32>}, {transform_indices = @transform_1, window_bounds = array<i64: 32, 32>}, {transform_indices = @transform_2, window_bounds = array<i64: 1, 32>}, {transform_indices = @transform_3, window_bounds = array<i64: 16, 32>}]} {
    %c0_i32 = arith.constant 0 : i32
    %0 = arith.cmpi eq, %arg2, %c0_i32 : i32
    %1 = arith.extui %0 : i1 to i32
    %c0_i32_0 = arith.constant 0 : i32
    %2 = arith.cmpi ne, %1, %c0_i32_0 : i32
    scf.if %2 {
      %cst_10 = arith.constant 0.000000e+00 : f32
      %14 = vector.broadcast %cst_10 : f32 to vector<16x32xf32>
      %c0_11 = arith.constant 0 : index
      %c0_12 = arith.constant 0 : index
      %15 = vector.load %arg7[%c0_11, %c0_12] : memref<16x32xf32, #tpu.memory_space<vmem>>, vector<16x32xf32>
      tpu.vector_store %arg7[%c0_11, %c0_12], %14 {strides = array<i32>} : memref<16x32xf32, #tpu.memory_space<vmem>>, vector<16x32xf32>,
    } else {
    }
    %c0 = arith.constant 0 : index
    %c0_1 = arith.constant 0 : index
    %3 = vector.load %arg7[%c0, %c0_1] : memref<16x32xf32, #tpu.memory_space<vmem>>, vector<16x32xf32>
    %c0_2 = arith.constant 0 : index
    %c0_3 = arith.constant 0 : index
    %4 = vector.load %arg3[%c0_2, %c0_3] : memref<16x32xf32, #tpu.memory_space<vmem>>, vector<16x32xf32>
    %5 = arith.truncf %4 : vector<16x32xf32> to vector<16x32xbf16>
    %c0_4 = arith.constant 0 : index
    %c0_5 = arith.constant 0 : index
    %6 = vector.load %arg4[%c0_4, %c0_5] : memref<32x32xf32, #tpu.memory_space<vmem>>, vector<32x32xf32>
    %7 = arith.truncf %6 : vector<32x32xf32> to vector<32x32xbf16>
    %cst = arith.constant dense<0.000000e+00> : vector<16x32xf32>
    %8 = tpu.matmul %5, %7, %cst {dimension_numbers = #tpu.dot_dimension_numbers<[1], [0], [0], [1], [0, 0, 1, 1], [], []>} : vector<16x32xbf16>, vector<32x32xbf16>, vector<16x32xf32> -> vector<16x32xf32>
    %9 = arith.addf %3, %8 : vector<16x32xf32>
    %c0_6 = arith.constant 0 : index
    %c0_7 = arith.constant 0 : index
    %10 = vector.load %arg7[%c0_6, %c0_7] : memref<16x32xf32, #tpu.memory_space<vmem>>, vector<16x32xf32>
    tpu.vector_store %arg7[%c0_6, %c0_7], %9 {strides = array<i32>} : memref<16x32xf32, #tpu.memory_space<vmem>>, vector<16x32xf32>,
    %c0_i32_8 = arith.constant 0 : i32
    %11 = arith.cmpi eq, %arg2, %c0_i32_8 : i32
    %12 = arith.extui %11 : i1 to i32
    %c0_i32_9 = arith.constant 0 : i32
    %13 = arith.cmpi ne, %12, %c0_i32_9 : i32
    scf.if %13 {
      %c0_10 = arith.constant 0 : index
      %c0_11 = arith.constant 0 : index
      %14 = vector.load %arg7[%c0_10, %c0_11] : memref<16x32xf32, #tpu.memory_space<vmem>>, vector<16x32xf32>
      %c0_12 = arith.constant 0 : index
      %c0_13 = arith.constant 0 : index
      %15 = vector.load %arg5[%c0_12, %c0_13] : memref<1x32xf32, #tpu.memory_space<vmem>>, vector<1x32xf32>
      %16 = vector.broadcast %15 : vector<1x32xf32> to vector<16x32xf32>
      %17 = arith.addf %14, %16 : vector<16x32xf32>
      %c0_14 = arith.constant 0 : index
      %c0_15 = arith.constant 0 : index
      %18 = vector.load %arg6[%c0_14, %c0_15] : memref<16x32xf32, #tpu.memory_space<vmem>>, vector<16x32xf32>
      tpu.vector_store %arg6[%c0_14, %c0_15], %17 {strides = array<i32>} : memref<16x32xf32, #tpu.memory_space<vmem>>, vector<16x32xf32>,
    } else {
    }
    return
  }
  func.func @transform_0(%arg0: i32, %arg1: i32, %arg2: i32) -> (i32, i32) {
    %c0_i32 = arith.constant 0 : i32
    return %arg0, %arg2 : i32, i32
  }
  func.func @transform_1(%arg0: i32, %arg1: i32, %arg2: i32) -> (i32, i32) {
    %c0_i32 = arith.constant 0 : i32
    return %arg2, %arg1 : i32, i32
  }
  func.func @transform_2(%arg0: i32, %arg1: i32, %arg2: i32) -> (i32, i32) {
    %c0_i32 = arith.constant 0 : i32
    %c0_i32_0 = arith.constant 0 : i32
    return %c0_i32, %arg1 : i32, i32
  }
  func.func @transform_3(%arg0: i32, %arg1: i32, %arg2: i32) -> (i32, i32) {
    %c0_i32 = arith.constant 0 : i32
    return %arg0, %arg1 : i32, i32
  }
}

module attributes {stable_mosaic.version = 11 : i64} {
  func.func @_mha_cross_kernel(%arg0: i32, %arg1: memref<1x8x64xf32, #tpu.memory_space<vmem>>, %arg2: memref<1x8x32xf32, #tpu.memory_space<vmem>>, %arg3: memref<1x8x32xf32, #tpu.memory_space<vmem>>, %arg4: memref<8x8xf32, #tpu.memory_space<vmem>>, %arg5: memref<32x32xf32, #tpu.memory_space<vmem>>, %arg6: memref<1x32xf32, #tpu.memory_space<vmem>>, %arg7: memref<1x32xf32, #tpu.memory_space<vmem>>, %arg8: memref<1x32xf32, #tpu.memory_space<vmem>>, %arg9: memref<1x8x32xf32, #tpu.memory_space<vmem>>) attributes {dimension_semantics = [#tpu.dimension_semantics<parallel>], iteration_bounds = array<i64: 2>, scalar_prefetch = 0 : i64, scratch_operands = 0 : i64, tpu.core_type = #tpu.core_type<tc>, window_params = [{transform_indices = @transform_0, window_bounds = array<i64: 1, 8, 64>}, {transform_indices = @transform_1, window_bounds = array<i64: 1, 8, 32>}, {transform_indices = @transform_2, window_bounds = array<i64: 1, 8, 32>}, {pipeline_mode = #tpu.pipeline_mode<synchronous>, transform_indices = @transform_3, window_bounds = array<i64: 8, 8>}, {pipeline_mode = #tpu.pipeline_mode<synchronous>, transform_indices = @transform_4, window_bounds = array<i64: 32, 32>}, {pipeline_mode = #tpu.pipeline_mode<synchronous>, transform_indices = @transform_5, window_bounds = array<i64: 1, 32>}, {pipeline_mode = #tpu.pipeline_mode<synchronous>, transform_indices = @transform_6, window_bounds = array<i64: 1, 32>}, {pipeline_mode = #tpu.pipeline_mode<synchronous>, transform_indices = @transform_7, window_bounds = array<i64: 1, 32>}, {transform_indices = @transform_8, window_bounds = array<i64: 1, 8, 32>}]} {
    %c0 = arith.constant 0 : index
    %c0_0 = arith.constant 0 : index
    %c0_1 = arith.constant 0 : index
    %0 = vector.load %arg1[%c0, %c0_0, %c0_1] : memref<1x8x64xf32, #tpu.memory_space<vmem>>, vector<1x8x64xf32>
    %1 = vector.shape_cast %0 : vector<1x8x64xf32> to vector<8x64xf32>
    %2 = vector.extract_strided_slice %1 {offsets = [0, 0], sizes = [8, 32], strides = [1, 1]} : vector<8x64xf32> to vector<8x32xf32>
    %3 = vector.extract_strided_slice %1 {offsets = [0, 32], sizes = [8, 32], strides = [1, 1]} : vector<8x64xf32> to vector<8x32xf32>
    %c0_2 = arith.constant 0 : index
    %c0_3 = arith.constant 0 : index
    %c0_4 = arith.constant 0 : index
    %4 = vector.load %arg2[%c0_2, %c0_3, %c0_4] : memref<1x8x32xf32, #tpu.memory_space<vmem>>, vector<1x8x32xf32>
    %5 = vector.shape_cast %4 : vector<1x8x32xf32> to vector<8x32xf32>
    %c0_5 = arith.constant 0 : index
    %c0_6 = arith.constant 0 : index
    %6 = vector.load %arg4[%c0_5, %c0_6] : memref<8x8xf32, #tpu.memory_space<vmem>>, vector<8x8xf32>
    %c0_7 = arith.constant 0 : index
    %c0_8 = arith.constant 0 : index
    %7 = vector.load %arg5[%c0_7, %c0_8] : memref<32x32xf32, #tpu.memory_space<vmem>>, vector<32x32xf32>
    %cst = arith.constant 0.000000e+00 : f32
    %8 = vector.broadcast %cst : f32 to vector<8x32xf32>
    %9 = vector.extract_strided_slice %2 {offsets = [0, 0], sizes = [8, 8], strides = [1, 1]} : vector<8x32xf32> to vector<8x8xf32>
    %10 = vector.extract_strided_slice %3 {offsets = [0, 0], sizes = [8, 8], strides = [1, 1]} : vector<8x32xf32> to vector<8x8xf32>
    %11 = vector.extract_strided_slice %5 {offsets = [0, 0], sizes = [8, 8], strides = [1, 1]} : vector<8x32xf32> to vector<8x8xf32>
    %12 = arith.truncf %9 : vector<8x8xf32> to vector<8x8xbf16>
    %13 = arith.truncf %10 : vector<8x8xf32> to vector<8x8xbf16>
    %cst_9 = arith.constant dense<0.000000e+00> : vector<8x8xf32>
    %14 = tpu.matmul %12, %13, %cst_9 {dimension_numbers = #tpu.dot_dimension_numbers<[1], [1], [0], [0], [0, 0, 1, 0], [], []>} : vector<8x8xbf16>, vector<8x8xbf16>, vector<8x8xf32> -> vector<8x8xf32>
    %cst_10 = arith.constant 0.353553385 : f32
    %15 = vector.broadcast %cst_10 : f32 to vector<8x8xf32>
    %16 = arith.mulf %14, %15 : vector<8x8xf32>
    %17 = arith.addf %16, %6 : vector<8x8xf32>
    %cst_11 = arith.constant dense<0xFF800000> : vector<8xf32>
    %18 = vector.multi_reduction <maximumf>, %17, %cst_11 [1] : vector<8x8xf32> to vector<8xf32>
    %19 = vector.shape_cast %18 : vector<8xf32> to vector<8x1xf32>
    %20 = vector.broadcast %19 : vector<8x1xf32> to vector<8x8xf32>
    %21 = arith.subf %17, %20 : vector<8x8xf32>
    %22 = math.exp %21 : vector<8x8xf32>
    %cst_12 = arith.constant dense<0.000000e+00> : vector<8xf32>
    %23 = vector.multi_reduction <add>, %22, %cst_12 [1] : vector<8x8xf32> to vector<8xf32>
    %24 = vector.shape_cast %23 : vector<8xf32> to vector<8x1xf32>
    %25 = tpu.reciprocal %24 {approx = true} : vector<8x1xf32> -> vector<8x1xf32>
    %26 = vector.broadcast %25 : vector<8x1xf32> to vector<8x8xf32>
    %27 = arith.mulf %22, %26 : vector<8x8xf32>
    %28 = arith.truncf %27 : vector<8x8xf32> to vector<8x8xbf16>
    %29 = arith.truncf %11 : vector<8x8xf32> to vector<8x8xbf16>
    %cst_13 = arith.constant dense<0.000000e+00> : vector<8x8xf32>
    %30 = tpu.matmul %28, %29, %cst_13 {dimension_numbers = #tpu.dot_dimension_numbers<[1], [0], [0], [1], [0, 0, 1, 1], [], []>} : vector<8x8xbf16>, vector<8x8xbf16>, vector<8x8xf32> -> vector<8x8xf32>
    %31 = arith.truncf %30 : vector<8x8xf32> to vector<8x8xbf16>
    %32 = vector.extract_strided_slice %7 {offsets = [0, 0], sizes = [8, 32], strides = [1, 1]} : vector<32x32xf32> to vector<8x32xf32>
    %33 = arith.truncf %32 : vector<8x32xf32> to vector<8x32xbf16>
    %cst_14 = arith.constant dense<0.000000e+00> : vector<8x32xf32>
    %34 = tpu.matmul %31, %33, %cst_14 {dimension_numbers = #tpu.dot_dimension_numbers<[1], [0], [0], [1], [0, 0, 1, 1], [], []>} : vector<8x8xbf16>, vector<8x32xbf16>, vector<8x32xf32> -> vector<8x32xf32>
    %35 = arith.addf %8, %34 : vector<8x32xf32>
    %36 = vector.extract_strided_slice %2 {offsets = [0, 8], sizes = [8, 8], strides = [1, 1]} : vector<8x32xf32> to vector<8x8xf32>
    %37 = vector.extract_strided_slice %3 {offsets = [0, 8], sizes = [8, 8], strides = [1, 1]} : vector<8x32xf32> to vector<8x8xf32>
    %38 = vector.extract_strided_slice %5 {offsets = [0, 8], sizes = [8, 8], strides = [1, 1]} : vector<8x32xf32> to vector<8x8xf32>
    %39 = arith.truncf %36 : vector<8x8xf32> to vector<8x8xbf16>
    %40 = arith.truncf %37 : vector<8x8xf32> to vector<8x8xbf16>
    %cst_15 = arith.constant dense<0.000000e+00> : vector<8x8xf32>
    %41 = tpu.matmul %39, %40, %cst_15 {dimension_numbers = #tpu.dot_dimension_numbers<[1], [1], [0], [0], [0, 0, 1, 0], [], []>} : vector<8x8xbf16>, vector<8x8xbf16>, vector<8x8xf32> -> vector<8x8xf32>
    %cst_16 = arith.constant 0.353553385 : f32
    %42 = vector.broadcast %cst_16 : f32 to vector<8x8xf32>
    %43 = arith.mulf %41, %42 : vector<8x8xf32>
    %44 = arith.addf %43, %6 : vector<8x8xf32>
    %cst_17 = arith.constant dense<0xFF800000> : vector<8xf32>
    %45 = vector.multi_reduction <maximumf>, %44, %cst_17 [1] : vector<8x8xf32> to vector<8xf32>
    %46 = vector.shape_cast %45 : vector<8xf32> to vector<8x1xf32>
    %47 = vector.broadcast %46 : vector<8x1xf32> to vector<8x8xf32>
    %48 = arith.subf %44, %47 : vector<8x8xf32>
    %49 = math.exp %48 : vector<8x8xf32>
    %cst_18 = arith.constant dense<0.000000e+00> : vector<8xf32>
    %50 = vector.multi_reduction <add>, %49, %cst_18 [1] : vector<8x8xf32> to vector<8xf32>
    %51 = vector.shape_cast %50 : vector<8xf32> to vector<8x1xf32>
    %52 = tpu.reciprocal %51 {approx = true} : vector<8x1xf32> -> vector<8x1xf32>
    %53 = vector.broadcast %52 : vector<8x1xf32> to vector<8x8xf32>
    %54 = arith.mulf %49, %53 : vector<8x8xf32>
    %55 = arith.truncf %54 : vector<8x8xf32> to vector<8x8xbf16>
    %56 = arith.truncf %38 : vector<8x8xf32> to vector<8x8xbf16>
    %cst_19 = arith.constant dense<0.000000e+00> : vector<8x8xf32>
    %57 = tpu.matmul %55, %56, %cst_19 {dimension_numbers = #tpu.dot_dimension_numbers<[1], [0], [0], [1], [0, 0, 1, 1], [], []>} : vector<8x8xbf16>, vector<8x8xbf16>, vector<8x8xf32> -> vector<8x8xf32>
    %58 = arith.truncf %57 : vector<8x8xf32> to vector<8x8xbf16>
    %59 = vector.extract_strided_slice %7 {offsets = [8, 0], sizes = [8, 32], strides = [1, 1]} : vector<32x32xf32> to vector<8x32xf32>
    %60 = arith.truncf %59 : vector<8x32xf32> to vector<8x32xbf16>
    %cst_20 = arith.constant dense<0.000000e+00> : vector<8x32xf32>
    %61 = tpu.matmul %58, %60, %cst_20 {dimension_numbers = #tpu.dot_dimension_numbers<[1], [0], [0], [1], [0, 0, 1, 1], [], []>} : vector<8x8xbf16>, vector<8x32xbf16>, vector<8x32xf32> -> vector<8x32xf32>
    %62 = arith.addf %35, %61 : vector<8x32xf32>
    %63 = vector.extract_strided_slice %2 {offsets = [0, 16], sizes = [8, 8], strides = [1, 1]} : vector<8x32xf32> to vector<8x8xf32>
    %64 = vector.extract_strided_slice %3 {offsets = [0, 16], sizes = [8, 8], strides = [1, 1]} : vector<8x32xf32> to vector<8x8xf32>
    %65 = vector.extract_strided_slice %5 {offsets = [0, 16], sizes = [8, 8], strides = [1, 1]} : vector<8x32xf32> to vector<8x8xf32>
    %66 = arith.truncf %63 : vector<8x8xf32> to vector<8x8xbf16>
    %67 = arith.truncf %64 : vector<8x8xf32> to vector<8x8xbf16>
    %cst_21 = arith.constant dense<0.000000e+00> : vector<8x8xf32>
    %68 = tpu.matmul %66, %67, %cst_21 {dimension_numbers = #tpu.dot_dimension_numbers<[1], [1], [0], [0], [0, 0, 1, 0], [], []>} : vector<8x8xbf16>, vector<8x8xbf16>, vector<8x8xf32> -> vector<8x8xf32>
    %cst_22 = arith.constant 0.353553385 : f32
    %69 = vector.broadcast %cst_22 : f32 to vector<8x8xf32>
    %70 = arith.mulf %68, %69 : vector<8x8xf32>
    %71 = arith.addf %70, %6 : vector<8x8xf32>
    %cst_23 = arith.constant dense<0xFF800000> : vector<8xf32>
    %72 = vector.multi_reduction <maximumf>, %71, %cst_23 [1] : vector<8x8xf32> to vector<8xf32>
    %73 = vector.shape_cast %72 : vector<8xf32> to vector<8x1xf32>
    %74 = vector.broadcast %73 : vector<8x1xf32> to vector<8x8xf32>
    %75 = arith.subf %71, %74 : vector<8x8xf32>
    %76 = math.exp %75 : vector<8x8xf32>
    %cst_24 = arith.constant dense<0.000000e+00> : vector<8xf32>
    %77 = vector.multi_reduction <add>, %76, %cst_24 [1] : vector<8x8xf32> to vector<8xf32>
    %78 = vector.shape_cast %77 : vector<8xf32> to vector<8x1xf32>
    %79 = tpu.reciprocal %78 {approx = true} : vector<8x1xf32> -> vector<8x1xf32>
    %80 = vector.broadcast %79 : vector<8x1xf32> to vector<8x8xf32>
    %81 = arith.mulf %76, %80 : vector<8x8xf32>
    %82 = arith.truncf %81 : vector<8x8xf32> to vector<8x8xbf16>
    %83 = arith.truncf %65 : vector<8x8xf32> to vector<8x8xbf16>
    %cst_25 = arith.constant dense<0.000000e+00> : vector<8x8xf32>
    %84 = tpu.matmul %82, %83, %cst_25 {dimension_numbers = #tpu.dot_dimension_numbers<[1], [0], [0], [1], [0, 0, 1, 1], [], []>} : vector<8x8xbf16>, vector<8x8xbf16>, vector<8x8xf32> -> vector<8x8xf32>
    %85 = arith.truncf %84 : vector<8x8xf32> to vector<8x8xbf16>
    %86 = vector.extract_strided_slice %7 {offsets = [16, 0], sizes = [8, 32], strides = [1, 1]} : vector<32x32xf32> to vector<8x32xf32>
    %87 = arith.truncf %86 : vector<8x32xf32> to vector<8x32xbf16>
    %cst_26 = arith.constant dense<0.000000e+00> : vector<8x32xf32>
    %88 = tpu.matmul %85, %87, %cst_26 {dimension_numbers = #tpu.dot_dimension_numbers<[1], [0], [0], [1], [0, 0, 1, 1], [], []>} : vector<8x8xbf16>, vector<8x32xbf16>, vector<8x32xf32> -> vector<8x32xf32>
    %89 = arith.addf %62, %88 : vector<8x32xf32>
    %90 = vector.extract_strided_slice %2 {offsets = [0, 24], sizes = [8, 8], strides = [1, 1]} : vector<8x32xf32> to vector<8x8xf32>
    %91 = vector.extract_strided_slice %3 {offsets = [0, 24], sizes = [8, 8], strides = [1, 1]} : vector<8x32xf32> to vector<8x8xf32>
    %92 = vector.extract_strided_slice %5 {offsets = [0, 24], sizes = [8, 8], strides = [1, 1]} : vector<8x32xf32> to vector<8x8xf32>
    %93 = arith.truncf %90 : vector<8x8xf32> to vector<8x8xbf16>
    %94 = arith.truncf %91 : vector<8x8xf32> to vector<8x8xbf16>
    %cst_27 = arith.constant dense<0.000000e+00> : vector<8x8xf32>
    %95 = tpu.matmul %93, %94, %cst_27 {dimension_numbers = #tpu.dot_dimension_numbers<[1], [1], [0], [0], [0, 0, 1, 0], [], []>} : vector<8x8xbf16>, vector<8x8xbf16>, vector<8x8xf32> -> vector<8x8xf32>
    %cst_28 = arith.constant 0.353553385 : f32
    %96 = vector.broadcast %cst_28 : f32 to vector<8x8xf32>
    %97 = arith.mulf %95, %96 : vector<8x8xf32>
    %98 = arith.addf %97, %6 : vector<8x8xf32>
    %cst_29 = arith.constant dense<0xFF800000> : vector<8xf32>
    %99 = vector.multi_reduction <maximumf>, %98, %cst_29 [1] : vector<8x8xf32> to vector<8xf32>
    %100 = vector.shape_cast %99 : vector<8xf32> to vector<8x1xf32>
    %101 = vector.broadcast %100 : vector<8x1xf32> to vector<8x8xf32>
    %102 = arith.subf %98, %101 : vector<8x8xf32>
    %103 = math.exp %102 : vector<8x8xf32>
    %cst_30 = arith.constant dense<0.000000e+00> : vector<8xf32>
    %104 = vector.multi_reduction <add>, %103, %cst_30 [1] : vector<8x8xf32> to vector<8xf32>
    %105 = vector.shape_cast %104 : vector<8xf32> to vector<8x1xf32>
    %106 = tpu.reciprocal %105 {approx = true} : vector<8x1xf32> -> vector<8x1xf32>
    %107 = vector.broadcast %106 : vector<8x1xf32> to vector<8x8xf32>
    %108 = arith.mulf %103, %107 : vector<8x8xf32>
    %109 = arith.truncf %108 : vector<8x8xf32> to vector<8x8xbf16>
    %110 = arith.truncf %92 : vector<8x8xf32> to vector<8x8xbf16>
    %cst_31 = arith.constant dense<0.000000e+00> : vector<8x8xf32>
    %111 = tpu.matmul %109, %110, %cst_31 {dimension_numbers = #tpu.dot_dimension_numbers<[1], [0], [0], [1], [0, 0, 1, 1], [], []>} : vector<8x8xbf16>, vector<8x8xbf16>, vector<8x8xf32> -> vector<8x8xf32>
    %112 = arith.truncf %111 : vector<8x8xf32> to vector<8x8xbf16>
    %113 = vector.extract_strided_slice %7 {offsets = [24, 0], sizes = [8, 32], strides = [1, 1]} : vector<32x32xf32> to vector<8x32xf32>
    %114 = arith.truncf %113 : vector<8x32xf32> to vector<8x32xbf16>
    %cst_32 = arith.constant dense<0.000000e+00> : vector<8x32xf32>
    %115 = tpu.matmul %112, %114, %cst_32 {dimension_numbers = #tpu.dot_dimension_numbers<[1], [0], [0], [1], [0, 0, 1, 1], [], []>} : vector<8x8xbf16>, vector<8x32xbf16>, vector<8x32xf32> -> vector<8x32xf32>
    %116 = arith.addf %89, %115 : vector<8x32xf32>
    %c0_33 = arith.constant 0 : index
    %c0_34 = arith.constant 0 : index
    %117 = vector.load %arg6[%c0_33, %c0_34] : memref<1x32xf32, #tpu.memory_space<vmem>>, vector<1x32xf32>
    %118 = vector.broadcast %117 : vector<1x32xf32> to vector<8x32xf32>
    %119 = arith.addf %116, %118 : vector<8x32xf32>
    %c0_35 = arith.constant 0 : index
    %c0_36 = arith.constant 0 : index
    %c0_37 = arith.constant 0 : index
    %120 = vector.load %arg3[%c0_35, %c0_36, %c0_37] : memref<1x8x32xf32, #tpu.memory_space<vmem>>, vector<1x8x32xf32>
    %121 = vector.shape_cast %120 : vector<1x8x32xf32> to vector<8x32xf32>
    %122 = arith.addf %119, %121 : vector<8x32xf32>
    %cst_38 = arith.constant dense<0.000000e+00> : vector<8xf32>
    %123 = vector.multi_reduction <add>, %122, %cst_38 [1] : vector<8x32xf32> to vector<8xf32>
    %124 = vector.shape_cast %123 : vector<8xf32> to vector<8x1xf32>
    %cst_39 = arith.constant 3.200000e+01 : f32
    %125 = vector.broadcast %cst_39 : f32 to vector<8x1xf32>
    %126 = arith.divf %124, %125 : vector<8x1xf32>
    %127 = vector.broadcast %126 : vector<8x1xf32> to vector<8x32xf32>
    %128 = arith.subf %122, %127 : vector<8x32xf32>
    %129 = arith.mulf %128, %128 : vector<8x32xf32>
    %cst_40 = arith.constant dense<0.000000e+00> : vector<8xf32>
    %130 = vector.multi_reduction <add>, %129, %cst_40 [1] : vector<8x32xf32> to vector<8xf32>
    %131 = vector.shape_cast %130 : vector<8xf32> to vector<8x1xf32>
    %cst_41 = arith.constant 3.200000e+01 : f32
    %132 = vector.broadcast %cst_41 : f32 to vector<8x1xf32>
    %133 = arith.divf %131, %132 : vector<8x1xf32>
    %cst_42 = arith.constant 9.99999974E-6 : f32
    %134 = vector.broadcast %cst_42 : f32 to vector<8x1xf32>
    %135 = arith.addf %133, %134 : vector<8x1xf32>
    %136 = math.rsqrt %135 : vector<8x1xf32>
    %137 = vector.broadcast %136 : vector<8x1xf32> to vector<8x32xf32>
    %138 = arith.mulf %128, %137 : vector<8x32xf32>
    %c0_43 = arith.constant 0 : index
    %c0_44 = arith.constant 0 : index
    %139 = vector.load %arg7[%c0_43, %c0_44] : memref<1x32xf32, #tpu.memory_space<vmem>>, vector<1x32xf32>
    %140 = vector.broadcast %139 : vector<1x32xf32> to vector<8x32xf32>
    %141 = arith.mulf %138, %140 : vector<8x32xf32>
    %c0_45 = arith.constant 0 : index
    %c0_46 = arith.constant 0 : index
    %142 = vector.load %arg8[%c0_45, %c0_46] : memref<1x32xf32, #tpu.memory_space<vmem>>, vector<1x32xf32>
    %143 = vector.broadcast %142 : vector<1x32xf32> to vector<8x32xf32>
    %144 = arith.addf %141, %143 : vector<8x32xf32>
    %c0_47 = arith.constant 0 : index
    %c0_48 = arith.constant 0 : index
    %c0_49 = arith.constant 0 : index
    %145 = vector.load %arg9[%c0_47, %c0_48, %c0_49] : memref<1x8x32xf32, #tpu.memory_space<vmem>>, vector<1x8x32xf32>
    %146 = vector.shape_cast %145 : vector<1x8x32xf32> to vector<8x32xf32>
    %147 = vector.shape_cast %144 : vector<8x32xf32> to vector<1x8x32xf32>
    tpu.vector_store %arg9[%c0_47, %c0_48, %c0_49], %147 {strides = array<i32>} : memref<1x8x32xf32, #tpu.memory_space<vmem>>, vector<1x8x32xf32>,
    return
  }
  func.func @transform_0(%arg0: i32) -> (i32, i32, i32) {
    %c0_i32 = arith.constant 0 : i32
    %c0_i32_0 = arith.constant 0 : i32
    %c0_i32_1 = arith.constant 0 : i32
    return %arg0, %c0_i32, %c0_i32_0 : i32, i32, i32
  }
  func.func @transform_1(%arg0: i32) -> (i32, i32, i32) {
    %c0_i32 = arith.constant 0 : i32
    %c0_i32_0 = arith.constant 0 : i32
    %c0_i32_1 = arith.constant 0 : i32
    return %arg0, %c0_i32, %c0_i32_0 : i32, i32, i32
  }
  func.func @transform_2(%arg0: i32) -> (i32, i32, i32) {
    %c0_i32 = arith.constant 0 : i32
    %c0_i32_0 = arith.constant 0 : i32
    %c0_i32_1 = arith.constant 0 : i32
    return %arg0, %c0_i32, %c0_i32_0 : i32, i32, i32
  }
  func.func @transform_3(%arg0: i32) -> (i32, i32) {
    %c0_i32 = arith.constant 0 : i32
    %c0_i32_0 = arith.constant 0 : i32
    %c0_i32_1 = arith.constant 0 : i32
    return %c0_i32, %c0_i32_0 : i32, i32
  }
  func.func @transform_4(%arg0: i32) -> (i32, i32) {
    %c0_i32 = arith.constant 0 : i32
    %c0_i32_0 = arith.constant 0 : i32
    %c0_i32_1 = arith.constant 0 : i32
    return %c0_i32, %c0_i32_0 : i32, i32
  }
  func.func @transform_5(%arg0: i32) -> (i32, i32) {
    %c0_i32 = arith.constant 0 : i32
    %c0_i32_0 = arith.constant 0 : i32
    %c0_i32_1 = arith.constant 0 : i32
    return %c0_i32, %c0_i32_0 : i32, i32
  }
  func.func @transform_6(%arg0: i32) -> (i32, i32) {
    %c0_i32 = arith.constant 0 : i32
    %c0_i32_0 = arith.constant 0 : i32
    %c0_i32_1 = arith.constant 0 : i32
    return %c0_i32, %c0_i32_0 : i32, i32
  }
  func.func @transform_7(%arg0: i32) -> (i32, i32) {
    %c0_i32 = arith.constant 0 : i32
    %c0_i32_0 = arith.constant 0 : i32
    %c0_i32_1 = arith.constant 0 : i32
    return %c0_i32, %c0_i32_0 : i32, i32
  }
  func.func @transform_8(%arg0: i32) -> (i32, i32, i32) {
    %c0_i32 = arith.constant 0 : i32
    %c0_i32_0 = arith.constant 0 : i32
    %c0_i32_1 = arith.constant 0 : i32
    return %arg0, %c0_i32, %c0_i32_0 : i32, i32, i32
  }
}

module attributes {stable_mosaic.version = 11 : i64} {
  func.func @_linear_kernel(%arg0: i32, %arg1: i32, %arg2: i32, %arg3: memref<16x32xf32, #tpu.memory_space<vmem>>, %arg4: memref<32x64xf32, #tpu.memory_space<vmem>>, %arg5: memref<1x64xf32, #tpu.memory_space<vmem>>, %arg6: memref<16x64xf32, #tpu.memory_space<vmem>>, %arg7: memref<16x64xf32, #tpu.memory_space<vmem>>) attributes {dimension_semantics = [#tpu.dimension_semantics<parallel>, #tpu.dimension_semantics<parallel>, #tpu.dimension_semantics<arbitrary>], iteration_bounds = array<i64: 1, 1, 1>, scalar_prefetch = 0 : i64, scratch_operands = 1 : i64, tpu.core_type = #tpu.core_type<tc>, window_params = [{transform_indices = @transform_0, window_bounds = array<i64: 16, 32>}, {transform_indices = @transform_1, window_bounds = array<i64: 32, 64>}, {transform_indices = @transform_2, window_bounds = array<i64: 1, 64>}, {transform_indices = @transform_3, window_bounds = array<i64: 16, 64>}]} {
    %c0_i32 = arith.constant 0 : i32
    %0 = arith.cmpi eq, %arg2, %c0_i32 : i32
    %1 = arith.extui %0 : i1 to i32
    %c0_i32_0 = arith.constant 0 : i32
    %2 = arith.cmpi ne, %1, %c0_i32_0 : i32
    scf.if %2 {
      %cst_10 = arith.constant 0.000000e+00 : f32
      %14 = vector.broadcast %cst_10 : f32 to vector<16x64xf32>
      %c0_11 = arith.constant 0 : index
      %c0_12 = arith.constant 0 : index
      %15 = vector.load %arg7[%c0_11, %c0_12] : memref<16x64xf32, #tpu.memory_space<vmem>>, vector<16x64xf32>
      tpu.vector_store %arg7[%c0_11, %c0_12], %14 {strides = array<i32>} : memref<16x64xf32, #tpu.memory_space<vmem>>, vector<16x64xf32>,
    } else {
    }
    %c0 = arith.constant 0 : index
    %c0_1 = arith.constant 0 : index
    %3 = vector.load %arg7[%c0, %c0_1] : memref<16x64xf32, #tpu.memory_space<vmem>>, vector<16x64xf32>
    %c0_2 = arith.constant 0 : index
    %c0_3 = arith.constant 0 : index
    %4 = vector.load %arg3[%c0_2, %c0_3] : memref<16x32xf32, #tpu.memory_space<vmem>>, vector<16x32xf32>
    %5 = arith.truncf %4 : vector<16x32xf32> to vector<16x32xbf16>
    %c0_4 = arith.constant 0 : index
    %c0_5 = arith.constant 0 : index
    %6 = vector.load %arg4[%c0_4, %c0_5] : memref<32x64xf32, #tpu.memory_space<vmem>>, vector<32x64xf32>
    %7 = arith.truncf %6 : vector<32x64xf32> to vector<32x64xbf16>
    %cst = arith.constant dense<0.000000e+00> : vector<16x64xf32>
    %8 = tpu.matmul %5, %7, %cst {dimension_numbers = #tpu.dot_dimension_numbers<[1], [0], [0], [1], [0, 0, 1, 1], [], []>} : vector<16x32xbf16>, vector<32x64xbf16>, vector<16x64xf32> -> vector<16x64xf32>
    %9 = arith.addf %3, %8 : vector<16x64xf32>
    %c0_6 = arith.constant 0 : index
    %c0_7 = arith.constant 0 : index
    %10 = vector.load %arg7[%c0_6, %c0_7] : memref<16x64xf32, #tpu.memory_space<vmem>>, vector<16x64xf32>
    tpu.vector_store %arg7[%c0_6, %c0_7], %9 {strides = array<i32>} : memref<16x64xf32, #tpu.memory_space<vmem>>, vector<16x64xf32>,
    %c0_i32_8 = arith.constant 0 : i32
    %11 = arith.cmpi eq, %arg2, %c0_i32_8 : i32
    %12 = arith.extui %11 : i1 to i32
    %c0_i32_9 = arith.constant 0 : i32
    %13 = arith.cmpi ne, %12, %c0_i32_9 : i32
    scf.if %13 {
      %c0_10 = arith.constant 0 : index
      %c0_11 = arith.constant 0 : index
      %14 = vector.load %arg7[%c0_10, %c0_11] : memref<16x64xf32, #tpu.memory_space<vmem>>, vector<16x64xf32>
      %c0_12 = arith.constant 0 : index
      %c0_13 = arith.constant 0 : index
      %15 = vector.load %arg5[%c0_12, %c0_13] : memref<1x64xf32, #tpu.memory_space<vmem>>, vector<1x64xf32>
      %16 = vector.broadcast %15 : vector<1x64xf32> to vector<16x64xf32>
      %17 = arith.addf %14, %16 : vector<16x64xf32>
      %c0_14 = arith.constant 0 : index
      %c0_15 = arith.constant 0 : index
      %18 = vector.load %arg6[%c0_14, %c0_15] : memref<16x64xf32, #tpu.memory_space<vmem>>, vector<16x64xf32>
      tpu.vector_store %arg6[%c0_14, %c0_15], %17 {strides = array<i32>} : memref<16x64xf32, #tpu.memory_space<vmem>>, vector<16x64xf32>,
    } else {
    }
    return
  }
  func.func @transform_0(%arg0: i32, %arg1: i32, %arg2: i32) -> (i32, i32) {
    %c0_i32 = arith.constant 0 : i32
    return %arg0, %arg2 : i32, i32
  }
  func.func @transform_1(%arg0: i32, %arg1: i32, %arg2: i32) -> (i32, i32) {
    %c0_i32 = arith.constant 0 : i32
    return %arg2, %arg1 : i32, i32
  }
  func.func @transform_2(%arg0: i32, %arg1: i32, %arg2: i32) -> (i32, i32) {
    %c0_i32 = arith.constant 0 : i32
    %c0_i32_0 = arith.constant 0 : i32
    return %c0_i32, %arg1 : i32, i32
  }
  func.func @transform_3(%arg0: i32, %arg1: i32, %arg2: i32) -> (i32, i32) {
    %c0_i32 = arith.constant 0 : i32
    return %arg0, %arg1 : i32, i32
  }
}

module attributes {stable_mosaic.version = 11 : i64} {
  func.func @_ffn_kernel(%arg0: i32, %arg1: memref<16x32xf32, #tpu.memory_space<vmem>>, %arg2: memref<32x128xf32, #tpu.memory_space<vmem>>, %arg3: memref<1x128xf32, #tpu.memory_space<vmem>>, %arg4: memref<128x32xf32, #tpu.memory_space<vmem>>, %arg5: memref<1x32xf32, #tpu.memory_space<vmem>>, %arg6: memref<1x32xf32, #tpu.memory_space<vmem>>, %arg7: memref<1x32xf32, #tpu.memory_space<vmem>>, %arg8: memref<16x32xf32, #tpu.memory_space<vmem>>) attributes {dimension_semantics = [#tpu.dimension_semantics<parallel>], iteration_bounds = array<i64: 1>, scalar_prefetch = 0 : i64, scratch_operands = 0 : i64, tpu.core_type = #tpu.core_type<tc>, window_params = [{transform_indices = @transform_0, window_bounds = array<i64: 16, 32>}, {pipeline_mode = #tpu.pipeline_mode<synchronous>, transform_indices = @transform_1, window_bounds = array<i64: 32, 128>}, {pipeline_mode = #tpu.pipeline_mode<synchronous>, transform_indices = @transform_2, window_bounds = array<i64: 1, 128>}, {pipeline_mode = #tpu.pipeline_mode<synchronous>, transform_indices = @transform_3, window_bounds = array<i64: 128, 32>}, {pipeline_mode = #tpu.pipeline_mode<synchronous>, transform_indices = @transform_4, window_bounds = array<i64: 1, 32>}, {pipeline_mode = #tpu.pipeline_mode<synchronous>, transform_indices = @transform_5, window_bounds = array<i64: 1, 32>}, {pipeline_mode = #tpu.pipeline_mode<synchronous>, transform_indices = @transform_6, window_bounds = array<i64: 1, 32>}, {transform_indices = @transform_7, window_bounds = array<i64: 16, 32>}]} {
    %c0 = arith.constant 0 : index
    %c0_0 = arith.constant 0 : index
    %0 = vector.load %arg1[%c0, %c0_0] : memref<16x32xf32, #tpu.memory_space<vmem>>, vector<16x32xf32>
    %1 = arith.truncf %0 : vector<16x32xf32> to vector<16x32xbf16>
    %c0_1 = arith.constant 0 : index
    %c0_2 = arith.constant 0 : index
    %2 = vector.load %arg2[%c0_1, %c0_2] : memref<32x128xf32, #tpu.memory_space<vmem>>, vector<32x128xf32>
    %3 = arith.truncf %2 : vector<32x128xf32> to vector<32x128xbf16>
    %cst = arith.constant dense<0.000000e+00> : vector<16x128xf32>
    %4 = tpu.matmul %1, %3, %cst {dimension_numbers = #tpu.dot_dimension_numbers<[1], [0], [0], [1], [0, 0, 1, 1], [], []>} : vector<16x32xbf16>, vector<32x128xbf16>, vector<16x128xf32> -> vector<16x128xf32>
    %c0_3 = arith.constant 0 : index
    %c0_4 = arith.constant 0 : index
    %5 = vector.load %arg3[%c0_3, %c0_4] : memref<1x128xf32, #tpu.memory_space<vmem>>, vector<1x128xf32>
    %6 = vector.broadcast %5 : vector<1x128xf32> to vector<16x128xf32>
    %7 = arith.addf %4, %6 : vector<16x128xf32>
    %cst_5 = arith.constant 0.000000e+00 : f32
    %8 = vector.broadcast %cst_5 : f32 to vector<16x128xf32>
    %9 = arith.maximumf %7, %8 : vector<16x128xf32>
    %10 = arith.truncf %9 : vector<16x128xf32> to vector<16x128xbf16>
    %c0_6 = arith.constant 0 : index
    %c0_7 = arith.constant 0 : index
    %11 = vector.load %arg4[%c0_6, %c0_7] : memref<128x32xf32, #tpu.memory_space<vmem>>, vector<128x32xf32>
    %12 = arith.truncf %11 : vector<128x32xf32> to vector<128x32xbf16>
    %cst_8 = arith.constant dense<0.000000e+00> : vector<16x32xf32>
    %13 = tpu.matmul %10, %12, %cst_8 {dimension_numbers = #tpu.dot_dimension_numbers<[1], [0], [0], [1], [0, 0, 1, 1], [], []>} : vector<16x128xbf16>, vector<128x32xbf16>, vector<16x32xf32> -> vector<16x32xf32>
    %c0_9 = arith.constant 0 : index
    %c0_10 = arith.constant 0 : index
    %14 = vector.load %arg5[%c0_9, %c0_10] : memref<1x32xf32, #tpu.memory_space<vmem>>, vector<1x32xf32>
    %15 = vector.broadcast %14 : vector<1x32xf32> to vector<16x32xf32>
    %16 = arith.addf %13, %15 : vector<16x32xf32>
    %17 = arith.addf %16, %0 : vector<16x32xf32>
    %cst_11 = arith.constant dense<0.000000e+00> : vector<16xf32>
    %18 = vector.multi_reduction <add>, %17, %cst_11 [1] : vector<16x32xf32> to vector<16xf32>
    %19 = vector.shape_cast %18 : vector<16xf32> to vector<16x1xf32>
    %cst_12 = arith.constant 3.200000e+01 : f32
    %20 = vector.broadcast %cst_12 : f32 to vector<16x1xf32>
    %21 = arith.divf %19, %20 : vector<16x1xf32>
    %22 = vector.broadcast %21 : vector<16x1xf32> to vector<16x32xf32>
    %23 = arith.subf %17, %22 : vector<16x32xf32>
    %24 = arith.mulf %23, %23 : vector<16x32xf32>
    %cst_13 = arith.constant dense<0.000000e+00> : vector<16xf32>
    %25 = vector.multi_reduction <add>, %24, %cst_13 [1] : vector<16x32xf32> to vector<16xf32>
    %26 = vector.shape_cast %25 : vector<16xf32> to vector<16x1xf32>
    %cst_14 = arith.constant 3.200000e+01 : f32
    %27 = vector.broadcast %cst_14 : f32 to vector<16x1xf32>
    %28 = arith.divf %26, %27 : vector<16x1xf32>
    %cst_15 = arith.constant 9.99999974E-6 : f32
    %29 = vector.broadcast %cst_15 : f32 to vector<16x1xf32>
    %30 = arith.addf %28, %29 : vector<16x1xf32>
    %31 = math.rsqrt %30 : vector<16x1xf32>
    %32 = vector.broadcast %31 : vector<16x1xf32> to vector<16x32xf32>
    %33 = arith.mulf %23, %32 : vector<16x32xf32>
    %c0_16 = arith.constant 0 : index
    %c0_17 = arith.constant 0 : index
    %34 = vector.load %arg6[%c0_16, %c0_17] : memref<1x32xf32, #tpu.memory_space<vmem>>, vector<1x32xf32>
    %35 = vector.broadcast %34 : vector<1x32xf32> to vector<16x32xf32>
    %36 = arith.mulf %33, %35 : vector<16x32xf32>
    %c0_18 = arith.constant 0 : index
    %c0_19 = arith.constant 0 : index
    %37 = vector.load %arg7[%c0_18, %c0_19] : memref<1x32xf32, #tpu.memory_space<vmem>>, vector<1x32xf32>
    %38 = vector.broadcast %37 : vector<1x32xf32> to vector<16x32xf32>
    %39 = arith.addf %36, %38 : vector<16x32xf32>
    %c0_20 = arith.constant 0 : index
    %c0_21 = arith.constant 0 : index
    %40 = vector.load %arg8[%c0_20, %c0_21] : memref<16x32xf32, #tpu.memory_space<vmem>>, vector<16x32xf32>
    tpu.vector_store %arg8[%c0_20, %c0_21], %39 {strides = array<i32>} : memref<16x32xf32, #tpu.memory_space<vmem>>, vector<16x32xf32>,
    return
  }
  func.func @transform_0(%arg0: i32) -> (i32, i32) {
    %c0_i32 = arith.constant 0 : i32
    %c0_i32_0 = arith.constant 0 : i32
    return %arg0, %c0_i32 : i32, i32
  }
  func.func @transform_1(%arg0: i32) -> (i32, i32) {
    %c0_i32 = arith.constant 0 : i32
    %c0_i32_0 = arith.constant 0 : i32
    %c0_i32_1 = arith.constant 0 : i32
    return %c0_i32, %c0_i32_0 : i32, i32
  }
  func.func @transform_2(%arg0: i32) -> (i32, i32) {
    %c0_i32 = arith.constant 0 : i32
    %c0_i32_0 = arith.constant 0 : i32
    %c0_i32_1 = arith.constant 0 : i32
    return %c0_i32, %c0_i32_0 : i32, i32
  }
  func.func @transform_3(%arg0: i32) -> (i32, i32) {
    %c0_i32 = arith.constant 0 : i32
    %c0_i32_0 = arith.constant 0 : i32
    %c0_i32_1 = arith.constant 0 : i32
    return %c0_i32, %c0_i32_0 : i32, i32
  }
  func.func @transform_4(%arg0: i32) -> (i32, i32) {
    %c0_i32 = arith.constant 0 : i32
    %c0_i32_0 = arith.constant 0 : i32
    %c0_i32_1 = arith.constant 0 : i32
    return %c0_i32, %c0_i32_0 : i32, i32
  }
  func.func @transform_5(%arg0: i32) -> (i32, i32) {
    %c0_i32 = arith.constant 0 : i32
    %c0_i32_0 = arith.constant 0 : i32
    %c0_i32_1 = arith.constant 0 : i32
    return %c0_i32, %c0_i32_0 : i32, i32
  }
  func.func @transform_6(%arg0: i32) -> (i32, i32) {
    %c0_i32 = arith.constant 0 : i32
    %c0_i32_0 = arith.constant 0 : i32
    %c0_i32_1 = arith.constant 0 : i32
    return %c0_i32, %c0_i32_0 : i32, i32
  }
  func.func @transform_7(%arg0: i32) -> (i32, i32) {
    %c0_i32 = arith.constant 0 : i32
    %c0_i32_0 = arith.constant 0 : i32
    return %arg0, %c0_i32 : i32, i32
  }
}

module attributes {stable_mosaic.version = 11 : i64} {
  func.func @_linear_kernel(%arg0: i32, %arg1: i32, %arg2: i32, %arg3: memref<16x32xf32, #tpu.memory_space<vmem>>, %arg4: memref<32x16xf32, #tpu.memory_space<vmem>>, %arg5: memref<1x16xf32, #tpu.memory_space<vmem>>, %arg6: memref<16x16xf32, #tpu.memory_space<vmem>>, %arg7: memref<16x16xf32, #tpu.memory_space<vmem>>) attributes {dimension_semantics = [#tpu.dimension_semantics<parallel>, #tpu.dimension_semantics<parallel>, #tpu.dimension_semantics<arbitrary>], iteration_bounds = array<i64: 1, 1, 1>, scalar_prefetch = 0 : i64, scratch_operands = 1 : i64, tpu.core_type = #tpu.core_type<tc>, window_params = [{transform_indices = @transform_0, window_bounds = array<i64: 16, 32>}, {transform_indices = @transform_1, window_bounds = array<i64: 32, 16>}, {transform_indices = @transform_2, window_bounds = array<i64: 1, 16>}, {transform_indices = @transform_3, window_bounds = array<i64: 16, 16>}]} {
    %c0_i32 = arith.constant 0 : i32
    %0 = arith.cmpi eq, %arg2, %c0_i32 : i32
    %1 = arith.extui %0 : i1 to i32
    %c0_i32_0 = arith.constant 0 : i32
    %2 = arith.cmpi ne, %1, %c0_i32_0 : i32
    scf.if %2 {
      %cst_10 = arith.constant 0.000000e+00 : f32
      %14 = vector.broadcast %cst_10 : f32 to vector<16x16xf32>
      %c0_11 = arith.constant 0 : index
      %c0_12 = arith.constant 0 : index
      %15 = vector.load %arg7[%c0_11, %c0_12] : memref<16x16xf32, #tpu.memory_space<vmem>>, vector<16x16xf32>
      tpu.vector_store %arg7[%c0_11, %c0_12], %14 {strides = array<i32>} : memref<16x16xf32, #tpu.memory_space<vmem>>, vector<16x16xf32>,
    } else {
    }
    %c0 = arith.constant 0 : index
    %c0_1 = arith.constant 0 : index
    %3 = vector.load %arg7[%c0, %c0_1] : memref<16x16xf32, #tpu.memory_space<vmem>>, vector<16x16xf32>
    %c0_2 = arith.constant 0 : index
    %c0_3 = arith.constant 0 : index
    %4 = vector.load %arg3[%c0_2, %c0_3] : memref<16x32xf32, #tpu.memory_space<vmem>>, vector<16x32xf32>
    %5 = arith.truncf %4 : vector<16x32xf32> to vector<16x32xbf16>
    %c0_4 = arith.constant 0 : index
    %c0_5 = arith.constant 0 : index
    %6 = vector.load %arg4[%c0_4, %c0_5] : memref<32x16xf32, #tpu.memory_space<vmem>>, vector<32x16xf32>
    %7 = arith.truncf %6 : vector<32x16xf32> to vector<32x16xbf16>
    %cst = arith.constant dense<0.000000e+00> : vector<16x16xf32>
    %8 = tpu.matmul %5, %7, %cst {dimension_numbers = #tpu.dot_dimension_numbers<[1], [0], [0], [1], [0, 0, 1, 1], [], []>} : vector<16x32xbf16>, vector<32x16xbf16>, vector<16x16xf32> -> vector<16x16xf32>
    %9 = arith.addf %3, %8 : vector<16x16xf32>
    %c0_6 = arith.constant 0 : index
    %c0_7 = arith.constant 0 : index
    %10 = vector.load %arg7[%c0_6, %c0_7] : memref<16x16xf32, #tpu.memory_space<vmem>>, vector<16x16xf32>
    tpu.vector_store %arg7[%c0_6, %c0_7], %9 {strides = array<i32>} : memref<16x16xf32, #tpu.memory_space<vmem>>, vector<16x16xf32>,
    %c0_i32_8 = arith.constant 0 : i32
    %11 = arith.cmpi eq, %arg2, %c0_i32_8 : i32
    %12 = arith.extui %11 : i1 to i32
    %c0_i32_9 = arith.constant 0 : i32
    %13 = arith.cmpi ne, %12, %c0_i32_9 : i32
    scf.if %13 {
      %c0_10 = arith.constant 0 : index
      %c0_11 = arith.constant 0 : index
      %14 = vector.load %arg7[%c0_10, %c0_11] : memref<16x16xf32, #tpu.memory_space<vmem>>, vector<16x16xf32>
      %c0_12 = arith.constant 0 : index
      %c0_13 = arith.constant 0 : index
      %15 = vector.load %arg5[%c0_12, %c0_13] : memref<1x16xf32, #tpu.memory_space<vmem>>, vector<1x16xf32>
      %16 = vector.broadcast %15 : vector<1x16xf32> to vector<16x16xf32>
      %17 = arith.addf %14, %16 : vector<16x16xf32>
      %c0_14 = arith.constant 0 : index
      %c0_15 = arith.constant 0 : index
      %18 = vector.load %arg6[%c0_14, %c0_15] : memref<16x16xf32, #tpu.memory_space<vmem>>, vector<16x16xf32>
      tpu.vector_store %arg6[%c0_14, %c0_15], %17 {strides = array<i32>} : memref<16x16xf32, #tpu.memory_space<vmem>>, vector<16x16xf32>,
    } else {
    }
    return
  }
  func.func @transform_0(%arg0: i32, %arg1: i32, %arg2: i32) -> (i32, i32) {
    %c0_i32 = arith.constant 0 : i32
    return %arg0, %arg2 : i32, i32
  }
  func.func @transform_1(%arg0: i32, %arg1: i32, %arg2: i32) -> (i32, i32) {
    %c0_i32 = arith.constant 0 : i32
    return %arg2, %arg1 : i32, i32
  }
  func.func @transform_2(%arg0: i32, %arg1: i32, %arg2: i32) -> (i32, i32) {
    %c0_i32 = arith.constant 0 : i32
    %c0_i32_0 = arith.constant 0 : i32
    return %c0_i32, %arg1 : i32, i32
  }
  func.func @transform_3(%arg0: i32, %arg1: i32, %arg2: i32) -> (i32, i32) {
    %c0_i32 = arith.constant 0 : i32
    return %arg0, %arg1 : i32, i32
  }
}

</mosaic_0001>

<llo_original>
// kernel: decoder_forward.14
$region0: #{decoder_forward.14}
  #allocation0 [shape = 'u32[]', space=smem, size = 0x4, offset = 0x4, fixed_abs, tag = 'smem constant byte address 0x4 - core index']
  #allocation1 [shape = 'u32[144,128]{1,0:T(1,128)}', space=vmem, size = 0x12000, scoped, tag = 'internal scratch']
  %s0 = inlined_call_operand.vmem [shape: f32[2,8,32], index: 0, kind: input, shape index: {}]
  %s1 = inlined_call_operand.vmem [shape: f32[1,8,32], index: 1, kind: input, shape index: {}]
  %s2 = inlined_call_operand.vmem [shape: f32[2,8,32], index: 2, kind: output, shape index: {}]
  %s3 = sld [smem:[#allocation0]]
  $region18: #{decoder_forward.14} parent=0
    _
  %s5 = ssub.s32 1, %s3
  %s6 = scalar_select 0, %s5, %s3
  // Predicated region
  $region2: #{decoder_forward.14} parent=0 // pred_check
    _
  $region3: #{decoder_forward.14} parent=0 // pred_check_branch
    %8 = sbr.rel (0) target = $region5
  $region4: #{decoder_forward.14} parent=0 // pred_region
    _
  $region5: #{decoder_forward.14} parent=0 // pred_fallthru
    _
  // Predicated region
  $region6: #{decoder_forward.14} parent=0 // pred_check
    _
  $region7: #{decoder_forward.14} parent=0 // pred_check_branch
    %10 = sbr.rel (0) target = $region9
  $region8: #{decoder_forward.14} parent=0 // pred_region
    _
  $region9: #{decoder_forward.14} parent=0 // pred_fallthru
    _
  %v11 = vld [vmem:[%s0] sm:$0xff]
  %v12 = vld [vmem:[%s0 + $0x8] sm:$0xff]
  %v13 = vld [vmem:[%s1] sm:$0xff]
  %v14 = vadd.f32 %v11, %v13
  %v15 = vadd.f32 %v12, %v13
  %vm16 = vcmask 261120
  %17 = vst.msk [vmem:[%s2] sm:$0xff] %vm16, %v14
  %18 = vst.msk [vmem:[%s2 + $0x8] sm:$0xff] %vm16, %v15
  // Predicated region
  $region10: #{decoder_forward.14} parent=0 // pred_check
    _
  $region11: #{decoder_forward.14} parent=0 // pred_check_branch
    %20 = sbr.rel (0) target = $region13
  $region12: #{decoder_forward.14} parent=0 // pred_region
    _
  $region13: #{decoder_forward.14} parent=0 // pred_fallthru
    _
  // Predicated region
  $region14: #{decoder_forward.14} parent=0 // pred_check
    _
  $region15: #{decoder_forward.14} parent=0 // pred_check_branch
    %22 = sbr.rel (0) target = $region17
  $region16: #{decoder_forward.14} parent=0 // pred_region
    _
  $region17: #{decoder_forward.14} parent=0 // pred_fallthru
    _

// kernel: decoder_forward.15
$region0: #{decoder_forward.15}
  #allocation0 [shape = 'u32[]', space=smem, size = 0x4, offset = 0x4, fixed_abs, tag = 'smem constant byte address 0x4 - core index']
  #allocation1 [shape = 'u32[144,128]{1,0:T(1,128)}', space=vmem, size = 0x12000, scoped, tag = 'internal scratch']
  #allocation2 [shape = 'f32[16,96]{1,0:T(8,128)}', space=vmem, size = 0x2000, scoped, tag = 'scratch operand']
  %s0 = inlined_call_operand.vmem [shape: f32[16,32], index: 0, kind: input, shape index: {}]
  %s1 = inlined_call_operand.vmem [shape: f32[32,96], index: 1, kind: input, shape index: {}]
  %s2 = inlined_call_operand.vmem [shape: f32[1,96], index: 2, kind: input, shape index: {}]
  %s3 = inlined_call_operand.vmem [shape: f32[16,96], index: 3, kind: output, shape index: {}]
  %s4 = sld [smem:[#allocation0]]
  $region30: #{decoder_forward.15} parent=0
    _
  %s6 = ssub.s32 1, %s4
  %s7 = scalar_select 0, %s6, %s4
  // Predicated region
  $region2: #{decoder_forward.15} parent=0 // pred_check
    _
  $region3: #{decoder_forward.15} parent=0 // pred_check_branch
    %9 = sbr.rel (0) target = $region5
  $region4: #{decoder_forward.15} parent=0 // pred_region
    _
  $region5: #{decoder_forward.15} parent=0 // pred_fallthru
    _
  // Predicated region
  $region6: #{decoder_forward.15} parent=0 // pred_check
    _
  $region7: #{decoder_forward.15} parent=0 // pred_check_branch
    %11 = sbr.rel (0) target = $region9
  $region8: #{decoder_forward.15} parent=0 // pred_region
    _
  $region9: #{decoder_forward.15} parent=0 // pred_fallthru
    _
  // Predicated region
  $region10: #{decoder_forward.15} parent=0 // pred_check
    _
  $region11: #{decoder_forward.15} parent=0 // pred_check_branch
    %13 = sbr.rel (0) target = $region13
  $region12: #{decoder_forward.15} parent=0 // pred_region
    _
  $region13: #{decoder_forward.15} parent=0 // pred_fallthru
    _
  %p15 = scmp.eq.s32.totalorder 0, 0
  // Predicated region
  $region14: #{decoder_forward.15} parent=0 // pred_check
    %p16 = pneg %p15
  $region15: #{decoder_forward.15} parent=0 // pred_check_branch
    %18 = sbr.rel (%p16) target = $region17
  $region16: #{decoder_forward.15} parent=0 // pred_region
    %vm19 = vcmask 785408
    %20 = vst.msk [vmem:[#allocation2] sm:$0xff] %vm19, 0.0
    %21 = vst.msk [vmem:[#allocation2 + $0x8] sm:$0xff] %vm19, 0.0
  $region17: #{decoder_forward.15} parent=0 // pred_fallthru
    _
  %v22 = vld [vmem:[#allocation2] sm:$0xff]
  %v23 = vld [vmem:[#allocation2 + $0x8] sm:$0xff]
  %v24 = vld [vmem:[%s0] sm:$0xff]
  %v25 = vld [vmem:[%s0 + $0x8] sm:$0xff]
  %v26 = vpack.c.bf16 %v25, %v24
  %v27 = vld [vmem:[%s1] sm:$0xff]
  %v28 = vld [vmem:[%s1 + $0x8] sm:$0xff]
  %v29 = vld [vmem:[%s1 + $0x10] sm:$0xff]
  %v30 = vld [vmem:[%s1 + $0x18] sm:$0xff]
  %v31 = vpack.c.bf16 %v28, %v27
  %v32 = vpack.c.bf16 %v30, %v29
  %vm33 = vcmask 261120
  %v35 = vsel %vm33, %v26, 0
  %37 = vmatprep.subr.bf16.mxu0 0
  %38 = vmatpush1.bf16.msra.mxu0 0
  %39 = vmatprep.subr.bf16.mxu0 0
  %40 = vmatpush1.bf16.msra.mxu0 0
  %41 = vmatprep.subr.bf16.mxu0 0
  %42 = vmatpush1.bf16.msra.mxu0 0
  %43 = vmatprep.subr.bf16.mxu0 0
  %44 = vmatpush1.bf16.msra.mxu0 0
  %45 = vmatprep.subr.bf16.mxu0 0
  %46 = vmatpush1.bf16.msra.mxu0 0
  %47 = vmatprep.subr.bf16.mxu0 0
  %48 = vmatpush1.bf16.msra.mxu0 0
  %49 = vmatprep.subr.bf16.mxu0 0
  %50 = vmatpush1.bf16.msra.mxu0 %v32
  %51 = vmatprep.subr.bf16.mxu0 0
  %52 = vmatpush1.bf16.msra.mxu0 %v31
  %53 = vmatprep.subr.bf16.mxu0 0
  %54 = vmatpush2.bf16.msra.mxu0 0
  %55 = vmatprep.subr.bf16.mxu0 0
  %56 = vmatpush2.bf16.msra.mxu0 0
  %57 = vmatprep.subr.bf16.mxu0 0
  %58 = vmatpush2.bf16.msra.mxu0 0
  %59 = vmatprep.subr.bf16.mxu0 0
  %60 = vmatpush2.bf16.msra.mxu0 0
  %61 = vmatprep.subr.bf16.mxu0 0
  %62 = vmatpush2.bf16.msra.mxu0 0
  %63 = vmatprep.subr.bf16.mxu0 0
  %64 = vmatpush2.bf16.msra.mxu0 0
  %65 = vmatprep.subr.bf16.mxu0 0
  %66 = vmatpush2.bf16.msra.mxu0 0
  %67 = vmatprep.subr.bf16.mxu0 0
  %68 = vmatpush2.bf16.msra.mxu0 0
  %69 = vmatprep.mubr.bf16.mxu0 0
  %70 = vmatmul.mubr.bf16.gmra.mxu0 %v35
  %v71 = vpop.f32.mrf.mxu0
  %v72 = vadd.f32 0.0, %v71
  %v73 = vpop.f32.mrf.mxu0
  %v74 = vpop.f32.mrf.mxu0
  %v75 = vadd.f32 0.0, %v74
  %v76 = vpop.f32.mrf.mxu0
  %77 = vdwg.mxu0
  %v78 = vadd.f32 %v22, %v72
  %v79 = vadd.f32 %v23, %v75
  %vm80 = vcmask 785408
  %81 = vst.msk [vmem:[#allocation2] sm:$0xff] %vm80, %v78
  %82 = vst.msk [vmem:[#allocation2 + $0x8] sm:$0xff] %vm80, %v79
  // Predicated region
  $region18: #{decoder_forward.15} parent=0 // pred_check
    %p83 = pneg %p15
  $region19: #{decoder_forward.15} parent=0 // pred_check_branch
    %85 = sbr.rel (%p83) target = $region21
  $region20: #{decoder_forward.15} parent=0 // pred_region
    %v86 = vld [vmem:[#allocation2] sm:$0xff]
    %v87 = vld [vmem:[#allocation2 + $0x8] sm:$0xff]
    %v88 = vld [vmem:[%s2] sm:$0x1]
    %v90 = vlaneseq
    %v91 = vshrl.u32 %v90, 7
    %v92 = vsub.s32 0, %v91
    %v93 = vrot.slane %v88, %v92
    %v95 = vadd.f32 %v86, %v93
    %v96 = vadd.f32 %v87, %v93
    %97 = vst.msk [vmem:[%s3] sm:$0xff] %vm80, %v95
    %98 = vst.msk [vmem:[%s3 + $0x8] sm:$0xff] %vm80, %v96
  $region21: #{decoder_forward.15} parent=0 // pred_fallthru
    _
  // Predicated region
  $region22: #{decoder_forward.15} parent=0 // pred_check
    _
  $region23: #{decoder_forward.15} parent=0 // pred_check_branch
    %100 = sbr.rel (0) target = $region25
  $region24: #{decoder_forward.15} parent=0 // pred_region
    _
  $region25: #{decoder_forward.15} parent=0 // pred_fallthru
    _
  // Predicated region
  $region26: #{decoder_forward.15} parent=0 // pred_check
    _
  $region27: #{decoder_forward.15} parent=0 // pred_check_branch
    %102 = sbr.rel (0) target = $region29
  $region28: #{decoder_forward.15} parent=0 // pred_region
    _
  $region29: #{decoder_forward.15} parent=0 // pred_fallthru
    _

// kernel: decoder_forward.18
$region0: #{decoder_forward.18}
  #allocation0 [shape = 'u32[]', space=smem, size = 0x4, offset = 0x4, fixed_abs, tag = 'smem constant byte address 0x4 - core index']
  #allocation1 [shape = 'u32[144,128]{1,0:T(1,128)}', space=vmem, size = 0x12000, scoped, tag = 'internal scratch']
  #allocation2 [shape = 'f32[16,32]{1,0:T(8,128)}', space=vmem, size = 0x2000, scoped, tag = 'scratch operand']
  %s0 = inlined_call_operand.vmem [shape: f32[16,32], index: 0, kind: input, shape index: {}]
  %s1 = inlined_call_operand.vmem [shape: f32[32,32], index: 1, kind: input, shape index: {}]
  %s2 = inlined_call_operand.vmem [shape: f32[1,32], index: 2, kind: input, shape index: {}]
  %s3 = inlined_call_operand.vmem [shape: f32[16,32], index: 3, kind: output, shape index: {}]
  %s4 = sld [smem:[#allocation0]]
  $region30: #{decoder_forward.18} parent=0
    _
  %s6 = ssub.s32 1, %s4
  %s7 = scalar_select 0, %s6, %s4
  // Predicated region
  $region2: #{decoder_forward.18} parent=0 // pred_check
    _
  $region3: #{decoder_forward.18} parent=0 // pred_check_branch
    %9 = sbr.rel (0) target = $region5
  $region4: #{decoder_forward.18} parent=0 // pred_region
    _
  $region5: #{decoder_forward.18} parent=0 // pred_fallthru
    _
  // Predicated region
  $region6: #{decoder_forward.18} parent=0 // pred_check
    _
  $region7: #{decoder_forward.18} parent=0 // pred_check_branch
    %11 = sbr.rel (0) target = $region9
  $region8: #{decoder_forward.18} parent=0 // pred_region
    _
  $region9: #{decoder_forward.18} parent=0 // pred_fallthru
    _
  // Predicated region
  $region10: #{decoder_forward.18} parent=0 // pred_check
    _
  $region11: #{decoder_forward.18} parent=0 // pred_check_branch
    %13 = sbr.rel (0) target = $region13
  $region12: #{decoder_forward.18} parent=0 // pred_region
    _
  $region13: #{decoder_forward.18} parent=0 // pred_fallthru
    _
  %p15 = scmp.eq.s32.totalorder 0, 0
  // Predicated region
  $region14: #{decoder_forward.18} parent=0 // pred_check
    %p16 = pneg %p15
  $region15: #{decoder_forward.18} parent=0 // pred_check_branch
    %18 = sbr.rel (%p16) target = $region17
  $region16: #{decoder_forward.18} parent=0 // pred_region
    %vm19 = vcmask 261120
    %20 = vst.msk [vmem:[#allocation2] sm:$0xff] %vm19, 0.0
    %21 = vst.msk [vmem:[#allocation2 + $0x8] sm:$0xff] %vm19, 0.0
  $region17: #{decoder_forward.18} parent=0 // pred_fallthru
    _
  %v22 = vld [vmem:[#allocation2] sm:$0xff]
  %v23 = vld [vmem:[#allocation2 + $0x8] sm:$0xff]
  %v24 = vld [vmem:[%s0] sm:$0xff]
  %v25 = vld [vmem:[%s0 + $0x8] sm:$0xff]
  %v26 = vpack.c.bf16 %v25, %v24
  %v27 = vld [vmem:[%s1] sm:$0xff]
  %v28 = vld [vmem:[%s1 + $0x8] sm:$0xff]
  %v29 = vld [vmem:[%s1 + $0x10] sm:$0xff]
  %v30 = vld [vmem:[%s1 + $0x18] sm:$0xff]
  %v31 = vpack.c.bf16 %v28, %v27
  %v32 = vpack.c.bf16 %v30, %v29
  %vm33 = vcmask 261120
  %v35 = vsel %vm33, %v26, 0
  %37 = vmatprep.subr.bf16.mxu0 0
  %38 = vmatpush1.bf16.msra.mxu0 0
  %39 = vmatprep.subr.bf16.mxu0 0
  %40 = vmatpush1.bf16.msra.mxu0 0
  %41 = vmatprep.subr.bf16.mxu0 0
  %42 = vmatpush1.bf16.msra.mxu0 0
  %43 = vmatprep.subr.bf16.mxu0 0
  %44 = vmatpush1.bf16.msra.mxu0 0
  %45 = vmatprep.subr.bf16.mxu0 0
  %46 = vmatpush1.bf16.msra.mxu0 0
  %47 = vmatprep.subr.bf16.mxu0 0
  %48 = vmatpush1.bf16.msra.mxu0 0
  %49 = vmatprep.subr.bf16.mxu0 0
  %50 = vmatpush1.bf16.msra.mxu0 %v32
  %51 = vmatprep.subr.bf16.mxu0 0
  %52 = vmatpush1.bf16.msra.mxu0 %v31
  %53 = vmatprep.subr.bf16.mxu0 0
  %54 = vmatpush2.bf16.msra.mxu0 0
  %55 = vmatprep.subr.bf16.mxu0 0
  %56 = vmatpush2.bf16.msra.mxu0 0
  %57 = vmatprep.subr.bf16.mxu0 0
  %58 = vmatpush2.bf16.msra.mxu0 0
  %59 = vmatprep.subr.bf16.mxu0 0
  %60 = vmatpush2.bf16.msra.mxu0 0
  %61 = vmatprep.subr.bf16.mxu0 0
  %62 = vmatpush2.bf16.msra.mxu0 0
  %63 = vmatprep.subr.bf16.mxu0 0
  %64 = vmatpush2.bf16.msra.mxu0 0
  %65 = vmatprep.subr.bf16.mxu0 0
  %66 = vmatpush2.bf16.msra.mxu0 0
  %67 = vmatprep.subr.bf16.mxu0 0
  %68 = vmatpush2.bf16.msra.mxu0 0
  %69 = vmatprep.mubr.bf16.mxu0 0
  %70 = vmatmul.mubr.bf16.gmra.mxu0 %v35
  %v71 = vpop.f32.mrf.mxu0
  %v72 = vadd.f32 0.0, %v71
  %v73 = vpop.f32.mrf.mxu0
  %v74 = vpop.f32.mrf.mxu0
  %v75 = vadd.f32 0.0, %v74
  %v76 = vpop.f32.mrf.mxu0
  %77 = vdwg.mxu0
  %v78 = vadd.f32 %v22, %v72
  %v79 = vadd.f32 %v23, %v75
  %80 = vst.msk [vmem:[#allocation2] sm:$0xff] %vm33, %v78
  %81 = vst.msk [vmem:[#allocation2 + $0x8] sm:$0xff] %vm33, %v79
  // Predicated region
  $region18: #{decoder_forward.18} parent=0 // pred_check
    %p82 = pneg %p15
  $region19: #{decoder_forward.18} parent=0 // pred_check_branch
    %84 = sbr.rel (%p82) target = $region21
  $region20: #{decoder_forward.18} parent=0 // pred_region
    %v85 = vld [vmem:[#allocation2] sm:$0xff]
    %v86 = vld [vmem:[#allocation2 + $0x8] sm:$0xff]
    %v87 = vld [vmem:[%s2] sm:$0x1]
    %v89 = vlaneseq
    %v90 = vshrl.u32 %v89, 7
    %v91 = vsub.s32 0, %v90
    %v92 = vrot.slane %v87, %v91
    %v94 = vadd.f32 %v85, %v92
    %v95 = vadd.f32 %v86, %v92
    %96 = vst.msk [vmem:[%s3] sm:$0xff] %vm33, %v94
    %97 = vst.msk [vmem:[%s3 + $0x8] sm:$0xff] %vm33, %v95
  $region21: #{decoder_forward.18} parent=0 // pred_fallthru
    _
  // Predicated region
  $region22: #{decoder_forward.18} parent=0 // pred_check
    _
  $region23: #{decoder_forward.18} parent=0 // pred_check_branch
    %99 = sbr.rel (0) target = $region25
  $region24: #{decoder_forward.18} parent=0 // pred_region
    _
  $region25: #{decoder_forward.18} parent=0 // pred_fallthru
    _
  // Predicated region
  $region26: #{decoder_forward.18} parent=0 // pred_check
    _
  $region27: #{decoder_forward.18} parent=0 // pred_check_branch
    %101 = sbr.rel (0) target = $region29
  $region28: #{decoder_forward.18} parent=0 // pred_region
    _
  $region29: #{decoder_forward.18} parent=0 // pred_fallthru
    _

// kernel: decoder_forward.16
$region0: #{decoder_forward.16}
  #allocation0 [shape = 'u32[]', space=smem, size = 0x4, offset = 0x4, fixed_abs, tag = 'smem constant byte address 0x4 - core index']
  #allocation1 [shape = 'u32[144,128]{1,0:T(1,128)}', space=vmem, size = 0x12000, scoped, tag = 'internal scratch']
  %s0 = inlined_call_operand.vmem [shape: f32[2,8,96], index: 0, kind: input, shape index: {}]
  %s1 = inlined_call_operand.vmem [shape: f32[2,8,32], index: 1, kind: input, shape index: {}]
  %s2 = inlined_call_operand.vmem [shape: f32[8,8], index: 2, kind: input, shape index: {}]
  %s3 = inlined_call_operand.vmem [shape: f32[32,32], index: 3, kind: input, shape index: {}]
  %s4 = inlined_call_operand.vmem [shape: f32[1,32], index: 4, kind: input, shape index: {}]
  %s5 = inlined_call_operand.vmem [shape: f32[1,32], index: 5, kind: input, shape index: {}]
  %s6 = inlined_call_operand.vmem [shape: f32[1,32], index: 6, kind: input, shape index: {}]
  %s7 = inlined_call_operand.vmem [shape: f32[2,8,32], index: 7, kind: output, shape index: {}]
  %s8 = sld [smem:[#allocation0]]
  $region61: #{decoder_forward.16} parent=0
    _
  %s10 = ssub.s32 1, %s8
  %s11 = scalar_select 0, %s10, %s8
  loop: start=0, step=1, limit=4
  $region2: #{decoder_forward.16} parent=0 // loop_pre_header
    _
  $region3: #{decoder_forward.16} parent=0 // loop_header
    %s13 = sphi 0, %s17
    %p14 = scmp.ge.s32.totalorder %s13, 4
    %s23 = sphi 0, %s25
    %s26 = sphi 0, %s23
    %s27 = sphi 0, %s26
    %s43 = sphi 0, %s27
    %s49 = sphi 0, %s51
    %s52 = sphi 0, %s49
    %s53 = sphi 0, %s52
    %s69 = sphi 0, %s53
    %s73 = sphi 0, %s73
    %s75 = sphi 0, %s73
    %s76 = sphi 0, %s75
    %s90 = sphi 0, %s76
    %s94 = sphi 0, %s94
    %s96 = sphi 0, %s94
    %s97 = sphi 0, %s96
    %s111 = sphi 0, %s97
    %s115 = sphi 0, %s115
    %s117 = sphi 0, %s115
    %s118 = sphi 0, %s117
    %s132 = sphi 0, %s118
    %s136 = sphi 0, %s136
    %s138 = sphi 0, %s136
    %s139 = sphi 0, %s138
    %s153 = sphi 0, %s139
    %s157 = sphi 0, %s157
    %s159 = sphi 0, %s157
    %s160 = sphi 0, %s159
    %s174 = sphi 0, %s160
    %s180 = sphi 0, %s182
    %s183 = sphi 0, %s180
    %s184 = sphi 0, %s183
    %s200 = sphi 0, %s184
  $region4: #{decoder_forward.16} parent=0 // loop_header_branch
    %16 = sbr.rel (%p14) target = $region8
  $region5: #{decoder_forward.16} parent=0 // loop_body
    %s18 = ssub.s32 %s13, 1
    %s19 = ssub.s32 %s13, 2
    %s20 = sadd.s32 %s13, 1
    %s21 = ssub.s32 %s13, %s20
    %p22 = scmp.eq.s32.totalorder %s21, 0
    %s24 = sadd.s32 %s23, 1
    %s25 = scalar_select %p22, %s23, %s24
    %p28 = pneg %p22
    %p29 = scmp.eq.s32.totalorder %s13, 1
    %p30 = por %p28, %p29
    %p31 = scmp.ne.s32.totalorder %s23, %s26
    %p32 = scmp.eq.s32.totalorder %s13, 0
    %p33 = por %p31, %p32
    %p34 = scmp.ne.s32.totalorder %s23, %s26
    %p35 = scmp.eq.s32.totalorder %s18, 1
    %p36 = por %p34, %p35
    %p37 = scmp.ne.s32.totalorder %s26, %s27
    %p38 = scmp.eq.s32.totalorder %s18, 0
    %p39 = por %p37, %p38
    %p40 = scmp.ne.s32.totalorder %s26, %s27
    %p41 = scmp.eq.s32.totalorder %s19, 1
    %p42 = por %p40, %p41
    %p44 = scmp.ne.s32.totalorder %s27, %s43
    %p45 = scmp.eq.s32.totalorder %s19, 0
    %p46 = por %p44, %p45
    %s47 = ssub.s32 %s13, %s20
    %p48 = scmp.eq.s32.totalorder %s47, 0
    %s50 = sadd.s32 %s49, 1
    %s51 = scalar_select %p48, %s49, %s50
    %p54 = pneg %p48
    %p55 = scmp.eq.s32.totalorder %s13, 1
    %p56 = por %p54, %p55
    %p57 = scmp.ne.s32.totalorder %s49, %s52
    %p58 = scmp.eq.s32.totalorder %s13, 0
    %p59 = por %p57, %p58
    %p60 = scmp.ne.s32.totalorder %s49, %s52
    %p61 = scmp.eq.s32.totalorder %s18, 1
    %p62 = por %p60, %p61
    %p63 = scmp.ne.s32.totalorder %s52, %s53
    %p64 = scmp.eq.s32.totalorder %s18, 0
    %p65 = por %p63, %p64
    %p66 = scmp.ne.s32.totalorder %s52, %s53
    %p67 = scmp.eq.s32.totalorder %s19, 1
    %p68 = por %p66, %p67
    %p70 = scmp.ne.s32.totalorder %s53, %s69
    %p71 = scmp.eq.s32.totalorder %s19, 0
    %p72 = por %p70, %p71
    %s74 = sadd.s32 %s73, 1
    %p77 = scmp.eq.s32.totalorder %s13, 1
    %p78 = scmp.ne.s32.totalorder %s73, %s75
    %p79 = scmp.eq.s32.totalorder %s13, 0
    %p80 = por %p78, %p79
    %p81 = scmp.ne.s32.totalorder %s73, %s75
    %p82 = scmp.eq.s32.totalorder %s18, 1
    %p83 = por %p81, %p82
    %p84 = scmp.ne.s32.totalorder %s75, %s76
    %p85 = scmp.eq.s32.totalorder %s18, 0
    %p86 = por %p84, %p85
    %p87 = scmp.ne.s32.totalorder %s75, %s76
    %p88 = scmp.eq.s32.totalorder %s19, 1
    %p89 = por %p87, %p88
    %p91 = scmp.ne.s32.totalorder %s76, %s90
    %p92 = scmp.eq.s32.totalorder %s19, 0
    %p93 = por %p91, %p92
    %s95 = sadd.s32 %s94, 1
    %p98 = scmp.eq.s32.totalorder %s13, 1
    %p99 = scmp.ne.s32.totalorder %s94, %s96
    %p100 = scmp.eq.s32.totalorder %s13, 0
    %p101 = por %p99, %p100
    %p102 = scmp.ne.s32.totalorder %s94, %s96
    %p103 = scmp.eq.s32.totalorder %s18, 1
    %p104 = por %p102, %p103
    %p105 = scmp.ne.s32.totalorder %s96, %s97
    %p106 = scmp.eq.s32.totalorder %s18, 0
    %p107 = por %p105, %p106
    %p108 = scmp.ne.s32.totalorder %s96, %s97
    %p109 = scmp.eq.s32.totalorder %s19, 1
    %p110 = por %p108, %p109
    %p112 = scmp.ne.s32.totalorder %s97, %s111
    %p113 = scmp.eq.s32.totalorder %s19, 0
    %p114 = por %p112, %p113
    %s116 = sadd.s32 %s115, 1
    %p119 = scmp.eq.s32.totalorder %s13, 1
    %p120 = scmp.ne.s32.totalorder %s115, %s117
    %p121 = scmp.eq.s32.totalorder %s13, 0
    %p122 = por %p120, %p121
    %p123 = scmp.ne.s32.totalorder %s115, %s117
    %p124 = scmp.eq.s32.totalorder %s18, 1
    %p125 = por %p123, %p124
    %p126 = scmp.ne.s32.totalorder %s117, %s118
    %p127 = scmp.eq.s32.totalorder %s18, 0
    %p128 = por %p126, %p127
    %p129 = scmp.ne.s32.totalorder %s117, %s118
    %p130 = scmp.eq.s32.totalorder %s19, 1
    %p131 = por %p129, %p130
    %p133 = scmp.ne.s32.totalorder %s118, %s132
    %p134 = scmp.eq.s32.totalorder %s19, 0
    %p135 = por %p133, %p134
    %s137 = sadd.s32 %s136, 1
    %p140 = scmp.eq.s32.totalorder %s13, 1
    %p141 = scmp.ne.s32.totalorder %s136, %s138
    %p142 = scmp.eq.s32.totalorder %s13, 0
    %p143 = por %p141, %p142
    %p144 = scmp.ne.s32.totalorder %s136, %s138
    %p145 = scmp.eq.s32.totalorder %s18, 1
    %p146 = por %p144, %p145
    %p147 = scmp.ne.s32.totalorder %s138, %s139
    %p148 = scmp.eq.s32.totalorder %s18, 0
    %p149 = por %p147, %p148
    %p150 = scmp.ne.s32.totalorder %s138, %s139
    %p151 = scmp.eq.s32.totalorder %s19, 1
    %p152 = por %p150, %p151
    %p154 = scmp.ne.s32.totalorder %s139, %s153
    %p155 = scmp.eq.s32.totalorder %s19, 0
    %p156 = por %p154, %p155
    %s158 = sadd.s32 %s157, 1
    %p161 = scmp.eq.s32.totalorder %s13, 1
    %p162 = scmp.ne.s32.totalorder %s157, %s159
    %p163 = scmp.eq.s32.totalorder %s13, 0
    %p164 = por %p162, %p163
    %p165 = scmp.ne.s32.totalorder %s157, %s159
    %p166 = scmp.eq.s32.totalorder %s18, 1
    %p167 = por %p165, %p166
    %p168 = scmp.ne.s32.totalorder %s159, %s160
    %p169 = scmp.eq.s32.totalorder %s18, 0
    %p170 = por %p168, %p169
    %p171 = scmp.ne.s32.totalorder %s159, %s160
    %p172 = scmp.eq.s32.totalorder %s19, 1
    %p173 = por %p171, %p172
    %p175 = scmp.ne.s32.totalorder %s160, %s174
    %p176 = scmp.eq.s32.totalorder %s19, 0
    %p177 = por %p175, %p176
    %s178 = ssub.s32 %s13, %s20
    %p179 = scmp.eq.s32.totalorder %s178, 0
    %s181 = sadd.s32 %s180, 1
    %s182 = scalar_select %p179, %s180, %s181
    %p185 = pneg %p179
    %p186 = scmp.eq.s32.totalorder %s13, 1
    %p187 = por %p185, %p186
    %p188 = scmp.ne.s32.totalorder %s180, %s183
    %p189 = scmp.eq.s32.totalorder %s13, 0
    %p190 = por %p188, %p189
    %p191 = scmp.ne.s32.totalorder %s180, %s183
    %p192 = scmp.eq.s32.totalorder %s18, 1
    %p193 = por %p191, %p192
    %p194 = scmp.ne.s32.totalorder %s183, %s184
    %p195 = scmp.eq.s32.totalorder %s18, 0
    %p196 = por %p194, %p195
    %p197 = scmp.ne.s32.totalorder %s183, %s184
    %p198 = scmp.eq.s32.totalorder %s19, 1
    %p199 = por %p197, %p198
    %p201 = scmp.ne.s32.totalorder %s184, %s200
    %p202 = scmp.eq.s32.totalorder %s19, 0
    %p203 = por %p201, %p202
    %p204 = scmp.le.s32.totalorder 1, %s13
    %p205 = scmp.lt.s32.totalorder %s13, 3
    %p206 = pnand %p204, %p205
    %p207 = pneg %p206
    // Predicated region
    $region9: #{decoder_forward.16} parent=5 // pred_check
      _
    $region10: #{decoder_forward.16} parent=5 // pred_check_branch
      %209 = sbr.rel (%p206) target = $region12
    $region11: #{decoder_forward.16} parent=5 // pred_region
      %s210 = ssub.s32 %s13, 1
      // Predicated region
      $region13: #{decoder_forward.16} parent=11 // pred_check
        %p211 = pneg %p86
      $region14: #{decoder_forward.16} parent=11 // pred_check_branch
        %213 = sbr.rel (%p211) target = $region16
      $region15: #{decoder_forward.16} parent=11 // pred_region
        _
      $region16: #{decoder_forward.16} parent=11 // pred_fallthru
        _
      // Predicated region
      $region17: #{decoder_forward.16} parent=11 // pred_check
        %p214 = pneg %p107
      $region18: #{decoder_forward.16} parent=11 // pred_check_branch
        %216 = sbr.rel (%p214) target = $region20
      $region19: #{decoder_forward.16} parent=11 // pred_region
        _
      $region20: #{decoder_forward.16} parent=11 // pred_fallthru
        _
      // Predicated region
      $region21: #{decoder_forward.16} parent=11 // pred_check
        %p217 = pneg %p128
      $region22: #{decoder_forward.16} parent=11 // pred_check_branch
        %219 = sbr.rel (%p217) target = $region24
      $region23: #{decoder_forward.16} parent=11 // pred_region
        _
      $region24: #{decoder_forward.16} parent=11 // pred_fallthru
        _
      // Predicated region
      $region25: #{decoder_forward.16} parent=11 // pred_check
        %p220 = pneg %p149
      $region26: #{decoder_forward.16} parent=11 // pred_check_branch
        %222 = sbr.rel (%p220) target = $region28
      $region27: #{decoder_forward.16} parent=11 // pred_region
        _
      $region28: #{decoder_forward.16} parent=11 // pred_fallthru
        _
      // Predicated region
      $region29: #{decoder_forward.16} parent=11 // pred_check
        %p223 = pneg %p170
      $region30: #{decoder_forward.16} parent=11 // pred_check_branch
        %225 = sbr.rel (%p223) target = $region32
      $region31: #{decoder_forward.16} parent=11 // pred_region
        _
      $region32: #{decoder_forward.16} parent=11 // pred_fallthru
        _
    $region12: #{decoder_forward.16} parent=5 // pred_fallthru
      _
    %p226 = scmp.lt.s32.totalorder %s13, 2
    // Predicated region
    $region33: #{decoder_forward.16} parent=5 // pred_check
      %p227 = pneg %p226
    $region34: #{decoder_forward.16} parent=5 // pred_check_branch
      %229 = sbr.rel (%p227) target = $region36
    $region35: #{decoder_forward.16} parent=5 // pred_region
      // Predicated region
      $region37: #{decoder_forward.16} parent=35 // pred_check
        %p230 = pneg %p33
      $region38: #{decoder_forward.16} parent=35 // pred_check_branch
        %232 = sbr.rel (%p230) target = $region40
      $region39: #{decoder_forward.16} parent=35 // pred_region
        %p233 = scmp.lt.s32.totalorder %s13, 1
        %s234 = scalar_select %p233, %s13, 1
        %s235 = smul.addr %s234, 8
        %s236 = scalar_lea.vmem %s0, %s235
      $region40: #{decoder_forward.16} parent=35 // pred_fallthru
        _
      // Predicated region
      $region41: #{decoder_forward.16} parent=35 // pred_check
        %p237 = pneg %p59
      $region42: #{decoder_forward.16} parent=35 // pred_check_branch
        %239 = sbr.rel (%p237) target = $region44
      $region43: #{decoder_forward.16} parent=35 // pred_region
        %p240 = scmp.lt.s32.totalorder %s13, 1
        %s241 = scalar_select %p240, %s13, 1
        %s242 = smul.addr %s241, 8
        %s243 = scalar_lea.vmem %s1, %s242
      $region44: #{decoder_forward.16} parent=35 // pred_fallthru
        _
    $region36: #{decoder_forward.16} parent=5 // pred_fallthru
      _
    %p244 = scmp.le.s32.totalorder 1, %s13
    %p245 = scmp.lt.s32.totalorder %s13, 3
    %p246 = pnand %p244, %p245
    %p247 = pneg %p246
    // Predicated region
    $region45: #{decoder_forward.16} parent=5 // pred_check
      _
    $region46: #{decoder_forward.16} parent=5 // pred_check_branch
      %249 = sbr.rel (%p246) target = $region48
    $region47: #{decoder_forward.16} parent=5 // pred_region
      %s250 = ssub.s32 %s13, 1
      %p251 = scmp.lt.s32.totalorder %s18, 1
      %s252 = scalar_select %p251, %s18, 1
      %s253 = smul.addr %s252, 8
      %s254 = scalar_lea.vmem %s0, %s253
      %p255 = pneg %p39
      %p256 = pneg %p36
      %p257 = scmp.lt.s32.totalorder %s18, 1
      %s258 = scalar_select %p257, %s18, 1
      %s259 = smul.addr %s258, 8
      %s260 = scalar_lea.vmem %s1, %s259
      %p261 = pneg %p65
      %p262 = pneg %p62
      %p263 = pneg %p86
      %p264 = pneg %p83
      %p265 = pneg %p107
      %p266 = pneg %p104
      %p267 = pneg %p128
      %p268 = pneg %p125
      %p269 = pneg %p149
      %p270 = pneg %p146
      %p271 = pneg %p170
      %p272 = pneg %p167
      %p273 = pneg %p196
      %p274 = pneg %p193
      %p275 = scmp.lt.s32.totalorder %s18, 1
      %s276 = scalar_select %p275, %s18, 1
      %s277 = smul.addr %s276, 8
      %s278 = scalar_lea.vmem %s7, %s277
      %p279 = scmp.lt.s32.totalorder %s18, 1
      %s280 = scalar_select %p279, %s18, 1
      %s281 = smul.addr %s280, 8
      %s282 = scalar_lea.vmem %s0, %s281
      %p283 = scmp.lt.s32.totalorder %s18, 1
      %s284 = scalar_select %p283, %s18, 1
      %s285 = smul.addr %s284, 8
      %s286 = scalar_lea.vmem %s1, %s285
      %p287 = scmp.lt.s32.totalorder %s18, 1
      %s288 = scalar_select %p287, %s18, 1
      %s289 = smul.addr %s288, 8
      %s290 = scalar_lea.vmem %s7, %s289
      %v292 = vld [vmem:[%s282] sm:$0xff]
      %v293 = vld [vmem:[%s2] sm:$0xff]
      %v294 = vld [vmem:[%s3] sm:$0xff]
      %v295 = vld [vmem:[%s3 + $0x8] sm:$0xff]
      %v296 = vld [vmem:[%s3 + $0x10] sm:$0xff]
      %v297 = vld [vmem:[%s3 + $0x18] sm:$0xff]
      %v298 = vpack.c.bf16 %v292, %v292
      %300 = vrot.lane.b32.xlu0 %v298, 96
      %v301 = vpop.permute.xlu0 %300
      %vm302 = vcmask 64512
      %v304 = vsel %vm302, %v298, 0
      %v307 = vsel %vm302, %v301, 0
      %309 = vmatprep.subr.bf16.mxu0 0
      %310 = vmatpush1.bf16.xpose.msra.mxu0 0
      %311 = vmatprep.subr.bf16.mxu0 0
      %312 = vmatpush1.bf16.xpose.msra.mxu0 0
      %313 = vmatprep.subr.bf16.mxu0 0
      %314 = vmatpush1.bf16.xpose.msra.mxu0 0
      %315 = vmatprep.subr.bf16.mxu0 0
      %316 = vmatpush1.bf16.xpose.msra.mxu0 0
      %317 = vmatprep.subr.bf16.mxu0 0
      %318 = vmatpush1.bf16.xpose.msra.mxu0 0
      %319 = vmatprep.subr.bf16.mxu0 0
      %320 = vmatpush1.bf16.xpose.msra.mxu0 0
      %321 = vmatprep.subr.bf16.mxu0 0
      %322 = vmatpush1.bf16.xpose.msra.mxu0 0
      %323 = vmatprep.subr.bf16.mxu0 0
      %324 = vmatpush1.bf16.xpose.msra.mxu0 %v307
      %325 = vmatprep.subr.bf16.mxu0 0
      %326 = vmatpush2.bf16.xpose.msra.mxu0 0
      %327 = vmatprep.subr.bf16.mxu0 0
      %328 = vmatpush2.bf16.xpose.msra.mxu0 0
      %329 = vmatprep.subr.bf16.mxu0 0
      %330 = vmatpush2.bf16.xpose.msra.mxu0 0
      %331 = vmatprep.subr.bf16.mxu0 0
      %332 = vmatpush2.bf16.xpose.msra.mxu0 0
      %333 = vmatprep.subr.bf16.mxu0 0
      %334 = vmatpush2.bf16.xpose.msra.mxu0 0
      %335 = vmatprep.subr.bf16.mxu0 0
      %336 = vmatpush2.bf16.xpose.msra.mxu0 0
      %337 = vmatprep.subr.bf16.mxu0 0
      %338 = vmatpush2.bf16.xpose.msra.mxu0 0
      %339 = vmatprep.subr.bf16.mxu0 0
      %340 = vmatpush2.bf16.xpose.msra.mxu0 0
      %341 = vmatprep.mubr.bf16.mxu0 0
      %342 = vmatmul.mubr.bf16.gmra.mxu0 %v304
      %v343 = vpop.f32.mrf.mxu0
      %v344 = vadd.f32 0.0, %v343
      %v345 = vpop.f32.mrf.mxu0
      %v346 = vpop.f32.mrf.mxu0
      %v347 = vpop.f32.mrf.mxu0
      %348 = vdwg.mxu0
      %v349 = vmul.f32 %v344, 0.35355338
      %v350 = vadd.f32 %v349, %v293
      %v351 = vsel %vm302, %v350, -inf
      %352 = vmax.xlane.f32.xlu0 %v351
      %v353 = vpop.xlane.xlu0 %352
      %v354 = vsub.f32 %v350, %v353
      %v355 = vmul.f32 %v354, 1.442695
      %v356 = vpow.pop %v355
      %v357 = vsel %vm302, %v356, 0.0
      %358 = vadd.xlane.f32.xlu0 %v357
      %v359 = vpop.xlane.xlu0 %358
      %v360 = vrcp.pop %v359
      %v361 = vmul.f32 %v356, %v360
      %v362 = vpack.c.bf16 %v361, %v361
      %363 = vrot.lane.b32.xlu0 %v298, 64
      %v364 = vpop.permute.xlu0 %363
      %v366 = vsel %vm302, %v362, 0
      %vm368 = vcmask 1043456
      %v370 = vsel %vm368, %v364, 0
      %372 = vmatprep.subr.bf16.mxu0 0
      %373 = vmatpush1.bf16.msra.mxu0 0
      %374 = vmatprep.subr.bf16.mxu0 0
      %375 = vmatpush1.bf16.msra.mxu0 0
      %376 = vmatprep.subr.bf16.mxu0 0
      %377 = vmatpush1.bf16.msra.mxu0 0
      %378 = vmatprep.subr.bf16.mxu0 0
      %379 = vmatpush1.bf16.msra.mxu0 0
      %380 = vmatprep.subr.bf16.mxu0 0
      %381 = vmatpush1.bf16.msra.mxu0 0
      %382 = vmatprep.subr.bf16.mxu0 0
      %383 = vmatpush1.bf16.msra.mxu0 0
      %384 = vmatprep.subr.bf16.mxu0 0
      %385 = vmatpush1.bf16.msra.mxu0 0
      %386 = vmatprep.subr.bf16.mxu0 0
      %387 = vmatpush1.bf16.msra.mxu0 %v370
      %388 = vmatprep.subr.bf16.mxu0 0
      %389 = vmatpush2.bf16.msra.mxu0 0
      %390 = vmatprep.subr.bf16.mxu0 0
      %391 = vmatpush2.bf16.msra.mxu0 0
      %392 = vmatprep.subr.bf16.mxu0 0
      %393 = vmatpush2.bf16.msra.mxu0 0
      %394 = vmatprep.subr.bf16.mxu0 0
      %395 = vmatpush2.bf16.msra.mxu0 0
      %396 = vmatprep.subr.bf16.mxu0 0
      %397 = vmatpush2.bf16.msra.mxu0 0
      %398 = vmatprep.subr.bf16.mxu0 0
      %399 = vmatpush2.bf16.msra.mxu0 0
      %400 = vmatprep.subr.bf16.mxu0 0
      %401 = vmatpush2.bf16.msra.mxu0 0
      %402 = vmatprep.subr.bf16.mxu0 0
      %403 = vmatpush2.bf16.msra.mxu0 0
      %404 = vmatprep.mubr.bf16.mxu0 0
      %405 = vmatmul.mubr.bf16.gmra.mxu0 %v366
      %v406 = vpop.f32.mrf.mxu0
      %v407 = vadd.f32 0.0, %v406
      %v408 = vpop.f32.mrf.mxu0
      %v409 = vpop.f32.mrf.mxu0
      %v410 = vpop.f32.mrf.mxu0
      %411 = vdwg.mxu0
      %v412 = vpack.c.bf16 %v407, %v407
      %v413 = vpack.c.bf16 %v294, %v294
      %414 = vrot.lane.b32.xlu0 %v298, 120
      %v415 = vpop.permute.xlu0 %414
      %416 = vrot.lane.b32.xlu0 %v298, 88
      %v417 = vpop.permute.xlu0 %416
      %v419 = vsel %vm302, %v415, 0
      %v422 = vsel %vm302, %v417, 0
      %424 = vmatprep.subr.bf16.mxu0 0
      %425 = vmatpush1.bf16.xpose.msra.mxu0 0
      %426 = vmatprep.subr.bf16.mxu0 0
      %427 = vmatpush1.bf16.xpose.msra.mxu0 0
      %428 = vmatprep.subr.bf16.mxu0 0
      %429 = vmatpush1.bf16.xpose.msra.mxu0 0
      %430 = vmatprep.subr.bf16.mxu0 0
      %431 = vmatpush1.bf16.xpose.msra.mxu0 0
      %432 = vmatprep.subr.bf16.mxu0 0
      %433 = vmatpush1.bf16.xpose.msra.mxu0 0
      %434 = vmatprep.subr.bf16.mxu0 0
      %435 = vmatpush1.bf16.xpose.msra.mxu0 0
      %436 = vmatprep.subr.bf16.mxu0 0
      %437 = vmatpush1.bf16.xpose.msra.mxu0 0
      %438 = vmatprep.subr.bf16.mxu0 0
      %439 = vmatpush1.bf16.xpose.msra.mxu0 %v422
      %440 = vmatprep.subr.bf16.mxu0 0
      %441 = vmatpush2.bf16.xpose.msra.mxu0 0
      %442 = vmatprep.subr.bf16.mxu0 0
      %443 = vmatpush2.bf16.xpose.msra.mxu0 0
      %444 = vmatprep.subr.bf16.mxu0 0
      %445 = vmatpush2.bf16.xpose.msra.mxu0 0
      %446 = vmatprep.subr.bf16.mxu0 0
      %447 = vmatpush2.bf16.xpose.msra.mxu0 0
      %448 = vmatprep.subr.bf16.mxu0 0
      %449 = vmatpush2.bf16.xpose.msra.mxu0 0
      %450 = vmatprep.subr.bf16.mxu0 0
      %451 = vmatpush2.bf16.xpose.msra.mxu0 0
      %452 = vmatprep.subr.bf16.mxu0 0
      %453 = vmatpush2.bf16.xpose.msra.mxu0 0
      %454 = vmatprep.subr.bf16.mxu0 0
      %455 = vmatpush2.bf16.xpose.msra.mxu0 0
      %456 = vmatprep.mubr.bf16.mxu0 0
      %457 = vmatmul.mubr.bf16.gmra.mxu0 %v419
      %v458 = vpop.f32.mrf.mxu0
      %v459 = vadd.f32 0.0, %v458
      %v460 = vpop.f32.mrf.mxu0
      %v461 = vpop.f32.mrf.mxu0
      %v462 = vpop.f32.mrf.mxu0
      %463 = vdwg.mxu0
      %v464 = vmul.f32 %v459, 0.35355338
      %v465 = vadd.f32 %v464, %v293
      %v466 = vsel %vm302, %v465, -inf
      %467 = vmax.xlane.f32.xlu0 %v466
      %v468 = vpop.xlane.xlu0 %467
      %v469 = vsub.f32 %v465, %v468
      %v470 = vmul.f32 %v469, 1.442695
      %v471 = vpow.pop %v470
      %v472 = vsel %vm302, %v471, 0.0
      %473 = vadd.xlane.f32.xlu0 %v472
      %v474 = vpop.xlane.xlu0 %473
      %v475 = vrcp.pop %v474
      %v476 = vmul.f32 %v471, %v475
      %v477 = vpack.c.bf16 %v476, %v476
      %478 = vrot.lane.b32.xlu0 %v298, 56
      %v479 = vpop.permute.xlu0 %478
      %v481 = vsel %vm302, %v477, 0
      %v484 = vsel %vm368, %v479, 0
      %486 = vmatprep.subr.bf16.mxu0 0
      %487 = vmatpush1.bf16.msra.mxu0 0
      %488 = vmatprep.subr.bf16.mxu0 0
      %489 = vmatpush1.bf16.msra.mxu0 0
      %490 = vmatprep.subr.bf16.mxu0 0
      %491 = vmatpush1.bf16.msra.mxu0 0
      %492 = vmatprep.subr.bf16.mxu0 0
      %493 = vmatpush1.bf16.msra.mxu0 0
      %494 = vmatprep.subr.bf16.mxu0 0
      %495 = vmatpush1.bf16.msra.mxu0 0
      %496 = vmatprep.subr.bf16.mxu0 0
      %497 = vmatpush1.bf16.msra.mxu0 0
      %498 = vmatprep.subr.bf16.mxu0 0
      %499 = vmatpush1.bf16.msra.mxu0 0
      %500 = vmatprep.subr.bf16.mxu0 0
      %501 = vmatpush1.bf16.msra.mxu0 %v484
      %502 = vmatprep.subr.bf16.mxu0 0
      %503 = vmatpush2.bf16.msra.mxu0 0
      %504 = vmatprep.subr.bf16.mxu0 0
      %505 = vmatpush2.bf16.msra.mxu0 0
      %506 = vmatprep.subr.bf16.mxu0 0
      %507 = vmatpush2.bf16.msra.mxu0 0
      %508 = vmatprep.subr.bf16.mxu0 0
      %509 = vmatpush2.bf16.msra.mxu0 0
      %510 = vmatprep.subr.bf16.mxu0 0
      %511 = vmatpush2.bf16.msra.mxu0 0
      %512 = vmatprep.subr.bf16.mxu0 0
      %513 = vmatpush2.bf16.msra.mxu0 0
      %514 = vmatprep.subr.bf16.mxu0 0
      %515 = vmatpush2.bf16.msra.mxu0 0
      %516 = vmatprep.subr.bf16.mxu0 0
      %517 = vmatpush2.bf16.msra.mxu0 0
      %518 = vmatprep.mubr.bf16.mxu0 0
      %519 = vmatmul.mubr.bf16.gmra.mxu0 %v481
      %v520 = vpop.f32.mrf.mxu0
      %v521 = vadd.f32 0.0, %v520
      %v522 = vpop.f32.mrf.mxu0
      %v523 = vpop.f32.mrf.mxu0
      %v524 = vpop.f32.mrf.mxu0
      %525 = vdwg.mxu0
      %v526 = vpack.c.bf16 %v521, %v521
      %v527 = vpack.c.bf16 %v295, %v295
      %v529 = vsel %vm302, %v526, 0
      %v532 = vsel %vm368, %v527, 0
      %534 = vmatprep.subr.bf16.mxu0 0
      %535 = vmatpush1.bf16.msra.mxu0 0
      %536 = vmatprep.subr.bf16.mxu0 0
      %537 = vmatpush1.bf16.msra.mxu0 0
      %538 = vmatprep.subr.bf16.mxu0 0
      %539 = vmatpush1.bf16.msra.mxu0 0
      %540 = vmatprep.subr.bf16.mxu0 0
      %541 = vmatpush1.bf16.msra.mxu0 0
      %542 = vmatprep.subr.bf16.mxu0 0
      %543 = vmatpush1.bf16.msra.mxu0 0
      %544 = vmatprep.subr.bf16.mxu0 0
      %545 = vmatpush1.bf16.msra.mxu0 0
      %546 = vmatprep.subr.bf16.mxu0 0
      %547 = vmatpush1.bf16.msra.mxu0 0
      %548 = vmatprep.subr.bf16.mxu0 0
      %549 = vmatpush1.bf16.msra.mxu0 %v532
      %550 = vmatprep.subr.bf16.mxu0 0
      %551 = vmatpush2.bf16.msra.mxu0 0
      %552 = vmatprep.subr.bf16.mxu0 0
      %553 = vmatpush2.bf16.msra.mxu0 0
      %554 = vmatprep.subr.bf16.mxu0 0
      %555 = vmatpush2.bf16.msra.mxu0 0
      %556 = vmatprep.subr.bf16.mxu0 0
      %557 = vmatpush2.bf16.msra.mxu0 0
      %558 = vmatprep.subr.bf16.mxu0 0
      %559 = vmatpush2.bf16.msra.mxu0 0
      %560 = vmatprep.subr.bf16.mxu0 0
      %561 = vmatpush2.bf16.msra.mxu0 0
      %562 = vmatprep.subr.bf16.mxu0 0
      %563 = vmatpush2.bf16.msra.mxu0 0
      %564 = vmatprep.subr.bf16.mxu0 0
      %565 = vmatpush2.bf16.msra.mxu0 0
      %566 = vmatprep.mubr.bf16.mxu0 0
      %567 = vmatmul.mubr.bf16.gmra.mxu0 %v529
      %v568 = vpop.f32.mrf.mxu0
      %v569 = vadd.f32 0.0, %v568
      %v570 = vpop.f32.mrf.mxu0
      %v571 = vpop.f32.mrf.mxu0
      %v572 = vpop.f32.mrf.mxu0
      %573 = vdwg.mxu0
      %v575 = vsel %vm302, %v412, 0
      %v578 = vsel %vm368, %v413, 0
      %580 = vmatprep.subr.bf16.mxu0 0
      %581 = vmatpush1.bf16.msra.mxu0 0
      %582 = vmatprep.subr.bf16.mxu0 0
      %583 = vmatpush1.bf16.msra.mxu0 0
      %584 = vmatprep.subr.bf16.mxu0 0
      %585 = vmatpush1.bf16.msra.mxu0 0
      %586 = vmatprep.subr.bf16.mxu0 0
      %587 = vmatpush1.bf16.msra.mxu0 0
      %588 = vmatprep.subr.bf16.mxu0 0
      %589 = vmatpush1.bf16.msra.mxu0 0
      %590 = vmatprep.subr.bf16.mxu0 0
      %591 = vmatpush1.bf16.msra.mxu0 0
      %592 = vmatprep.subr.bf16.mxu0 0
      %593 = vmatpush1.bf16.msra.mxu0 0
      %594 = vmatprep.subr.bf16.mxu0 0
      %595 = vmatpush1.bf16.msra.mxu0 %v578
      %596 = vmatprep.subr.bf16.mxu0 0
      %597 = vmatpush2.bf16.msra.mxu0 0
      %598 = vmatprep.subr.bf16.mxu0 0
      %599 = vmatpush2.bf16.msra.mxu0 0
      %600 = vmatprep.subr.bf16.mxu0 0
      %601 = vmatpush2.bf16.msra.mxu0 0
      %602 = vmatprep.subr.bf16.mxu0 0
      %603 = vmatpush2.bf16.msra.mxu0 0
      %604 = vmatprep.subr.bf16.mxu0 0
      %605 = vmatpush2.bf16.msra.mxu0 0
      %606 = vmatprep.subr.bf16.mxu0 0
      %607 = vmatpush2.bf16.msra.mxu0 0
      %608 = vmatprep.subr.bf16.mxu0 0
      %609 = vmatpush2.bf16.msra.mxu0 0
      %610 = vmatprep.subr.bf16.mxu0 0
      %611 = vmatpush2.bf16.msra.mxu0 0
      %612 = vmatprep.mubr.bf16.mxu0 0
      %613 = vmatmul.mubr.bf16.gmra.mxu0 %v575
      %v614 = vpop.f32.mrf.mxu0
      %v615 = vadd.f32 %v569, %v614
      %v616 = vpop.f32.mrf.mxu0
      %v617 = vpop.f32.mrf.mxu0
      %v618 = vpop.f32.mrf.mxu0
      %619 = vdwg.mxu0
      %620 = vrot.lane.b32.xlu0 %v298, 112
      %v621 = vpop.permute.xlu0 %620
      %622 = vrot.lane.b32.xlu0 %v298, 80
      %v623 = vpop.permute.xlu0 %622
      %v625 = vsel %vm302, %v621, 0
      %v628 = vsel %vm302, %v623, 0
      %630 = vmatprep.subr.bf16.mxu0 0
      %631 = vmatpush1.bf16.xpose.msra.mxu0 0
      %632 = vmatprep.subr.bf16.mxu0 0
      %633 = vmatpush1.bf16.xpose.msra.mxu0 0
      %634 = vmatprep.subr.bf16.mxu0 0
      %635 = vmatpush1.bf16.xpose.msra.mxu0 0
      %636 = vmatprep.subr.bf16.mxu0 0
      %637 = vmatpush1.bf16.xpose.msra.mxu0 0
      %638 = vmatprep.subr.bf16.mxu0 0
      %639 = vmatpush1.bf16.xpose.msra.mxu0 0
      %640 = vmatprep.subr.bf16.mxu0 0
      %641 = vmatpush1.bf16.xpose.msra.mxu0 0
      %642 = vmatprep.subr.bf16.mxu0 0
      %643 = vmatpush1.bf16.xpose.msra.mxu0 0
      %644 = vmatprep.subr.bf16.mxu0 0
      %645 = vmatpush1.bf16.xpose.msra.mxu0 %v628
      %646 = vmatprep.subr.bf16.mxu0 0
      %647 = vmatpush2.bf16.xpose.msra.mxu0 0
      %648 = vmatprep.subr.bf16.mxu0 0
      %649 = vmatpush2.bf16.xpose.msra.mxu0 0
      %650 = vmatprep.subr.bf16.mxu0 0
      %651 = vmatpush2.bf16.xpose.msra.mxu0 0
      %652 = vmatprep.subr.bf16.mxu0 0
      %653 = vmatpush2.bf16.xpose.msra.mxu0 0
      %654 = vmatprep.subr.bf16.mxu0 0
      %655 = vmatpush2.bf16.xpose.msra.mxu0 0
      %656 = vmatprep.subr.bf16.mxu0 0
      %657 = vmatpush2.bf16.xpose.msra.mxu0 0
      %658 = vmatprep.subr.bf16.mxu0 0
      %659 = vmatpush2.bf16.xpose.msra.mxu0 0
      %660 = vmatprep.subr.bf16.mxu0 0
      %661 = vmatpush2.bf16.xpose.msra.mxu0 0
      %662 = vmatprep.mubr.bf16.mxu0 0
      %663 = vmatmul.mubr.bf16.gmra.mxu0 %v625
      %v664 = vpop.f32.mrf.mxu0
      %v665 = vadd.f32 0.0, %v664
      %v666 = vpop.f32.mrf.mxu0
      %v667 = vpop.f32.mrf.mxu0
      %v668 = vpop.f32.mrf.mxu0
      %669 = vdwg.mxu0
      %v670 = vmul.f32 %v665, 0.35355338
      %v671 = vadd.f32 %v670, %v293
      %v672 = vsel %vm302, %v671, -inf
      %673 = vmax.xlane.f32.xlu0 %v672
      %v674 = vpop.xlane.xlu0 %673
      %v675 = vsub.f32 %v671, %v674
      %v676 = vmul.f32 %v675, 1.442695
      %v677 = vpow.pop %v676
      %v678 = vsel %vm302, %v677, 0.0
      %679 = vadd.xlane.f32.xlu0 %v678
      %v680 = vpop.xlane.xlu0 %679
      %v681 = vrcp.pop %v680
      %v682 = vmul.f32 %v677, %v681
      %v683 = vpack.c.bf16 %v682, %v682
      %684 = vrot.lane.b32.xlu0 %v298, 48
      %v685 = vpop.permute.xlu0 %684
      %v687 = vsel %vm302, %v683, 0
      %v690 = vsel %vm368, %v685, 0
      %692 = vmatprep.subr.bf16.mxu0 0
      %693 = vmatpush1.bf16.msra.mxu0 0
      %694 = vmatprep.subr.bf16.mxu0 0
      %695 = vmatpush1.bf16.msra.mxu0 0
      %696 = vmatprep.subr.bf16.mxu0 0
      %697 = vmatpush1.bf16.msra.mxu0 0
      %698 = vmatprep.subr.bf16.mxu0 0
      %699 = vmatpush1.bf16.msra.mxu0 0
      %700 = vmatprep.subr.bf16.mxu0 0
      %701 = vmatpush1.bf16.msra.mxu0 0
      %702 = vmatprep.subr.bf16.mxu0 0
      %703 = vmatpush1.bf16.msra.mxu0 0
      %704 = vmatprep.subr.bf16.mxu0 0
      %705 = vmatpush1.bf16.msra.mxu0 0
      %706 = vmatprep.subr.bf16.mxu0 0
      %707 = vmatpush1.bf16.msra.mxu0 %v690
      %708 = vmatprep.subr.bf16.mxu0 0
      %709 = vmatpush2.bf16.msra.mxu0 0
      %710 = vmatprep.subr.bf16.mxu0 0
      %711 = vmatpush2.bf16.msra.mxu0 0
      %712 = vmatprep.subr.bf16.mxu0 0
      %713 = vmatpush2.bf16.msra.mxu0 0
      %714 = vmatprep.subr.bf16.mxu0 0
      %715 = vmatpush2.bf16.msra.mxu0 0
      %716 = vmatprep.subr.bf16.mxu0 0
      %717 = vmatpush2.bf16.msra.mxu0 0
      %718 = vmatprep.subr.bf16.mxu0 0
      %719 = vmatpush2.bf16.msra.mxu0 0
      %720 = vmatprep.subr.bf16.mxu0 0
      %721 = vmatpush2.bf16.msra.mxu0 0
      %722 = vmatprep.subr.bf16.mxu0 0
      %723 = vmatpush2.bf16.msra.mxu0 0
      %724 = vmatprep.mubr.bf16.mxu0 0
      %725 = vmatmul.mubr.bf16.gmra.mxu0 %v687
      %v726 = vpop.f32.mrf.mxu0
      %v727 = vadd.f32 0.0, %v726
      %v728 = vpop.f32.mrf.mxu0
      %v729 = vpop.f32.mrf.mxu0
      %v730 = vpop.f32.mrf.mxu0
      %731 = vdwg.mxu0
      %v732 = vpack.c.bf16 %v727, %v727
      %v733 = vpack.c.bf16 %v296, %v296
      %v735 = vsel %vm302, %v732, 0
      %v738 = vsel %vm368, %v733, 0
      %740 = vmatprep.subr.bf16.mxu0 0
      %741 = vmatpush1.bf16.msra.mxu0 0
      %742 = vmatprep.subr.bf16.mxu0 0
      %743 = vmatpush1.bf16.msra.mxu0 0
      %744 = vmatprep.subr.bf16.mxu0 0
      %745 = vmatpush1.bf16.msra.mxu0 0
      %746 = vmatprep.subr.bf16.mxu0 0
      %747 = vmatpush1.bf16.msra.mxu0 0
      %748 = vmatprep.subr.bf16.mxu0 0
      %749 = vmatpush1.bf16.msra.mxu0 0
      %750 = vmatprep.subr.bf16.mxu0 0
      %751 = vmatpush1.bf16.msra.mxu0 0
      %752 = vmatprep.subr.bf16.mxu0 0
      %753 = vmatpush1.bf16.msra.mxu0 0
      %754 = vmatprep.subr.bf16.mxu0 0
      %755 = vmatpush1.bf16.msra.mxu0 %v738
      %756 = vmatprep.subr.bf16.mxu0 0
      %757 = vmatpush2.bf16.msra.mxu0 0
      %758 = vmatprep.subr.bf16.mxu0 0
      %759 = vmatpush2.bf16.msra.mxu0 0
      %760 = vmatprep.subr.bf16.mxu0 0
      %761 = vmatpush2.bf16.msra.mxu0 0
      %762 = vmatprep.subr.bf16.mxu0 0
      %763 = vmatpush2.bf16.msra.mxu0 0
      %764 = vmatprep.subr.bf16.mxu0 0
      %765 = vmatpush2.bf16.msra.mxu0 0
      %766 = vmatprep.subr.bf16.mxu0 0
      %767 = vmatpush2.bf16.msra.mxu0 0
      %768 = vmatprep.subr.bf16.mxu0 0
      %769 = vmatpush2.bf16.msra.mxu0 0
      %770 = vmatprep.subr.bf16.mxu0 0
      %771 = vmatpush2.bf16.msra.mxu0 0
      %772 = vmatprep.mubr.bf16.mxu0 0
      %773 = vmatmul.mubr.bf16.gmra.mxu0 %v735
      %v774 = vpop.f32.mrf.mxu0
      %v775 = vadd.f32 0.0, %v774
      %v776 = vpop.f32.mrf.mxu0
      %v777 = vpop.f32.mrf.mxu0
      %v778 = vpop.f32.mrf.mxu0
      %779 = vdwg.mxu0
      %v780 = vadd.f32 %v615, %v775
      %781 = vrot.lane.b32.xlu0 %v298, 104
      %v782 = vpop.permute.xlu0 %781
      %783 = vrot.lane.b32.xlu0 %v298, 72
      %v784 = vpop.permute.xlu0 %783
      %v786 = vsel %vm302, %v782, 0
      %v789 = vsel %vm302, %v784, 0
      %791 = vmatprep.subr.bf16.mxu0 0
      %792 = vmatpush1.bf16.xpose.msra.mxu0 0
      %793 = vmatprep.subr.bf16.mxu0 0
      %794 = vmatpush1.bf16.xpose.msra.mxu0 0
      %795 = vmatprep.subr.bf16.mxu0 0
      %796 = vmatpush1.bf16.xpose.msra.mxu0 0
      %797 = vmatprep.subr.bf16.mxu0 0
      %798 = vmatpush1.bf16.xpose.msra.mxu0 0
      %799 = vmatprep.subr.bf16.mxu0 0
      %800 = vmatpush1.bf16.xpose.msra.mxu0 0
      %801 = vmatprep.subr.bf16.mxu0 0
      %802 = vmatpush1.bf16.xpose.msra.mxu0 0
      %803 = vmatprep.subr.bf16.mxu0 0
      %804 = vmatpush1.bf16.xpose.msra.mxu0 0
      %805 = vmatprep.subr.bf16.mxu0 0
      %806 = vmatpush1.bf16.xpose.msra.mxu0 %v789
      %807 = vmatprep.subr.bf16.mxu0 0
      %808 = vmatpush2.bf16.xpose.msra.mxu0 0
      %809 = vmatprep.subr.bf16.mxu0 0
      %810 = vmatpush2.bf16.xpose.msra.mxu0 0
      %811 = vmatprep.subr.bf16.mxu0 0
      %812 = vmatpush2.bf16.xpose.msra.mxu0 0
      %813 = vmatprep.subr.bf16.mxu0 0
      %814 = vmatpush2.bf16.xpose.msra.mxu0 0
      %815 = vmatprep.subr.bf16.mxu0 0
      %816 = vmatpush2.bf16.xpose.msra.mxu0 0
      %817 = vmatprep.subr.bf16.mxu0 0
      %818 = vmatpush2.bf16.xpose.msra.mxu0 0
      %819 = vmatprep.subr.bf16.mxu0 0
      %820 = vmatpush2.bf16.xpose.msra.mxu0 0
      %821 = vmatprep.subr.bf16.mxu0 0
      %822 = vmatpush2.bf16.xpose.msra.mxu0 0
      %823 = vmatprep.mubr.bf16.mxu0 0
      %824 = vmatmul.mubr.bf16.gmra.mxu0 %v786
      %v825 = vpop.f32.mrf.mxu0
      %v826 = vadd.f32 0.0, %v825
      %v827 = vpop.f32.mrf.mxu0
      %v828 = vpop.f32.mrf.mxu0
      %v829 = vpop.f32.mrf.mxu0
      %830 = vdwg.mxu0
      %v831 = vmul.f32 %v826, 0.35355338
      %v832 = vadd.f32 %v831, %v293
      %v833 = vsel %vm302, %v832, -inf
      %834 = vmax.xlane.f32.xlu0 %v833
      %v835 = vpop.xlane.xlu0 %834
      %v836 = vsub.f32 %v832, %v835
      %v837 = vmul.f32 %v836, 1.442695
      %v838 = vpow.pop %v837
      %v839 = vsel %vm302, %v838, 0.0
      %840 = vadd.xlane.f32.xlu0 %v839
      %v841 = vpop.xlane.xlu0 %840
      %v842 = vrcp.pop %v841
      %v843 = vmul.f32 %v838, %v842
      %v844 = vpack.c.bf16 %v843, %v843
      %845 = vrot.lane.b32.xlu0 %v298, 40
      %v846 = vpop.permute.xlu0 %845
      %v848 = vsel %vm302, %v844, 0
      %v851 = vsel %vm368, %v846, 0
      %853 = vmatprep.subr.bf16.mxu0 0
      %854 = vmatpush1.bf16.msra.mxu0 0
      %855 = vmatprep.subr.bf16.mxu0 0
      %856 = vmatpush1.bf16.msra.mxu0 0
      %857 = vmatprep.subr.bf16.mxu0 0
      %858 = vmatpush1.bf16.msra.mxu0 0
      %859 = vmatprep.subr.bf16.mxu0 0
      %860 = vmatpush1.bf16.msra.mxu0 0
      %861 = vmatprep.subr.bf16.mxu0 0
      %862 = vmatpush1.bf16.msra.mxu0 0
      %863 = vmatprep.subr.bf16.mxu0 0
      %864 = vmatpush1.bf16.msra.mxu0 0
      %865 = vmatprep.subr.bf16.mxu0 0
      %866 = vmatpush1.bf16.msra.mxu0 0
      %867 = vmatprep.subr.bf16.mxu0 0
      %868 = vmatpush1.bf16.msra.mxu0 %v851
      %869 = vmatprep.subr.bf16.mxu0 0
      %870 = vmatpush2.bf16.msra.mxu0 0
      %871 = vmatprep.subr.bf16.mxu0 0
      %872 = vmatpush2.bf16.msra.mxu0 0
      %873 = vmatprep.subr.bf16.mxu0 0
      %874 = vmatpush2.bf16.msra.mxu0 0
      %875 = vmatprep.subr.bf16.mxu0 0
      %876 = vmatpush2.bf16.msra.mxu0 0
      %877 = vmatprep.subr.bf16.mxu0 0
      %878 = vmatpush2.bf16.msra.mxu0 0
      %879 = vmatprep.subr.bf16.mxu0 0
      %880 = vmatpush2.bf16.msra.mxu0 0
      %881 = vmatprep.subr.bf16.mxu0 0
      %882 = vmatpush2.bf16.msra.mxu0 0
      %883 = vmatprep.subr.bf16.mxu0 0
      %884 = vmatpush2.bf16.msra.mxu0 0
      %885 = vmatprep.mubr.bf16.mxu0 0
      %886 = vmatmul.mubr.bf16.gmra.mxu0 %v848
      %v887 = vpop.f32.mrf.mxu0
      %v888 = vadd.f32 0.0, %v887
      %v889 = vpop.f32.mrf.mxu0
      %v890 = vpop.f32.mrf.mxu0
      %v891 = vpop.f32.mrf.mxu0
      %892 = vdwg.mxu0
      %v893 = vpack.c.bf16 %v888, %v888
      %v894 = vpack.c.bf16 %v297, %v297
      %v896 = vsel %vm302, %v893, 0
      %v899 = vsel %vm368, %v894, 0
      %901 = vmatprep.subr.bf16.mxu0 0
      %902 = vmatpush1.bf16.msra.mxu0 0
      %903 = vmatprep.subr.bf16.mxu0 0
      %904 = vmatpush1.bf16.msra.mxu0 0
      %905 = vmatprep.subr.bf16.mxu0 0
      %906 = vmatpush1.bf16.msra.mxu0 0
      %907 = vmatprep.subr.bf16.mxu0 0
      %908 = vmatpush1.bf16.msra.mxu0 0
      %909 = vmatprep.subr.bf16.mxu0 0
      %910 = vmatpush1.bf16.msra.mxu0 0
      %911 = vmatprep.subr.bf16.mxu0 0
      %912 = vmatpush1.bf16.msra.mxu0 0
      %913 = vmatprep.subr.bf16.mxu0 0
      %914 = vmatpush1.bf16.msra.mxu0 0
      %915 = vmatprep.subr.bf16.mxu0 0
      %916 = vmatpush1.bf16.msra.mxu0 %v899
      %917 = vmatprep.subr.bf16.mxu0 0
      %918 = vmatpush2.bf16.msra.mxu0 0
      %919 = vmatprep.subr.bf16.mxu0 0
      %920 = vmatpush2.bf16.msra.mxu0 0
      %921 = vmatprep.subr.bf16.mxu0 0
      %922 = vmatpush2.bf16.msra.mxu0 0
      %923 = vmatprep.subr.bf16.mxu0 0
      %924 = vmatpush2.bf16.msra.mxu0 0
      %925 = vmatprep.subr.bf16.mxu0 0
      %926 = vmatpush2.bf16.msra.mxu0 0
      %927 = vmatprep.subr.bf16.mxu0 0
      %928 = vmatpush2.bf16.msra.mxu0 0
      %929 = vmatprep.subr.bf16.mxu0 0
      %930 = vmatpush2.bf16.msra.mxu0 0
      %931 = vmatprep.subr.bf16.mxu0 0
      %932 = vmatpush2.bf16.msra.mxu0 0
      %933 = vmatprep.mubr.bf16.mxu0 0
      %934 = vmatmul.mubr.bf16.gmra.mxu0 %v896
      %v935 = vpop.f32.mrf.mxu0
      %v936 = vadd.f32 0.0, %v935
      %v937 = vpop.f32.mrf.mxu0
      %v938 = vpop.f32.mrf.mxu0
      %v939 = vpop.f32.mrf.mxu0
      %940 = vdwg.mxu0
      %v941 = vadd.f32 %v780, %v936
      %v942 = vld [vmem:[%s4] sm:$0x1]
      %v944 = vlaneseq
      %v945 = vshrl.u32 %v944, 7
      %v946 = vsub.s32 0, %v945
      %v947 = vrot.slane %v942, %v946
      %v949 = vadd.f32 %v941, %v947
      %v950 = vld [vmem:[%s286] sm:$0xff]
      %v951 = vadd.f32 %v949, %v950
      %vm952 = vcmask 261120
      %v953 = vsel %vm952, %v951, 0.0
      %954 = vadd.xlane.f32.xlu0 %v953
      %v955 = vpop.xlane.xlu0 %954
      %v956 = vrcp.pop 32.0
      %v957 = vmul.f32 %v955, %v956
      %v958 = vsub.f32 %v951, %v957
      %v959 = vmul.f32 %v958, %v958
      %v960 = vsel %vm952, %v959, 0.0
      %961 = vadd.xlane.f32.xlu0 %v960
      %v962 = vpop.xlane.xlu0 %961
      %v963 = vmul.f32 %v962, %v956
      %v964 = vadd.f32 %v963, 1e-05
      %v965 = vrsqrt.pop %v964
      %v966 = vmul.f32 %v958, %v965
      %v967 = vld [vmem:[%s5] sm:$0x1]
      %v969 = vlaneseq
      %v970 = vshrl.u32 %v969, 7
      %v971 = vsub.s32 0, %v970
      %v972 = vrot.slane %v967, %v971
      %v974 = vmul.f32 %v966, %v972
      %v975 = vld [vmem:[%s6] sm:$0x1]
      %v977 = vlaneseq
      %v978 = vshrl.u32 %v977, 7
      %v979 = vsub.s32 0, %v978
      %v980 = vrot.slane %v975, %v979
      %v982 = vadd.f32 %v974, %v980
      %983 = vst.msk [vmem:[%s290] sm:$0xff] %vm952, %v982
      %p984 = scmp.lt.s32.totalorder %s18, 1
      %s985 = scalar_select %p984, %s18, 1
      %s986 = smul.addr %s985, 8
      %s987 = scalar_lea.vmem %s7, %s986
      // Predicated region
      $region49: #{decoder_forward.16} parent=47 // pred_check
        %p988 = pneg %p193
      $region50: #{decoder_forward.16} parent=47 // pred_check_branch
        %990 = sbr.rel (%p988) target = $region52
      $region51: #{decoder_forward.16} parent=47 // pred_region
        _
      $region52: #{decoder_forward.16} parent=47 // pred_fallthru
        _
    $region48: #{decoder_forward.16} parent=5 // pred_fallthru
      _
    %p991 = scmp.le.s32.totalorder 2, %s13
    // Predicated region
    $region53: #{decoder_forward.16} parent=5 // pred_check
      %p992 = pneg %p991
    $region54: #{decoder_forward.16} parent=5 // pred_check_branch
      %994 = sbr.rel (%p992) target = $region56
    $region55: #{decoder_forward.16} parent=5 // pred_region
      %s995 = ssub.s32 %s13, 2
      // Predicated region
      $region57: #{decoder_forward.16} parent=55 // pred_check
        %p996 = pneg %p199
      $region58: #{decoder_forward.16} parent=55 // pred_check_branch
        %998 = sbr.rel (%p996) target = $region60
      $region59: #{decoder_forward.16} parent=55 // pred_region
        %p999 = scmp.lt.s32.totalorder %s19, 1
        %s1000 = scalar_select %p999, %s19, 1
        %s1001 = smul.addr %s1000, 8
        %s1002 = scalar_lea.vmem %s7, %s1001
      $region60: #{decoder_forward.16} parent=55 // pred_fallthru
        _
    $region56: #{decoder_forward.16} parent=5 // pred_fallthru
      _
  $region6: #{decoder_forward.16} parent=0 // loop_footer
    %s17 = sadd.s32 1, %s13
  $region7: #{decoder_forward.16} parent=0 // loop_footer_branch
    %12 = sbr.rel target = $region3
  $region8: #{decoder_forward.16} parent=0 // loop_exit
    _

// kernel: decoder_forward.17
$region0: #{decoder_forward.17}
  #allocation0 [shape = 'u32[]', space=smem, size = 0x4, offset = 0x4, fixed_abs, tag = 'smem constant byte address 0x4 - core index']
  #allocation1 [shape = 'u32[144,128]{1,0:T(1,128)}', space=vmem, size = 0x12000, scoped, tag = 'internal scratch']
  #allocation2 [shape = 'f32[16,64]{1,0:T(8,128)}', space=vmem, size = 0x2000, scoped, tag = 'scratch operand']
  %s0 = inlined_call_operand.vmem [shape: f32[16,32], index: 0, kind: input, shape index: {}]
  %s1 = inlined_call_operand.vmem [shape: f32[32,64], index: 1, kind: input, shape index: {}]
  %s2 = inlined_call_operand.vmem [shape: f32[1,64], index: 2, kind: input, shape index: {}]
  %s3 = inlined_call_operand.vmem [shape: f32[16,64], index: 3, kind: output, shape index: {}]
  %s4 = sld [smem:[#allocation0]]
  $region30: #{decoder_forward.17} parent=0
    _
  %s6 = ssub.s32 1, %s4
  %s7 = scalar_select 0, %s6, %s4
  // Predicated region
  $region2: #{decoder_forward.17} parent=0 // pred_check
    _
  $region3: #{decoder_forward.17} parent=0 // pred_check_branch
    %9 = sbr.rel (0) target = $region5
  $region4: #{decoder_forward.17} parent=0 // pred_region
    _
  $region5: #{decoder_forward.17} parent=0 // pred_fallthru
    _
  // Predicated region
  $region6: #{decoder_forward.17} parent=0 // pred_check
    _
  $region7: #{decoder_forward.17} parent=0 // pred_check_branch
    %11 = sbr.rel (0) target = $region9
  $region8: #{decoder_forward.17} parent=0 // pred_region
    _
  $region9: #{decoder_forward.17} parent=0 // pred_fallthru
    _
  // Predicated region
  $region10: #{decoder_forward.17} parent=0 // pred_check
    _
  $region11: #{decoder_forward.17} parent=0 // pred_check_branch
    %13 = sbr.rel (0) target = $region13
  $region12: #{decoder_forward.17} parent=0 // pred_region
    _
  $region13: #{decoder_forward.17} parent=0 // pred_fallthru
    _
  %p15 = scmp.eq.s32.totalorder 0, 0
  // Predicated region
  $region14: #{decoder_forward.17} parent=0 // pred_check
    %p16 = pneg %p15
  $region15: #{decoder_forward.17} parent=0 // pred_check_branch
    %18 = sbr.rel (%p16) target = $region17
  $region16: #{decoder_forward.17} parent=0 // pred_region
    %vm19 = vcmask 523264
    %20 = vst.msk [vmem:[#allocation2] sm:$0xff] %vm19, 0.0
    %21 = vst.msk [vmem:[#allocation2 + $0x8] sm:$0xff] %vm19, 0.0
  $region17: #{decoder_forward.17} parent=0 // pred_fallthru
    _
  %v22 = vld [vmem:[#allocation2] sm:$0xff]
  %v23 = vld [vmem:[#allocation2 + $0x8] sm:$0xff]
  %v24 = vld [vmem:[%s0] sm:$0xff]
  %v25 = vld [vmem:[%s0 + $0x8] sm:$0xff]
  %v26 = vpack.c.bf16 %v25, %v24
  %v27 = vld [vmem:[%s1] sm:$0xff]
  %v28 = vld [vmem:[%s1 + $0x8] sm:$0xff]
  %v29 = vld [vmem:[%s1 + $0x10] sm:$0xff]
  %v30 = vld [vmem:[%s1 + $0x18] sm:$0xff]
  %v31 = vpack.c.bf16 %v28, %v27
  %v32 = vpack.c.bf16 %v30, %v29
  %vm33 = vcmask 261120
  %v35 = vsel %vm33, %v26, 0
  %37 = vmatprep.subr.bf16.mxu0 0
  %38 = vmatpush1.bf16.msra.mxu0 0
  %39 = vmatprep.subr.bf16.mxu0 0
  %40 = vmatpush1.bf16.msra.mxu0 0
  %41 = vmatprep.subr.bf16.mxu0 0
  %42 = vmatpush1.bf16.msra.mxu0 0
  %43 = vmatprep.subr.bf16.mxu0 0
  %44 = vmatpush1.bf16.msra.mxu0 0
  %45 = vmatprep.subr.bf16.mxu0 0
  %46 = vmatpush1.bf16.msra.mxu0 0
  %47 = vmatprep.subr.bf16.mxu0 0
  %48 = vmatpush1.bf16.msra.mxu0 0
  %49 = vmatprep.subr.bf16.mxu0 0
  %50 = vmatpush1.bf16.msra.mxu0 %v32
  %51 = vmatprep.subr.bf16.mxu0 0
  %52 = vmatpush1.bf16.msra.mxu0 %v31
  %53 = vmatprep.subr.bf16.mxu0 0
  %54 = vmatpush2.bf16.msra.mxu0 0
  %55 = vmatprep.subr.bf16.mxu0 0
  %56 = vmatpush2.bf16.msra.mxu0 0
  %57 = vmatprep.subr.bf16.mxu0 0
  %58 = vmatpush2.bf16.msra.mxu0 0
  %59 = vmatprep.subr.bf16.mxu0 0
  %60 = vmatpush2.bf16.msra.mxu0 0
  %61 = vmatprep.subr.bf16.mxu0 0
  %62 = vmatpush2.bf16.msra.mxu0 0
  %63 = vmatprep.subr.bf16.mxu0 0
  %64 = vmatpush2.bf16.msra.mxu0 0
  %65 = vmatprep.subr.bf16.mxu0 0
  %66 = vmatpush2.bf16.msra.mxu0 0
  %67 = vmatprep.subr.bf16.mxu0 0
  %68 = vmatpush2.bf16.msra.mxu0 0
  %69 = vmatprep.mubr.bf16.mxu0 0
  %70 = vmatmul.mubr.bf16.gmra.mxu0 %v35
  %v71 = vpop.f32.mrf.mxu0
  %v72 = vadd.f32 0.0, %v71
  %v73 = vpop.f32.mrf.mxu0
  %v74 = vpop.f32.mrf.mxu0
  %v75 = vadd.f32 0.0, %v74
  %v76 = vpop.f32.mrf.mxu0
  %77 = vdwg.mxu0
  %v78 = vadd.f32 %v22, %v72
  %v79 = vadd.f32 %v23, %v75
  %vm80 = vcmask 523264
  %81 = vst.msk [vmem:[#allocation2] sm:$0xff] %vm80, %v78
  %82 = vst.msk [vmem:[#allocation2 + $0x8] sm:$0xff] %vm80, %v79
  // Predicated region
  $region18: #{decoder_forward.17} parent=0 // pred_check
    %p83 = pneg %p15
  $region19: #{decoder_forward.17} parent=0 // pred_check_branch
    %85 = sbr.rel (%p83) target = $region21
  $region20: #{decoder_forward.17} parent=0 // pred_region
    %v86 = vld [vmem:[#allocation2] sm:$0xff]
    %v87 = vld [vmem:[#allocation2 + $0x8] sm:$0xff]
    %v88 = vld [vmem:[%s2] sm:$0x1]
    %v90 = vlaneseq
    %v91 = vshrl.u32 %v90, 7
    %v92 = vsub.s32 0, %v91
    %v93 = vrot.slane %v88, %v92
    %v95 = vadd.f32 %v86, %v93
    %v96 = vadd.f32 %v87, %v93
    %97 = vst.msk [vmem:[%s3] sm:$0xff] %vm80, %v95
    %98 = vst.msk [vmem:[%s3 + $0x8] sm:$0xff] %vm80, %v96
  $region21: #{decoder_forward.17} parent=0 // pred_fallthru
    _
  // Predicated region
  $region22: #{decoder_forward.17} parent=0 // pred_check
    _
  $region23: #{decoder_forward.17} parent=0 // pred_check_branch
    %100 = sbr.rel (0) target = $region25
  $region24: #{decoder_forward.17} parent=0 // pred_region
    _
  $region25: #{decoder_forward.17} parent=0 // pred_fallthru
    _
  // Predicated region
  $region26: #{decoder_forward.17} parent=0 // pred_check
    _
  $region27: #{decoder_forward.17} parent=0 // pred_check_branch
    %102 = sbr.rel (0) target = $region29
  $region28: #{decoder_forward.17} parent=0 // pred_region
    _
  $region29: #{decoder_forward.17} parent=0 // pred_fallthru
    _

// kernel: decoder_forward.20
$region0: #{decoder_forward.20}
  #allocation0 [shape = 'u32[]', space=smem, size = 0x4, offset = 0x4, fixed_abs, tag = 'smem constant byte address 0x4 - core index']
  #allocation1 [shape = 'u32[144,128]{1,0:T(1,128)}', space=vmem, size = 0x12000, scoped, tag = 'internal scratch']
  %s0 = inlined_call_operand.vmem [shape: f32[16,32], index: 0, kind: input, shape index: {}]
  %s1 = inlined_call_operand.vmem [shape: f32[32,128], index: 1, kind: input, shape index: {}]
  %s2 = inlined_call_operand.vmem [shape: f32[1,128], index: 2, kind: input, shape index: {}]
  %s3 = inlined_call_operand.vmem [shape: f32[128,32], index: 3, kind: input, shape index: {}]
  %s4 = inlined_call_operand.vmem [shape: f32[1,32], index: 4, kind: input, shape index: {}]
  %s5 = inlined_call_operand.vmem [shape: f32[1,32], index: 5, kind: input, shape index: {}]
  %s6 = inlined_call_operand.vmem [shape: f32[1,32], index: 6, kind: input, shape index: {}]
  %s7 = inlined_call_operand.vmem [shape: f32[16,32], index: 7, kind: output, shape index: {}]
  %s8 = sld [smem:[#allocation0]]
  $region38: #{decoder_forward.20} parent=0
    _
  %s10 = ssub.s32 1, %s8
  %s11 = scalar_select 0, %s10, %s8
  // Predicated region
  $region2: #{decoder_forward.20} parent=0 // pred_check
    _
  $region3: #{decoder_forward.20} parent=0 // pred_check_branch
    %13 = sbr.rel (0) target = $region5
  $region4: #{decoder_forward.20} parent=0 // pred_region
    _
  $region5: #{decoder_forward.20} parent=0 // pred_fallthru
    _
  // Predicated region
  $region6: #{decoder_forward.20} parent=0 // pred_check
    _
  $region7: #{decoder_forward.20} parent=0 // pred_check_branch
    %15 = sbr.rel (0) target = $region9
  $region8: #{decoder_forward.20} parent=0 // pred_region
    _
  $region9: #{decoder_forward.20} parent=0 // pred_fallthru
    _
  // Predicated region
  $region10: #{decoder_forward.20} parent=0 // pred_check
    _
  $region11: #{decoder_forward.20} parent=0 // pred_check_branch
    %17 = sbr.rel (0) target = $region13
  $region12: #{decoder_forward.20} parent=0 // pred_region
    _
  $region13: #{decoder_forward.20} parent=0 // pred_fallthru
    _
  // Predicated region
  $region14: #{decoder_forward.20} parent=0 // pred_check
    _
  $region15: #{decoder_forward.20} parent=0 // pred_check_branch
    %19 = sbr.rel (0) target = $region17
  $region16: #{decoder_forward.20} parent=0 // pred_region
    _
  $region17: #{decoder_forward.20} parent=0 // pred_fallthru
    _
  // Predicated region
  $region18: #{decoder_forward.20} parent=0 // pred_check
    _
  $region19: #{decoder_forward.20} parent=0 // pred_check_branch
    %21 = sbr.rel (0) target = $region21
  $region20: #{decoder_forward.20} parent=0 // pred_region
    _
  $region21: #{decoder_forward.20} parent=0 // pred_fallthru
    _
  // Predicated region
  $region22: #{decoder_forward.20} parent=0 // pred_check
    _
  $region23: #{decoder_forward.20} parent=0 // pred_check_branch
    %23 = sbr.rel (0) target = $region25
  $region24: #{decoder_forward.20} parent=0 // pred_region
    _
  $region25: #{decoder_forward.20} parent=0 // pred_fallthru
    _
  // Predicated region
  $region26: #{decoder_forward.20} parent=0 // pred_check
    _
  $region27: #{decoder_forward.20} parent=0 // pred_check_branch
    %25 = sbr.rel (0) target = $region29
  $region28: #{decoder_forward.20} parent=0 // pred_region
    _
  $region29: #{decoder_forward.20} parent=0 // pred_fallthru
    _
  %v27 = vld [vmem:[%s0] sm:$0xff]
  %v28 = vld [vmem:[%s0 + $0x8] sm:$0xff]
  %v29 = vpack.c.bf16 %v28, %v27
  %v30 = vld [vmem:[%s1] sm:$0xff]
  %v31 = vld [vmem:[%s1 + $0x8] sm:$0xff]
  %v32 = vld [vmem:[%s1 + $0x10] sm:$0xff]
  %v33 = vld [vmem:[%s1 + $0x18] sm:$0xff]
  %v34 = vpack.c.bf16 %v31, %v30
  %v35 = vpack.c.bf16 %v33, %v32
  %v36 = vld [vmem:[%s2] sm:$0x1]
  %v38 = vlaneseq
  %v39 = vshrl.u32 %v38, 7
  %v40 = vsub.s32 0, %v39
  %v41 = vrot.slane %v36, %v40
  %vm43 = vcmask 261120
  %v45 = vsel %vm43, %v29, 0
  %47 = vmatprep.subr.bf16.mxu0 0
  %48 = vmatpush1.bf16.msra.mxu0 0
  %49 = vmatprep.subr.bf16.mxu0 0
  %50 = vmatpush1.bf16.msra.mxu0 0
  %51 = vmatprep.subr.bf16.mxu0 0
  %52 = vmatpush1.bf16.msra.mxu0 0
  %53 = vmatprep.subr.bf16.mxu0 0
  %54 = vmatpush1.bf16.msra.mxu0 0
  %55 = vmatprep.subr.bf16.mxu0 0
  %56 = vmatpush1.bf16.msra.mxu0 0
  %57 = vmatprep.subr.bf16.mxu0 0
  %58 = vmatpush1.bf16.msra.mxu0 0
  %59 = vmatprep.subr.bf16.mxu0 0
  %60 = vmatpush1.bf16.msra.mxu0 %v35
  %61 = vmatprep.subr.bf16.mxu0 0
  %62 = vmatpush1.bf16.msra.mxu0 %v34
  %63 = vmatprep.subr.bf16.mxu0 0
  %64 = vmatpush2.bf16.msra.mxu0 0
  %65 = vmatprep.subr.bf16.mxu0 0
  %66 = vmatpush2.bf16.msra.mxu0 0
  %67 = vmatprep.subr.bf16.mxu0 0
  %68 = vmatpush2.bf16.msra.mxu0 0
  %69 = vmatprep.subr.bf16.mxu0 0
  %70 = vmatpush2.bf16.msra.mxu0 0
  %71 = vmatprep.subr.bf16.mxu0 0
  %72 = vmatpush2.bf16.msra.mxu0 0
  %73 = vmatprep.subr.bf16.mxu0 0
  %74 = vmatpush2.bf16.msra.mxu0 0
  %75 = vmatprep.subr.bf16.mxu0 0
  %76 = vmatpush2.bf16.msra.mxu0 0
  %77 = vmatprep.subr.bf16.mxu0 0
  %78 = vmatpush2.bf16.msra.mxu0 0
  %79 = vmatprep.mubr.bf16.mxu0 0
  %80 = vmatmul.mubr.bf16.gmra.mxu0 %v45
  %v81 = vpop.f32.mrf.mxu0
  %v82 = vadd.f32 %v41, %v81
  %v83 = vpop.f32.mrf.mxu0
  %v84 = vpop.f32.mrf.mxu0
  %v85 = vadd.f32 %v41, %v84
  %v86 = vpop.f32.mrf.mxu0
  %87 = vdwg.mxu0
  %v88 = vmax.f32 %v82, 0.0
  %v89 = vmax.f32 %v85, 0.0
  %v90 = vpack.c.bf16 %v89, %v88
  %v91 = vld [vmem:[%s3] sm:$0xff]
  %v92 = vld [vmem:[%s3 + $0x8] sm:$0xff]
  %v93 = vld [vmem:[%s3 + $0x10] sm:$0xff]
  %v94 = vld [vmem:[%s3 + $0x18] sm:$0xff]
  %v95 = vld [vmem:[%s3 + $0x20] sm:$0xff]
  %v96 = vld [vmem:[%s3 + $0x28] sm:$0xff]
  %v97 = vld [vmem:[%s3 + $0x30] sm:$0xff]
  %v98 = vld [vmem:[%s3 + $0x38] sm:$0xff]
  %v99 = vld [vmem:[%s3 + $0x40] sm:$0xff]
  %v100 = vld [vmem:[%s3 + $0x48] sm:$0xff]
  %v101 = vld [vmem:[%s3 + $0x50] sm:$0xff]
  %v102 = vld [vmem:[%s3 + $0x58] sm:$0xff]
  %v103 = vld [vmem:[%s3 + $0x60] sm:$0xff]
  %v104 = vld [vmem:[%s3 + $0x68] sm:$0xff]
  %v105 = vld [vmem:[%s3 + $0x70] sm:$0xff]
  %v106 = vld [vmem:[%s3 + $0x78] sm:$0xff]
  %v107 = vpack.c.bf16 %v92, %v91
  %v108 = vpack.c.bf16 %v94, %v93
  %v109 = vpack.c.bf16 %v96, %v95
  %v110 = vpack.c.bf16 %v98, %v97
  %v111 = vpack.c.bf16 %v100, %v99
  %v112 = vpack.c.bf16 %v102, %v101
  %v113 = vpack.c.bf16 %v104, %v103
  %v114 = vpack.c.bf16 %v106, %v105
  %v115 = vld [vmem:[%s4] sm:$0x1]
  %v117 = vlaneseq
  %v118 = vshrl.u32 %v117, 7
  %v119 = vsub.s32 0, %v118
  %v120 = vrot.slane %v115, %v119
  %122 = vmatprep.subr.bf16.mxu0 0
  %123 = vmatpush1.bf16.msra.mxu0 %v114
  %124 = vmatprep.subr.bf16.mxu0 0
  %125 = vmatpush1.bf16.msra.mxu0 %v113
  %126 = vmatprep.subr.bf16.mxu0 0
  %127 = vmatpush1.bf16.msra.mxu0 %v112
  %128 = vmatprep.subr.bf16.mxu0 0
  %129 = vmatpush1.bf16.msra.mxu0 %v111
  %130 = vmatprep.subr.bf16.mxu0 0
  %131 = vmatpush1.bf16.msra.mxu0 %v110
  %132 = vmatprep.subr.bf16.mxu0 0
  %133 = vmatpush1.bf16.msra.mxu0 %v109
  %134 = vmatprep.subr.bf16.mxu0 0
  %135 = vmatpush1.bf16.msra.mxu0 %v108
  %136 = vmatprep.subr.bf16.mxu0 0
  %137 = vmatpush1.bf16.msra.mxu0 %v107
  %138 = vmatprep.subr.bf16.mxu0 0
  %139 = vmatpush2.bf16.msra.mxu0 0
  %140 = vmatprep.subr.bf16.mxu0 0
  %141 = vmatpush2.bf16.msra.mxu0 0
  %142 = vmatprep.subr.bf16.mxu0 0
  %143 = vmatpush2.bf16.msra.mxu0 0
  %144 = vmatprep.subr.bf16.mxu0 0
  %145 = vmatpush2.bf16.msra.mxu0 0
  %146 = vmatprep.subr.bf16.mxu0 0
  %147 = vmatpush2.bf16.msra.mxu0 0
  %148 = vmatprep.subr.bf16.mxu0 0
  %149 = vmatpush2.bf16.msra.mxu0 0
  %150 = vmatprep.subr.bf16.mxu0 0
  %151 = vmatpush2.bf16.msra.mxu0 0
  %152 = vmatprep.subr.bf16.mxu0 0
  %153 = vmatpush2.bf16.msra.mxu0 0
  %154 = vmatprep.mubr.bf16.mxu0 0
  %155 = vmatmul.mubr.bf16.gmra.mxu0 %v90
  %v156 = vpop.f32.mrf.mxu0
  %v157 = vadd.f32 %v120, %v156
  %v158 = vpop.f32.mrf.mxu0
  %v159 = vpop.f32.mrf.mxu0
  %v160 = vadd.f32 %v120, %v159
  %v161 = vpop.f32.mrf.mxu0
  %162 = vdwg.mxu0
  %v163 = vadd.f32 %v157, %v27
  %v164 = vadd.f32 %v160, %v28
  %v165 = vsel %vm43, %v163, 0.0
  %166 = vadd.xlane.f32.xlu0 %v165
  %v167 = vpop.xlane.xlu0 %166
  %v168 = vsel %vm43, %v164, 0.0
  %169 = vadd.xlane.f32.xlu0 %v168
  %v170 = vpop.xlane.xlu0 %169
  %v171 = vrcp.pop 32.0
  %v172 = vmul.f32 %v167, %v171
  %v173 = vmul.f32 %v170, %v171
  %v174 = vsub.f32 %v163, %v172
  %v175 = vsub.f32 %v164, %v173
  %v176 = vmul.f32 %v174, %v174
  %v177 = vmul.f32 %v175, %v175
  %v178 = vsel %vm43, %v176, 0.0
  %179 = vadd.xlane.f32.xlu0 %v178
  %v180 = vpop.xlane.xlu0 %179
  %v181 = vsel %vm43, %v177, 0.0
  %182 = vadd.xlane.f32.xlu0 %v181
  %v183 = vpop.xlane.xlu0 %182
  %v184 = vmul.f32 %v180, %v171
  %v185 = vmul.f32 %v183, %v171
  %v186 = vadd.f32 %v184, 1e-05
  %v187 = vadd.f32 %v185, 1e-05
  %v188 = vrsqrt.pop %v186
  %v189 = vrsqrt.pop %v187
  %v190 = vmul.f32 %v174, %v188
  %v191 = vmul.f32 %v175, %v189
  %v192 = vld [vmem:[%s5] sm:$0x1]
  %v194 = vlaneseq
  %v195 = vshrl.u32 %v194, 7
  %v196 = vsub.s32 0, %v195
  %v197 = vrot.slane %v192, %v196
  %v199 = vmul.f32 %v190, %v197
  %v200 = vmul.f32 %v191, %v197
  %v201 = vld [vmem:[%s6] sm:$0x1]
  %v203 = vlaneseq
  %v204 = vshrl.u32 %v203, 7
  %v205 = vsub.s32 0, %v204
  %v206 = vrot.slane %v201, %v205
  %v208 = vadd.f32 %v199, %v206
  %v209 = vadd.f32 %v200, %v206
  %210 = vst.msk [vmem:[%s7] sm:$0xff] %vm43, %v208
  %211 = vst.msk [vmem:[%s7 + $0x8] sm:$0xff] %vm43, %v209
  // Predicated region
  $region30: #{decoder_forward.20} parent=0 // pred_check
    _
  $region31: #{decoder_forward.20} parent=0 // pred_check_branch
    %213 = sbr.rel (0) target = $region33
  $region32: #{decoder_forward.20} parent=0 // pred_region
    _
  $region33: #{decoder_forward.20} parent=0 // pred_fallthru
    _
  // Predicated region
  $region34: #{decoder_forward.20} parent=0 // pred_check
    _
  $region35: #{decoder_forward.20} parent=0 // pred_check_branch
    %215 = sbr.rel (0) target = $region37
  $region36: #{decoder_forward.20} parent=0 // pred_region
    _
  $region37: #{decoder_forward.20} parent=0 // pred_fallthru
    _

// kernel: decoder_forward.19
$region0: #{decoder_forward.19}
  #allocation0 [shape = 'u32[]', space=smem, size = 0x4, offset = 0x4, fixed_abs, tag = 'smem constant byte address 0x4 - core index']
  #allocation1 [shape = 'u32[144,128]{1,0:T(1,128)}', space=vmem, size = 0x12000, scoped, tag = 'internal scratch']
  %s0 = inlined_call_operand.vmem [shape: f32[2,8,64], index: 0, kind: input, shape index: {}]
  %s1 = inlined_call_operand.vmem [shape: f32[2,8,32], index: 1, kind: input, shape index: {}]
  %s2 = inlined_call_operand.vmem [shape: f32[2,8,32], index: 2, kind: input, shape index: {}]
  %s3 = inlined_call_operand.vmem [shape: f32[8,8], index: 3, kind: input, shape index: {}]
  %s4 = inlined_call_operand.vmem [shape: f32[32,32], index: 4, kind: input, shape index: {}]
  %s5 = inlined_call_operand.vmem [shape: f32[1,32], index: 5, kind: input, shape index: {}]
  %s6 = inlined_call_operand.vmem [shape: f32[1,32], index: 6, kind: input, shape index: {}]
  %s7 = inlined_call_operand.vmem [shape: f32[1,32], index: 7, kind: input, shape index: {}]
  %s8 = inlined_call_operand.vmem [shape: f32[2,8,32], index: 8, kind: output, shape index: {}]
  %s9 = sld [smem:[#allocation0]]
  $region65: #{decoder_forward.19} parent=0
    _
  %s11 = ssub.s32 1, %s9
  %s12 = scalar_select 0, %s11, %s9
  loop: start=0, step=1, limit=4
  $region2: #{decoder_forward.19} parent=0 // loop_pre_header
    _
  $region3: #{decoder_forward.19} parent=0 // loop_header
    %s14 = sphi 0, %s18
    %p15 = scmp.ge.s32.totalorder %s14, 4
    %s24 = sphi 0, %s26
    %s27 = sphi 0, %s24
    %s28 = sphi 0, %s27
    %s44 = sphi 0, %s28
    %s50 = sphi 0, %s52
    %s53 = sphi 0, %s50
    %s54 = sphi 0, %s53
    %s70 = sphi 0, %s54
    %s76 = sphi 0, %s78
    %s79 = sphi 0, %s76
    %s80 = sphi 0, %s79
    %s96 = sphi 0, %s80
    %s100 = sphi 0, %s100
    %s102 = sphi 0, %s100
    %s103 = sphi 0, %s102
    %s117 = sphi 0, %s103
    %s121 = sphi 0, %s121
    %s123 = sphi 0, %s121
    %s124 = sphi 0, %s123
    %s138 = sphi 0, %s124
    %s142 = sphi 0, %s142
    %s144 = sphi 0, %s142
    %s145 = sphi 0, %s144
    %s159 = sphi 0, %s145
    %s163 = sphi 0, %s163
    %s165 = sphi 0, %s163
    %s166 = sphi 0, %s165
    %s180 = sphi 0, %s166
    %s184 = sphi 0, %s184
    %s186 = sphi 0, %s184
    %s187 = sphi 0, %s186
    %s201 = sphi 0, %s187
    %s207 = sphi 0, %s209
    %s210 = sphi 0, %s207
    %s211 = sphi 0, %s210
    %s227 = sphi 0, %s211
  $region4: #{decoder_forward.19} parent=0 // loop_header_branch
    %17 = sbr.rel (%p15) target = $region8
  $region5: #{decoder_forward.19} parent=0 // loop_body
    %s19 = ssub.s32 %s14, 1
    %s20 = ssub.s32 %s14, 2
    %s21 = sadd.s32 %s14, 1
    %s22 = ssub.s32 %s14, %s21
    %p23 = scmp.eq.s32.totalorder %s22, 0
    %s25 = sadd.s32 %s24, 1
    %s26 = scalar_select %p23, %s24, %s25
    %p29 = pneg %p23
    %p30 = scmp.eq.s32.totalorder %s14, 1
    %p31 = por %p29, %p30
    %p32 = scmp.ne.s32.totalorder %s24, %s27
    %p33 = scmp.eq.s32.totalorder %s14, 0
    %p34 = por %p32, %p33
    %p35 = scmp.ne.s32.totalorder %s24, %s27
    %p36 = scmp.eq.s32.totalorder %s19, 1
    %p37 = por %p35, %p36
    %p38 = scmp.ne.s32.totalorder %s27, %s28
    %p39 = scmp.eq.s32.totalorder %s19, 0
    %p40 = por %p38, %p39
    %p41 = scmp.ne.s32.totalorder %s27, %s28
    %p42 = scmp.eq.s32.totalorder %s20, 1
    %p43 = por %p41, %p42
    %p45 = scmp.ne.s32.totalorder %s28, %s44
    %p46 = scmp.eq.s32.totalorder %s20, 0
    %p47 = por %p45, %p46
    %s48 = ssub.s32 %s14, %s21
    %p49 = scmp.eq.s32.totalorder %s48, 0
    %s51 = sadd.s32 %s50, 1
    %s52 = scalar_select %p49, %s50, %s51
    %p55 = pneg %p49
    %p56 = scmp.eq.s32.totalorder %s14, 1
    %p57 = por %p55, %p56
    %p58 = scmp.ne.s32.totalorder %s50, %s53
    %p59 = scmp.eq.s32.totalorder %s14, 0
    %p60 = por %p58, %p59
    %p61 = scmp.ne.s32.totalorder %s50, %s53
    %p62 = scmp.eq.s32.totalorder %s19, 1
    %p63 = por %p61, %p62
    %p64 = scmp.ne.s32.totalorder %s53, %s54
    %p65 = scmp.eq.s32.totalorder %s19, 0
    %p66 = por %p64, %p65
    %p67 = scmp.ne.s32.totalorder %s53, %s54
    %p68 = scmp.eq.s32.totalorder %s20, 1
    %p69 = por %p67, %p68
    %p71 = scmp.ne.s32.totalorder %s54, %s70
    %p72 = scmp.eq.s32.totalorder %s20, 0
    %p73 = por %p71, %p72
    %s74 = ssub.s32 %s14, %s21
    %p75 = scmp.eq.s32.totalorder %s74, 0
    %s77 = sadd.s32 %s76, 1
    %s78 = scalar_select %p75, %s76, %s77
    %p81 = pneg %p75
    %p82 = scmp.eq.s32.totalorder %s14, 1
    %p83 = por %p81, %p82
    %p84 = scmp.ne.s32.totalorder %s76, %s79
    %p85 = scmp.eq.s32.totalorder %s14, 0
    %p86 = por %p84, %p85
    %p87 = scmp.ne.s32.totalorder %s76, %s79
    %p88 = scmp.eq.s32.totalorder %s19, 1
    %p89 = por %p87, %p88
    %p90 = scmp.ne.s32.totalorder %s79, %s80
    %p91 = scmp.eq.s32.totalorder %s19, 0
    %p92 = por %p90, %p91
    %p93 = scmp.ne.s32.totalorder %s79, %s80
    %p94 = scmp.eq.s32.totalorder %s20, 1
    %p95 = por %p93, %p94
    %p97 = scmp.ne.s32.totalorder %s80, %s96
    %p98 = scmp.eq.s32.totalorder %s20, 0
    %p99 = por %p97, %p98
    %s101 = sadd.s32 %s100, 1
    %p104 = scmp.eq.s32.totalorder %s14, 1
    %p105 = scmp.ne.s32.totalorder %s100, %s102
    %p106 = scmp.eq.s32.totalorder %s14, 0
    %p107 = por %p105, %p106
    %p108 = scmp.ne.s32.totalorder %s100, %s102
    %p109 = scmp.eq.s32.totalorder %s19, 1
    %p110 = por %p108, %p109
    %p111 = scmp.ne.s32.totalorder %s102, %s103
    %p112 = scmp.eq.s32.totalorder %s19, 0
    %p113 = por %p111, %p112
    %p114 = scmp.ne.s32.totalorder %s102, %s103
    %p115 = scmp.eq.s32.totalorder %s20, 1
    %p116 = por %p114, %p115
    %p118 = scmp.ne.s32.totalorder %s103, %s117
    %p119 = scmp.eq.s32.totalorder %s20, 0
    %p120 = por %p118, %p119
    %s122 = sadd.s32 %s121, 1
    %p125 = scmp.eq.s32.totalorder %s14, 1
    %p126 = scmp.ne.s32.totalorder %s121, %s123
    %p127 = scmp.eq.s32.totalorder %s14, 0
    %p128 = por %p126, %p127
    %p129 = scmp.ne.s32.totalorder %s121, %s123
    %p130 = scmp.eq.s32.totalorder %s19, 1
    %p131 = por %p129, %p130
    %p132 = scmp.ne.s32.totalorder %s123, %s124
    %p133 = scmp.eq.s32.totalorder %s19, 0
    %p134 = por %p132, %p133
    %p135 = scmp.ne.s32.totalorder %s123, %s124
    %p136 = scmp.eq.s32.totalorder %s20, 1
    %p137 = por %p135, %p136
    %p139 = scmp.ne.s32.totalorder %s124, %s138
    %p140 = scmp.eq.s32.totalorder %s20, 0
    %p141 = por %p139, %p140
    %s143 = sadd.s32 %s142, 1
    %p146 = scmp.eq.s32.totalorder %s14, 1
    %p147 = scmp.ne.s32.totalorder %s142, %s144
    %p148 = scmp.eq.s32.totalorder %s14, 0
    %p149 = por %p147, %p148
    %p150 = scmp.ne.s32.totalorder %s142, %s144
    %p151 = scmp.eq.s32.totalorder %s19, 1
    %p152 = por %p150, %p151
    %p153 = scmp.ne.s32.totalorder %s144, %s145
    %p154 = scmp.eq.s32.totalorder %s19, 0
    %p155 = por %p153, %p154
    %p156 = scmp.ne.s32.totalorder %s144, %s145
    %p157 = scmp.eq.s32.totalorder %s20, 1
    %p158 = por %p156, %p157
    %p160 = scmp.ne.s32.totalorder %s145, %s159
    %p161 = scmp.eq.s32.totalorder %s20, 0
    %p162 = por %p160, %p161
    %s164 = sadd.s32 %s163, 1
    %p167 = scmp.eq.s32.totalorder %s14, 1
    %p168 = scmp.ne.s32.totalorder %s163, %s165
    %p169 = scmp.eq.s32.totalorder %s14, 0
    %p170 = por %p168, %p169
    %p171 = scmp.ne.s32.totalorder %s163, %s165
    %p172 = scmp.eq.s32.totalorder %s19, 1
    %p173 = por %p171, %p172
    %p174 = scmp.ne.s32.totalorder %s165, %s166
    %p175 = scmp.eq.s32.totalorder %s19, 0
    %p176 = por %p174, %p175
    %p177 = scmp.ne.s32.totalorder %s165, %s166
    %p178 = scmp.eq.s32.totalorder %s20, 1
    %p179 = por %p177, %p178
    %p181 = scmp.ne.s32.totalorder %s166, %s180
    %p182 = scmp.eq.s32.totalorder %s20, 0
    %p183 = por %p181, %p182
    %s185 = sadd.s32 %s184, 1
    %p188 = scmp.eq.s32.totalorder %s14, 1
    %p189 = scmp.ne.s32.totalorder %s184, %s186
    %p190 = scmp.eq.s32.totalorder %s14, 0
    %p191 = por %p189, %p190
    %p192 = scmp.ne.s32.totalorder %s184, %s186
    %p193 = scmp.eq.s32.totalorder %s19, 1
    %p194 = por %p192, %p193
    %p195 = scmp.ne.s32.totalorder %s186, %s187
    %p196 = scmp.eq.s32.totalorder %s19, 0
    %p197 = por %p195, %p196
    %p198 = scmp.ne.s32.totalorder %s186, %s187
    %p199 = scmp.eq.s32.totalorder %s20, 1
    %p200 = por %p198, %p199
    %p202 = scmp.ne.s32.totalorder %s187, %s201
    %p203 = scmp.eq.s32.totalorder %s20, 0
    %p204 = por %p202, %p203
    %s205 = ssub.s32 %s14, %s21
    %p206 = scmp.eq.s32.totalorder %s205, 0
    %s208 = sadd.s32 %s207, 1
    %s209 = scalar_select %p206, %s207, %s208
    %p212 = pneg %p206
    %p213 = scmp.eq.s32.totalorder %s14, 1
    %p214 = por %p212, %p213
    %p215 = scmp.ne.s32.totalorder %s207, %s210
    %p216 = scmp.eq.s32.totalorder %s14, 0
    %p217 = por %p215, %p216
    %p218 = scmp.ne.s32.totalorder %s207, %s210
    %p219 = scmp.eq.s32.totalorder %s19, 1
    %p220 = por %p218, %p219
    %p221 = scmp.ne.s32.totalorder %s210, %s211
    %p222 = scmp.eq.s32.totalorder %s19, 0
    %p223 = por %p221, %p222
    %p224 = scmp.ne.s32.totalorder %s210, %s211
    %p225 = scmp.eq.s32.totalorder %s20, 1
    %p226 = por %p224, %p225
    %p228 = scmp.ne.s32.totalorder %s211, %s227
    %p229 = scmp.eq.s32.totalorder %s20, 0
    %p230 = por %p228, %p229
    %p231 = scmp.le.s32.totalorder 1, %s14
    %p232 = scmp.lt.s32.totalorder %s14, 3
    %p233 = pnand %p231, %p232
    %p234 = pneg %p233
    // Predicated region
    $region9: #{decoder_forward.19} parent=5 // pred_check
      _
    $region10: #{decoder_forward.19} parent=5 // pred_check_branch
      %236 = sbr.rel (%p233) target = $region12
    $region11: #{decoder_forward.19} parent=5 // pred_region
      %s237 = ssub.s32 %s14, 1
      // Predicated region
      $region13: #{decoder_forward.19} parent=11 // pred_check
        %p238 = pneg %p113
      $region14: #{decoder_forward.19} parent=11 // pred_check_branch
        %240 = sbr.rel (%p238) target = $region16
      $region15: #{decoder_forward.19} parent=11 // pred_region
        _
      $region16: #{decoder_forward.19} parent=11 // pred_fallthru
        _
      // Predicated region
      $region17: #{decoder_forward.19} parent=11 // pred_check
        %p241 = pneg %p134
      $region18: #{decoder_forward.19} parent=11 // pred_check_branch
        %243 = sbr.rel (%p241) target = $region20
      $region19: #{decoder_forward.19} parent=11 // pred_region
        _
      $region20: #{decoder_forward.19} parent=11 // pred_fallthru
        _
      // Predicated region
      $region21: #{decoder_forward.19} parent=11 // pred_check
        %p244 = pneg %p155
      $region22: #{decoder_forward.19} parent=11 // pred_check_branch
        %246 = sbr.rel (%p244) target = $region24
      $region23: #{decoder_forward.19} parent=11 // pred_region
        _
      $region24: #{decoder_forward.19} parent=11 // pred_fallthru
        _
      // Predicated region
      $region25: #{decoder_forward.19} parent=11 // pred_check
        %p247 = pneg %p176
      $region26: #{decoder_forward.19} parent=11 // pred_check_branch
        %249 = sbr.rel (%p247) target = $region28
      $region27: #{decoder_forward.19} parent=11 // pred_region
        _
      $region28: #{decoder_forward.19} parent=11 // pred_fallthru
        _
      // Predicated region
      $region29: #{decoder_forward.19} parent=11 // pred_check
        %p250 = pneg %p197
      $region30: #{decoder_forward.19} parent=11 // pred_check_branch
        %252 = sbr.rel (%p250) target = $region32
      $region31: #{decoder_forward.19} parent=11 // pred_region
        _
      $region32: #{decoder_forward.19} parent=11 // pred_fallthru
        _
    $region12: #{decoder_forward.19} parent=5 // pred_fallthru
      _
    %p253 = scmp.lt.s32.totalorder %s14, 2
    // Predicated region
    $region33: #{decoder_forward.19} parent=5 // pred_check
      %p254 = pneg %p253
    $region34: #{decoder_forward.19} parent=5 // pred_check_branch
      %256 = sbr.rel (%p254) target = $region36
    $region35: #{decoder_forward.19} parent=5 // pred_region
      // Predicated region
      $region37: #{decoder_forward.19} parent=35 // pred_check
        %p257 = pneg %p34
      $region38: #{decoder_forward.19} parent=35 // pred_check_branch
        %259 = sbr.rel (%p257) target = $region40
      $region39: #{decoder_forward.19} parent=35 // pred_region
        %p260 = scmp.lt.s32.totalorder %s14, 1
        %s261 = scalar_select %p260, %s14, 1
        %s262 = smul.addr %s261, 8
        %s263 = scalar_lea.vmem %s0, %s262
      $region40: #{decoder_forward.19} parent=35 // pred_fallthru
        _
      // Predicated region
      $region41: #{decoder_forward.19} parent=35 // pred_check
        %p264 = pneg %p60
      $region42: #{decoder_forward.19} parent=35 // pred_check_branch
        %266 = sbr.rel (%p264) target = $region44
      $region43: #{decoder_forward.19} parent=35 // pred_region
        %p267 = scmp.lt.s32.totalorder %s14, 1
        %s268 = scalar_select %p267, %s14, 1
        %s269 = smul.addr %s268, 8
        %s270 = scalar_lea.vmem %s1, %s269
      $region44: #{decoder_forward.19} parent=35 // pred_fallthru
        _
      // Predicated region
      $region45: #{decoder_forward.19} parent=35 // pred_check
        %p271 = pneg %p86
      $region46: #{decoder_forward.19} parent=35 // pred_check_branch
        %273 = sbr.rel (%p271) target = $region48
      $region47: #{decoder_forward.19} parent=35 // pred_region
        %p274 = scmp.lt.s32.totalorder %s14, 1
        %s275 = scalar_select %p274, %s14, 1
        %s276 = smul.addr %s275, 8
        %s277 = scalar_lea.vmem %s2, %s276
      $region48: #{decoder_forward.19} parent=35 // pred_fallthru
        _
    $region36: #{decoder_forward.19} parent=5 // pred_fallthru
      _
    %p278 = scmp.le.s32.totalorder 1, %s14
    %p279 = scmp.lt.s32.totalorder %s14, 3
    %p280 = pnand %p278, %p279
    %p281 = pneg %p280
    // Predicated region
    $region49: #{decoder_forward.19} parent=5 // pred_check
      _
    $region50: #{decoder_forward.19} parent=5 // pred_check_branch
      %283 = sbr.rel (%p280) target = $region52
    $region51: #{decoder_forward.19} parent=5 // pred_region
      %s284 = ssub.s32 %s14, 1
      %p285 = scmp.lt.s32.totalorder %s19, 1
      %s286 = scalar_select %p285, %s19, 1
      %s287 = smul.addr %s286, 8
      %s288 = scalar_lea.vmem %s0, %s287
      %p289 = pneg %p40
      %p290 = pneg %p37
      %p291 = scmp.lt.s32.totalorder %s19, 1
      %s292 = scalar_select %p291, %s19, 1
      %s293 = smul.addr %s292, 8
      %s294 = scalar_lea.vmem %s1, %s293
      %p295 = pneg %p66
      %p296 = pneg %p63
      %p297 = scmp.lt.s32.totalorder %s19, 1
      %s298 = scalar_select %p297, %s19, 1
      %s299 = smul.addr %s298, 8
      %s300 = scalar_lea.vmem %s2, %s299
      %p301 = pneg %p92
      %p302 = pneg %p89
      %p303 = pneg %p113
      %p304 = pneg %p110
      %p305 = pneg %p134
      %p306 = pneg %p131
      %p307 = pneg %p155
      %p308 = pneg %p152
      %p309 = pneg %p176
      %p310 = pneg %p173
      %p311 = pneg %p197
      %p312 = pneg %p194
      %p313 = pneg %p223
      %p314 = pneg %p220
      %p315 = scmp.lt.s32.totalorder %s19, 1
      %s316 = scalar_select %p315, %s19, 1
      %s317 = smul.addr %s316, 8
      %s318 = scalar_lea.vmem %s8, %s317
      %p319 = scmp.lt.s32.totalorder %s19, 1
      %s320 = scalar_select %p319, %s19, 1
      %s321 = smul.addr %s320, 8
      %s322 = scalar_lea.vmem %s0, %s321
      %p323 = scmp.lt.s32.totalorder %s19, 1
      %s324 = scalar_select %p323, %s19, 1
      %s325 = smul.addr %s324, 8
      %s326 = scalar_lea.vmem %s1, %s325
      %p327 = scmp.lt.s32.totalorder %s19, 1
      %s328 = scalar_select %p327, %s19, 1
      %s329 = smul.addr %s328, 8
      %s330 = scalar_lea.vmem %s2, %s329
      %p331 = scmp.lt.s32.totalorder %s19, 1
      %s332 = scalar_select %p331, %s19, 1
      %s333 = smul.addr %s332, 8
      %s334 = scalar_lea.vmem %s8, %s333
      %v336 = vld [vmem:[%s322] sm:$0xff]
      %v337 = vld [vmem:[%s326] sm:$0xff]
      %v338 = vld [vmem:[%s3] sm:$0xff]
      %v339 = vld [vmem:[%s4] sm:$0xff]
      %v340 = vld [vmem:[%s4 + $0x8] sm:$0xff]
      %v341 = vld [vmem:[%s4 + $0x10] sm:$0xff]
      %v342 = vld [vmem:[%s4 + $0x18] sm:$0xff]
      %v343 = vpack.c.bf16 %v336, %v336
      %345 = vrot.lane.b32.xlu0 %v343, 96
      %v346 = vpop.permute.xlu0 %345
      %vm347 = vcmask 64512
      %v349 = vsel %vm347, %v343, 0
      %v352 = vsel %vm347, %v346, 0
      %354 = vmatprep.subr.bf16.mxu0 0
      %355 = vmatpush1.bf16.xpose.msra.mxu0 0
      %356 = vmatprep.subr.bf16.mxu0 0
      %357 = vmatpush1.bf16.xpose.msra.mxu0 0
      %358 = vmatprep.subr.bf16.mxu0 0
      %359 = vmatpush1.bf16.xpose.msra.mxu0 0
      %360 = vmatprep.subr.bf16.mxu0 0
      %361 = vmatpush1.bf16.xpose.msra.mxu0 0
      %362 = vmatprep.subr.bf16.mxu0 0
      %363 = vmatpush1.bf16.xpose.msra.mxu0 0
      %364 = vmatprep.subr.bf16.mxu0 0
      %365 = vmatpush1.bf16.xpose.msra.mxu0 0
      %366 = vmatprep.subr.bf16.mxu0 0
      %367 = vmatpush1.bf16.xpose.msra.mxu0 0
      %368 = vmatprep.subr.bf16.mxu0 0
      %369 = vmatpush1.bf16.xpose.msra.mxu0 %v352
      %370 = vmatprep.subr.bf16.mxu0 0
      %371 = vmatpush2.bf16.xpose.msra.mxu0 0
      %372 = vmatprep.subr.bf16.mxu0 0
      %373 = vmatpush2.bf16.xpose.msra.mxu0 0
      %374 = vmatprep.subr.bf16.mxu0 0
      %375 = vmatpush2.bf16.xpose.msra.mxu0 0
      %376 = vmatprep.subr.bf16.mxu0 0
      %377 = vmatpush2.bf16.xpose.msra.mxu0 0
      %378 = vmatprep.subr.bf16.mxu0 0
      %379 = vmatpush2.bf16.xpose.msra.mxu0 0
      %380 = vmatprep.subr.bf16.mxu0 0
      %381 = vmatpush2.bf16.xpose.msra.mxu0 0
      %382 = vmatprep.subr.bf16.mxu0 0
      %383 = vmatpush2.bf16.xpose.msra.mxu0 0
      %384 = vmatprep.subr.bf16.mxu0 0
      %385 = vmatpush2.bf16.xpose.msra.mxu0 0
      %386 = vmatprep.mubr.bf16.mxu0 0
      %387 = vmatmul.mubr.bf16.gmra.mxu0 %v349
      %v388 = vpop.f32.mrf.mxu0
      %v389 = vadd.f32 0.0, %v388
      %v390 = vpop.f32.mrf.mxu0
      %v391 = vpop.f32.mrf.mxu0
      %v392 = vpop.f32.mrf.mxu0
      %393 = vdwg.mxu0
      %v394 = vmul.f32 %v389, 0.35355338
      %v395 = vadd.f32 %v394, %v338
      %v396 = vsel %vm347, %v395, -inf
      %397 = vmax.xlane.f32.xlu0 %v396
      %v398 = vpop.xlane.xlu0 %397
      %v399 = vsub.f32 %v395, %v398
      %v400 = vmul.f32 %v399, 1.442695
      %v401 = vpow.pop %v400
      %v402 = vsel %vm347, %v401, 0.0
      %403 = vadd.xlane.f32.xlu0 %v402
      %v404 = vpop.xlane.xlu0 %403
      %v405 = vrcp.pop %v404
      %v406 = vmul.f32 %v401, %v405
      %v407 = vpack.c.bf16 %v406, %v406
      %v408 = vpack.c.bf16 %v337, %v337
      %v410 = vsel %vm347, %v407, 0
      %vm412 = vcmask 1043456
      %v414 = vsel %vm412, %v408, 0
      %416 = vmatprep.subr.bf16.mxu0 0
      %417 = vmatpush1.bf16.msra.mxu0 0
      %418 = vmatprep.subr.bf16.mxu0 0
      %419 = vmatpush1.bf16.msra.mxu0 0
      %420 = vmatprep.subr.bf16.mxu0 0
      %421 = vmatpush1.bf16.msra.mxu0 0
      %422 = vmatprep.subr.bf16.mxu0 0
      %423 = vmatpush1.bf16.msra.mxu0 0
      %424 = vmatprep.subr.bf16.mxu0 0
      %425 = vmatpush1.bf16.msra.mxu0 0
      %426 = vmatprep.subr.bf16.mxu0 0
      %427 = vmatpush1.bf16.msra.mxu0 0
      %428 = vmatprep.subr.bf16.mxu0 0
      %429 = vmatpush1.bf16.msra.mxu0 0
      %430 = vmatprep.subr.bf16.mxu0 0
      %431 = vmatpush1.bf16.msra.mxu0 %v414
      %432 = vmatprep.subr.bf16.mxu0 0
      %433 = vmatpush2.bf16.msra.mxu0 0
      %434 = vmatprep.subr.bf16.mxu0 0
      %435 = vmatpush2.bf16.msra.mxu0 0
      %436 = vmatprep.subr.bf16.mxu0 0
      %437 = vmatpush2.bf16.msra.mxu0 0
      %438 = vmatprep.subr.bf16.mxu0 0
      %439 = vmatpush2.bf16.msra.mxu0 0
      %440 = vmatprep.subr.bf16.mxu0 0
      %441 = vmatpush2.bf16.msra.mxu0 0
      %442 = vmatprep.subr.bf16.mxu0 0
      %443 = vmatpush2.bf16.msra.mxu0 0
      %444 = vmatprep.subr.bf16.mxu0 0
      %445 = vmatpush2.bf16.msra.mxu0 0
      %446 = vmatprep.subr.bf16.mxu0 0
      %447 = vmatpush2.bf16.msra.mxu0 0
      %448 = vmatprep.mubr.bf16.mxu0 0
      %449 = vmatmul.mubr.bf16.gmra.mxu0 %v410
      %v450 = vpop.f32.mrf.mxu0
      %v451 = vadd.f32 0.0, %v450
      %v452 = vpop.f32.mrf.mxu0
      %v453 = vpop.f32.mrf.mxu0
      %v454 = vpop.f32.mrf.mxu0
      %455 = vdwg.mxu0
      %v456 = vpack.c.bf16 %v451, %v451
      %v457 = vpack.c.bf16 %v339, %v339
      %458 = vrot.lane.b32.xlu0 %v343, 120
      %v459 = vpop.permute.xlu0 %458
      %460 = vrot.lane.b32.xlu0 %v343, 88
      %v461 = vpop.permute.xlu0 %460
      %v463 = vsel %vm347, %v459, 0
      %v466 = vsel %vm347, %v461, 0
      %468 = vmatprep.subr.bf16.mxu0 0
      %469 = vmatpush1.bf16.xpose.msra.mxu0 0
      %470 = vmatprep.subr.bf16.mxu0 0
      %471 = vmatpush1.bf16.xpose.msra.mxu0 0
      %472 = vmatprep.subr.bf16.mxu0 0
      %473 = vmatpush1.bf16.xpose.msra.mxu0 0
      %474 = vmatprep.subr.bf16.mxu0 0
      %475 = vmatpush1.bf16.xpose.msra.mxu0 0
      %476 = vmatprep.subr.bf16.mxu0 0
      %477 = vmatpush1.bf16.xpose.msra.mxu0 0
      %478 = vmatprep.subr.bf16.mxu0 0
      %479 = vmatpush1.bf16.xpose.msra.mxu0 0
      %480 = vmatprep.subr.bf16.mxu0 0
      %481 = vmatpush1.bf16.xpose.msra.mxu0 0
      %482 = vmatprep.subr.bf16.mxu0 0
      %483 = vmatpush1.bf16.xpose.msra.mxu0 %v466
      %484 = vmatprep.subr.bf16.mxu0 0
      %485 = vmatpush2.bf16.xpose.msra.mxu0 0
      %486 = vmatprep.subr.bf16.mxu0 0
      %487 = vmatpush2.bf16.xpose.msra.mxu0 0
      %488 = vmatprep.subr.bf16.mxu0 0
      %489 = vmatpush2.bf16.xpose.msra.mxu0 0
      %490 = vmatprep.subr.bf16.mxu0 0
      %491 = vmatpush2.bf16.xpose.msra.mxu0 0
      %492 = vmatprep.subr.bf16.mxu0 0
      %493 = vmatpush2.bf16.xpose.msra.mxu0 0
      %494 = vmatprep.subr.bf16.mxu0 0
      %495 = vmatpush2.bf16.xpose.msra.mxu0 0
      %496 = vmatprep.subr.bf16.mxu0 0
      %497 = vmatpush2.bf16.xpose.msra.mxu0 0
      %498 = vmatprep.subr.bf16.mxu0 0
      %499 = vmatpush2.bf16.xpose.msra.mxu0 0
      %500 = vmatprep.mubr.bf16.mxu0 0
      %501 = vmatmul.mubr.bf16.gmra.mxu0 %v463
      %v502 = vpop.f32.mrf.mxu0
      %v503 = vadd.f32 0.0, %v502
      %v504 = vpop.f32.mrf.mxu0
      %v505 = vpop.f32.mrf.mxu0
      %v506 = vpop.f32.mrf.mxu0
      %507 = vdwg.mxu0
      %v508 = vmul.f32 %v503, 0.35355338
      %v509 = vadd.f32 %v508, %v338
      %v510 = vsel %vm347, %v509, -inf
      %511 = vmax.xlane.f32.xlu0 %v510
      %v512 = vpop.xlane.xlu0 %511
      %v513 = vsub.f32 %v509, %v512
      %v514 = vmul.f32 %v513, 1.442695
      %v515 = vpow.pop %v514
      %v516 = vsel %vm347, %v515, 0.0
      %517 = vadd.xlane.f32.xlu0 %v516
      %v518 = vpop.xlane.xlu0 %517
      %v519 = vrcp.pop %v518
      %v520 = vmul.f32 %v515, %v519
      %v521 = vpack.c.bf16 %v520, %v520
      %523 = vrot.lane.b32.xlu0 %v408, 120
      %v524 = vpop.permute.xlu0 %523
      %v526 = vsel %vm347, %v521, 0
      %v529 = vsel %vm412, %v524, 0
      %531 = vmatprep.subr.bf16.mxu0 0
      %532 = vmatpush1.bf16.msra.mxu0 0
      %533 = vmatprep.subr.bf16.mxu0 0
      %534 = vmatpush1.bf16.msra.mxu0 0
      %535 = vmatprep.subr.bf16.mxu0 0
      %536 = vmatpush1.bf16.msra.mxu0 0
      %537 = vmatprep.subr.bf16.mxu0 0
      %538 = vmatpush1.bf16.msra.mxu0 0
      %539 = vmatprep.subr.bf16.mxu0 0
      %540 = vmatpush1.bf16.msra.mxu0 0
      %541 = vmatprep.subr.bf16.mxu0 0
      %542 = vmatpush1.bf16.msra.mxu0 0
      %543 = vmatprep.subr.bf16.mxu0 0
      %544 = vmatpush1.bf16.msra.mxu0 0
      %545 = vmatprep.subr.bf16.mxu0 0
      %546 = vmatpush1.bf16.msra.mxu0 %v529
      %547 = vmatprep.subr.bf16.mxu0 0
      %548 = vmatpush2.bf16.msra.mxu0 0
      %549 = vmatprep.subr.bf16.mxu0 0
      %550 = vmatpush2.bf16.msra.mxu0 0
      %551 = vmatprep.subr.bf16.mxu0 0
      %552 = vmatpush2.bf16.msra.mxu0 0
      %553 = vmatprep.subr.bf16.mxu0 0
      %554 = vmatpush2.bf16.msra.mxu0 0
      %555 = vmatprep.subr.bf16.mxu0 0
      %556 = vmatpush2.bf16.msra.mxu0 0
      %557 = vmatprep.subr.bf16.mxu0 0
      %558 = vmatpush2.bf16.msra.mxu0 0
      %559 = vmatprep.subr.bf16.mxu0 0
      %560 = vmatpush2.bf16.msra.mxu0 0
      %561 = vmatprep.subr.bf16.mxu0 0
      %562 = vmatpush2.bf16.msra.mxu0 0
      %563 = vmatprep.mubr.bf16.mxu0 0
      %564 = vmatmul.mubr.bf16.gmra.mxu0 %v526
      %v565 = vpop.f32.mrf.mxu0
      %v566 = vadd.f32 0.0, %v565
      %v567 = vpop.f32.mrf.mxu0
      %v568 = vpop.f32.mrf.mxu0
      %v569 = vpop.f32.mrf.mxu0
      %570 = vdwg.mxu0
      %v571 = vpack.c.bf16 %v566, %v566
      %v572 = vpack.c.bf16 %v340, %v340
      %v574 = vsel %vm347, %v571, 0
      %v577 = vsel %vm412, %v572, 0
      %579 = vmatprep.subr.bf16.mxu0 0
      %580 = vmatpush1.bf16.msra.mxu0 0
      %581 = vmatprep.subr.bf16.mxu0 0
      %582 = vmatpush1.bf16.msra.mxu0 0
      %583 = vmatprep.subr.bf16.mxu0 0
      %584 = vmatpush1.bf16.msra.mxu0 0
      %585 = vmatprep.subr.bf16.mxu0 0
      %586 = vmatpush1.bf16.msra.mxu0 0
      %587 = vmatprep.subr.bf16.mxu0 0
      %588 = vmatpush1.bf16.msra.mxu0 0
      %589 = vmatprep.subr.bf16.mxu0 0
      %590 = vmatpush1.bf16.msra.mxu0 0
      %591 = vmatprep.subr.bf16.mxu0 0
      %592 = vmatpush1.bf16.msra.mxu0 0
      %593 = vmatprep.subr.bf16.mxu0 0
      %594 = vmatpush1.bf16.msra.mxu0 %v577
      %595 = vmatprep.subr.bf16.mxu0 0
      %596 = vmatpush2.bf16.msra.mxu0 0
      %597 = vmatprep.subr.bf16.mxu0 0
      %598 = vmatpush2.bf16.msra.mxu0 0
      %599 = vmatprep.subr.bf16.mxu0 0
      %600 = vmatpush2.bf16.msra.mxu0 0
      %601 = vmatprep.subr.bf16.mxu0 0
      %602 = vmatpush2.bf16.msra.mxu0 0
      %603 = vmatprep.subr.bf16.mxu0 0
      %604 = vmatpush2.bf16.msra.mxu0 0
      %605 = vmatprep.subr.bf16.mxu0 0
      %606 = vmatpush2.bf16.msra.mxu0 0
      %607 = vmatprep.subr.bf16.mxu0 0
      %608 = vmatpush2.bf16.msra.mxu0 0
      %609 = vmatprep.subr.bf16.mxu0 0
      %610 = vmatpush2.bf16.msra.mxu0 0
      %611 = vmatprep.mubr.bf16.mxu0 0
      %612 = vmatmul.mubr.bf16.gmra.mxu0 %v574
      %v613 = vpop.f32.mrf.mxu0
      %v614 = vadd.f32 0.0, %v613
      %v615 = vpop.f32.mrf.mxu0
      %v616 = vpop.f32.mrf.mxu0
      %v617 = vpop.f32.mrf.mxu0
      %618 = vdwg.mxu0
      %v620 = vsel %vm347, %v456, 0
      %v623 = vsel %vm412, %v457, 0
      %625 = vmatprep.subr.bf16.mxu0 0
      %626 = vmatpush1.bf16.msra.mxu0 0
      %627 = vmatprep.subr.bf16.mxu0 0
      %628 = vmatpush1.bf16.msra.mxu0 0
      %629 = vmatprep.subr.bf16.mxu0 0
      %630 = vmatpush1.bf16.msra.mxu0 0
      %631 = vmatprep.subr.bf16.mxu0 0
      %632 = vmatpush1.bf16.msra.mxu0 0
      %633 = vmatprep.subr.bf16.mxu0 0
      %634 = vmatpush1.bf16.msra.mxu0 0
      %635 = vmatprep.subr.bf16.mxu0 0
      %636 = vmatpush1.bf16.msra.mxu0 0
      %637 = vmatprep.subr.bf16.mxu0 0
      %638 = vmatpush1.bf16.msra.mxu0 0
      %639 = vmatprep.subr.bf16.mxu0 0
      %640 = vmatpush1.bf16.msra.mxu0 %v623
      %641 = vmatprep.subr.bf16.mxu0 0
      %642 = vmatpush2.bf16.msra.mxu0 0
      %643 = vmatprep.subr.bf16.mxu0 0
      %644 = vmatpush2.bf16.msra.mxu0 0
      %645 = vmatprep.subr.bf16.mxu0 0
      %646 = vmatpush2.bf16.msra.mxu0 0
      %647 = vmatprep.subr.bf16.mxu0 0
      %648 = vmatpush2.bf16.msra.mxu0 0
      %649 = vmatprep.subr.bf16.mxu0 0
      %650 = vmatpush2.bf16.msra.mxu0 0
      %651 = vmatprep.subr.bf16.mxu0 0
      %652 = vmatpush2.bf16.msra.mxu0 0
      %653 = vmatprep.subr.bf16.mxu0 0
      %654 = vmatpush2.bf16.msra.mxu0 0
      %655 = vmatprep.subr.bf16.mxu0 0
      %656 = vmatpush2.bf16.msra.mxu0 0
      %657 = vmatprep.mubr.bf16.mxu0 0
      %658 = vmatmul.mubr.bf16.gmra.mxu0 %v620
      %v659 = vpop.f32.mrf.mxu0
      %v660 = vadd.f32 %v614, %v659
      %v661 = vpop.f32.mrf.mxu0
      %v662 = vpop.f32.mrf.mxu0
      %v663 = vpop.f32.mrf.mxu0
      %664 = vdwg.mxu0
      %665 = vrot.lane.b32.xlu0 %v343, 112
      %v666 = vpop.permute.xlu0 %665
      %667 = vrot.lane.b32.xlu0 %v343, 80
      %v668 = vpop.permute.xlu0 %667
      %v670 = vsel %vm347, %v666, 0
      %v673 = vsel %vm347, %v668, 0
      %675 = vmatprep.subr.bf16.mxu0 0
      %676 = vmatpush1.bf16.xpose.msra.mxu0 0
      %677 = vmatprep.subr.bf16.mxu0 0
      %678 = vmatpush1.bf16.xpose.msra.mxu0 0
      %679 = vmatprep.subr.bf16.mxu0 0
      %680 = vmatpush1.bf16.xpose.msra.mxu0 0
      %681 = vmatprep.subr.bf16.mxu0 0
      %682 = vmatpush1.bf16.xpose.msra.mxu0 0
      %683 = vmatprep.subr.bf16.mxu0 0
      %684 = vmatpush1.bf16.xpose.msra.mxu0 0
      %685 = vmatprep.subr.bf16.mxu0 0
      %686 = vmatpush1.bf16.xpose.msra.mxu0 0
      %687 = vmatprep.subr.bf16.mxu0 0
      %688 = vmatpush1.bf16.xpose.msra.mxu0 0
      %689 = vmatprep.subr.bf16.mxu0 0
      %690 = vmatpush1.bf16.xpose.msra.mxu0 %v673
      %691 = vmatprep.subr.bf16.mxu0 0
      %692 = vmatpush2.bf16.xpose.msra.mxu0 0
      %693 = vmatprep.subr.bf16.mxu0 0
      %694 = vmatpush2.bf16.xpose.msra.mxu0 0
      %695 = vmatprep.subr.bf16.mxu0 0
      %696 = vmatpush2.bf16.xpose.msra.mxu0 0
      %697 = vmatprep.subr.bf16.mxu0 0
      %698 = vmatpush2.bf16.xpose.msra.mxu0 0
      %699 = vmatprep.subr.bf16.mxu0 0
      %700 = vmatpush2.bf16.xpose.msra.mxu0 0
      %701 = vmatprep.subr.bf16.mxu0 0
      %702 = vmatpush2.bf16.xpose.msra.mxu0 0
      %703 = vmatprep.subr.bf16.mxu0 0
      %704 = vmatpush2.bf16.xpose.msra.mxu0 0
      %705 = vmatprep.subr.bf16.mxu0 0
      %706 = vmatpush2.bf16.xpose.msra.mxu0 0
      %707 = vmatprep.mubr.bf16.mxu0 0
      %708 = vmatmul.mubr.bf16.gmra.mxu0 %v670
      %v709 = vpop.f32.mrf.mxu0
      %v710 = vadd.f32 0.0, %v709
      %v711 = vpop.f32.mrf.mxu0
      %v712 = vpop.f32.mrf.mxu0
      %v713 = vpop.f32.mrf.mxu0
      %714 = vdwg.mxu0
      %v715 = vmul.f32 %v710, 0.35355338
      %v716 = vadd.f32 %v715, %v338
      %v717 = vsel %vm347, %v716, -inf
      %718 = vmax.xlane.f32.xlu0 %v717
      %v719 = vpop.xlane.xlu0 %718
      %v720 = vsub.f32 %v716, %v719
      %v721 = vmul.f32 %v720, 1.442695
      %v722 = vpow.pop %v721
      %v723 = vsel %vm347, %v722, 0.0
      %724 = vadd.xlane.f32.xlu0 %v723
      %v725 = vpop.xlane.xlu0 %724
      %v726 = vrcp.pop %v725
      %v727 = vmul.f32 %v722, %v726
      %v728 = vpack.c.bf16 %v727, %v727
      %729 = vrot.lane.b32.xlu0 %v408, 112
      %v730 = vpop.permute.xlu0 %729
      %v732 = vsel %vm347, %v728, 0
      %v735 = vsel %vm412, %v730, 0
      %737 = vmatprep.subr.bf16.mxu0 0
      %738 = vmatpush1.bf16.msra.mxu0 0
      %739 = vmatprep.subr.bf16.mxu0 0
      %740 = vmatpush1.bf16.msra.mxu0 0
      %741 = vmatprep.subr.bf16.mxu0 0
      %742 = vmatpush1.bf16.msra.mxu0 0
      %743 = vmatprep.subr.bf16.mxu0 0
      %744 = vmatpush1.bf16.msra.mxu0 0
      %745 = vmatprep.subr.bf16.mxu0 0
      %746 = vmatpush1.bf16.msra.mxu0 0
      %747 = vmatprep.subr.bf16.mxu0 0
      %748 = vmatpush1.bf16.msra.mxu0 0
      %749 = vmatprep.subr.bf16.mxu0 0
      %750 = vmatpush1.bf16.msra.mxu0 0
      %751 = vmatprep.subr.bf16.mxu0 0
      %752 = vmatpush1.bf16.msra.mxu0 %v735
      %753 = vmatprep.subr.bf16.mxu0 0
      %754 = vmatpush2.bf16.msra.mxu0 0
      %755 = vmatprep.subr.bf16.mxu0 0
      %756 = vmatpush2.bf16.msra.mxu0 0
      %757 = vmatprep.subr.bf16.mxu0 0
      %758 = vmatpush2.bf16.msra.mxu0 0
      %759 = vmatprep.subr.bf16.mxu0 0
      %760 = vmatpush2.bf16.msra.mxu0 0
      %761 = vmatprep.subr.bf16.mxu0 0
      %762 = vmatpush2.bf16.msra.mxu0 0
      %763 = vmatprep.subr.bf16.mxu0 0
      %764 = vmatpush2.bf16.msra.mxu0 0
      %765 = vmatprep.subr.bf16.mxu0 0
      %766 = vmatpush2.bf16.msra.mxu0 0
      %767 = vmatprep.subr.bf16.mxu0 0
      %768 = vmatpush2.bf16.msra.mxu0 0
      %769 = vmatprep.mubr.bf16.mxu0 0
      %770 = vmatmul.mubr.bf16.gmra.mxu0 %v732
      %v771 = vpop.f32.mrf.mxu0
      %v772 = vadd.f32 0.0, %v771
      %v773 = vpop.f32.mrf.mxu0
      %v774 = vpop.f32.mrf.mxu0
      %v775 = vpop.f32.mrf.mxu0
      %776 = vdwg.mxu0
      %v777 = vpack.c.bf16 %v772, %v772
      %v778 = vpack.c.bf16 %v341, %v341
      %v780 = vsel %vm347, %v777, 0
      %v783 = vsel %vm412, %v778, 0
      %785 = vmatprep.subr.bf16.mxu0 0
      %786 = vmatpush1.bf16.msra.mxu0 0
      %787 = vmatprep.subr.bf16.mxu0 0
      %788 = vmatpush1.bf16.msra.mxu0 0
      %789 = vmatprep.subr.bf16.mxu0 0
      %790 = vmatpush1.bf16.msra.mxu0 0
      %791 = vmatprep.subr.bf16.mxu0 0
      %792 = vmatpush1.bf16.msra.mxu0 0
      %793 = vmatprep.subr.bf16.mxu0 0
      %794 = vmatpush1.bf16.msra.mxu0 0
      %795 = vmatprep.subr.bf16.mxu0 0
      %796 = vmatpush1.bf16.msra.mxu0 0
      %797 = vmatprep.subr.bf16.mxu0 0
      %798 = vmatpush1.bf16.msra.mxu0 0
      %799 = vmatprep.subr.bf16.mxu0 0
      %800 = vmatpush1.bf16.msra.mxu0 %v783
      %801 = vmatprep.subr.bf16.mxu0 0
      %802 = vmatpush2.bf16.msra.mxu0 0
      %803 = vmatprep.subr.bf16.mxu0 0
      %804 = vmatpush2.bf16.msra.mxu0 0
      %805 = vmatprep.subr.bf16.mxu0 0
      %806 = vmatpush2.bf16.msra.mxu0 0
      %807 = vmatprep.subr.bf16.mxu0 0
      %808 = vmatpush2.bf16.msra.mxu0 0
      %809 = vmatprep.subr.bf16.mxu0 0
      %810 = vmatpush2.bf16.msra.mxu0 0
      %811 = vmatprep.subr.bf16.mxu0 0
      %812 = vmatpush2.bf16.msra.mxu0 0
      %813 = vmatprep.subr.bf16.mxu0 0
      %814 = vmatpush2.bf16.msra.mxu0 0
      %815 = vmatprep.subr.bf16.mxu0 0
      %816 = vmatpush2.bf16.msra.mxu0 0
      %817 = vmatprep.mubr.bf16.mxu0 0
      %818 = vmatmul.mubr.bf16.gmra.mxu0 %v780
      %v819 = vpop.f32.mrf.mxu0
      %v820 = vadd.f32 0.0, %v819
      %v821 = vpop.f32.mrf.mxu0
      %v822 = vpop.f32.mrf.mxu0
      %v823 = vpop.f32.mrf.mxu0
      %824 = vdwg.mxu0
      %v825 = vadd.f32 %v660, %v820
      %826 = vrot.lane.b32.xlu0 %v343, 104
      %v827 = vpop.permute.xlu0 %826
      %828 = vrot.lane.b32.xlu0 %v343, 72
      %v829 = vpop.permute.xlu0 %828
      %v831 = vsel %vm347, %v827, 0
      %v834 = vsel %vm347, %v829, 0
      %836 = vmatprep.subr.bf16.mxu0 0
      %837 = vmatpush1.bf16.xpose.msra.mxu0 0
      %838 = vmatprep.subr.bf16.mxu0 0
      %839 = vmatpush1.bf16.xpose.msra.mxu0 0
      %840 = vmatprep.subr.bf16.mxu0 0
      %841 = vmatpush1.bf16.xpose.msra.mxu0 0
      %842 = vmatprep.subr.bf16.mxu0 0
      %843 = vmatpush1.bf16.xpose.msra.mxu0 0
      %844 = vmatprep.subr.bf16.mxu0 0
      %845 = vmatpush1.bf16.xpose.msra.mxu0 0
      %846 = vmatprep.subr.bf16.mxu0 0
      %847 = vmatpush1.bf16.xpose.msra.mxu0 0
      %848 = vmatprep.subr.bf16.mxu0 0
      %849 = vmatpush1.bf16.xpose.msra.mxu0 0
      %850 = vmatprep.subr.bf16.mxu0 0
      %851 = vmatpush1.bf16.xpose.msra.mxu0 %v834
      %852 = vmatprep.subr.bf16.mxu0 0
      %853 = vmatpush2.bf16.xpose.msra.mxu0 0
      %854 = vmatprep.subr.bf16.mxu0 0
      %855 = vmatpush2.bf16.xpose.msra.mxu0 0
      %856 = vmatprep.subr.bf16.mxu0 0
      %857 = vmatpush2.bf16.xpose.msra.mxu0 0
      %858 = vmatprep.subr.bf16.mxu0 0
      %859 = vmatpush2.bf16.xpose.msra.mxu0 0
      %860 = vmatprep.subr.bf16.mxu0 0
      %861 = vmatpush2.bf16.xpose.msra.mxu0 0
      %862 = vmatprep.subr.bf16.mxu0 0
      %863 = vmatpush2.bf16.xpose.msra.mxu0 0
      %864 = vmatprep.subr.bf16.mxu0 0
      %865 = vmatpush2.bf16.xpose.msra.mxu0 0
      %866 = vmatprep.subr.bf16.mxu0 0
      %867 = vmatpush2.bf16.xpose.msra.mxu0 0
      %868 = vmatprep.mubr.bf16.mxu0 0
      %869 = vmatmul.mubr.bf16.gmra.mxu0 %v831
      %v870 = vpop.f32.mrf.mxu0
      %v871 = vadd.f32 0.0, %v870
      %v872 = vpop.f32.mrf.mxu0
      %v873 = vpop.f32.mrf.mxu0
      %v874 = vpop.f32.mrf.mxu0
      %875 = vdwg.mxu0
      %v876 = vmul.f32 %v871, 0.35355338
      %v877 = vadd.f32 %v876, %v338
      %v878 = vsel %vm347, %v877, -inf
      %879 = vmax.xlane.f32.xlu0 %v878
      %v880 = vpop.xlane.xlu0 %879
      %v881 = vsub.f32 %v877, %v880
      %v882 = vmul.f32 %v881, 1.442695
      %v883 = vpow.pop %v882
      %v884 = vsel %vm347, %v883, 0.0
      %885 = vadd.xlane.f32.xlu0 %v884
      %v886 = vpop.xlane.xlu0 %885
      %v887 = vrcp.pop %v886
      %v888 = vmul.f32 %v883, %v887
      %v889 = vpack.c.bf16 %v888, %v888
      %890 = vrot.lane.b32.xlu0 %v408, 104
      %v891 = vpop.permute.xlu0 %890
      %v893 = vsel %vm347, %v889, 0
      %v896 = vsel %vm412, %v891, 0
      %898 = vmatprep.subr.bf16.mxu0 0
      %899 = vmatpush1.bf16.msra.mxu0 0
      %900 = vmatprep.subr.bf16.mxu0 0
      %901 = vmatpush1.bf16.msra.mxu0 0
      %902 = vmatprep.subr.bf16.mxu0 0
      %903 = vmatpush1.bf16.msra.mxu0 0
      %904 = vmatprep.subr.bf16.mxu0 0
      %905 = vmatpush1.bf16.msra.mxu0 0
      %906 = vmatprep.subr.bf16.mxu0 0
      %907 = vmatpush1.bf16.msra.mxu0 0
      %908 = vmatprep.subr.bf16.mxu0 0
      %909 = vmatpush1.bf16.msra.mxu0 0
      %910 = vmatprep.subr.bf16.mxu0 0
      %911 = vmatpush1.bf16.msra.mxu0 0
      %912 = vmatprep.subr.bf16.mxu0 0
      %913 = vmatpush1.bf16.msra.mxu0 %v896
      %914 = vmatprep.subr.bf16.mxu0 0
      %915 = vmatpush2.bf16.msra.mxu0 0
      %916 = vmatprep.subr.bf16.mxu0 0
      %917 = vmatpush2.bf16.msra.mxu0 0
      %918 = vmatprep.subr.bf16.mxu0 0
      %919 = vmatpush2.bf16.msra.mxu0 0
      %920 = vmatprep.subr.bf16.mxu0 0
      %921 = vmatpush2.bf16.msra.mxu0 0
      %922 = vmatprep.subr.bf16.mxu0 0
      %923 = vmatpush2.bf16.msra.mxu0 0
      %924 = vmatprep.subr.bf16.mxu0 0
      %925 = vmatpush2.bf16.msra.mxu0 0
      %926 = vmatprep.subr.bf16.mxu0 0
      %927 = vmatpush2.bf16.msra.mxu0 0
      %928 = vmatprep.subr.bf16.mxu0 0
      %929 = vmatpush2.bf16.msra.mxu0 0
      %930 = vmatprep.mubr.bf16.mxu0 0
      %931 = vmatmul.mubr.bf16.gmra.mxu0 %v893
      %v932 = vpop.f32.mrf.mxu0
      %v933 = vadd.f32 0.0, %v932
      %v934 = vpop.f32.mrf.mxu0
      %v935 = vpop.f32.mrf.mxu0
      %v936 = vpop.f32.mrf.mxu0
      %937 = vdwg.mxu0
      %v938 = vpack.c.bf16 %v933, %v933
      %v939 = vpack.c.bf16 %v342, %v342
      %v941 = vsel %vm347, %v938, 0
      %v944 = vsel %vm412, %v939, 0
      %946 = vmatprep.subr.bf16.mxu0 0
      %947 = vmatpush1.bf16.msra.mxu0 0
      %948 = vmatprep.subr.bf16.mxu0 0
      %949 = vmatpush1.bf16.msra.mxu0 0
      %950 = vmatprep.subr.bf16.mxu0 0
      %951 = vmatpush1.bf16.msra.mxu0 0
      %952 = vmatprep.subr.bf16.mxu0 0
      %953 = vmatpush1.bf16.msra.mxu0 0
      %954 = vmatprep.subr.bf16.mxu0 0
      %955 = vmatpush1.bf16.msra.mxu0 0
      %956 = vmatprep.subr.bf16.mxu0 0
      %957 = vmatpush1.bf16.msra.mxu0 0
      %958 = vmatprep.subr.bf16.mxu0 0
      %959 = vmatpush1.bf16.msra.mxu0 0
      %960 = vmatprep.subr.bf16.mxu0 0
      %961 = vmatpush1.bf16.msra.mxu0 %v944
      %962 = vmatprep.subr.bf16.mxu0 0
      %963 = vmatpush2.bf16.msra.mxu0 0
      %964 = vmatprep.subr.bf16.mxu0 0
      %965 = vmatpush2.bf16.msra.mxu0 0
      %966 = vmatprep.subr.bf16.mxu0 0
      %967 = vmatpush2.bf16.msra.mxu0 0
      %968 = vmatprep.subr.bf16.mxu0 0
      %969 = vmatpush2.bf16.msra.mxu0 0
      %970 = vmatprep.subr.bf16.mxu0 0
      %971 = vmatpush2.bf16.msra.mxu0 0
      %972 = vmatprep.subr.bf16.mxu0 0
      %973 = vmatpush2.bf16.msra.mxu0 0
      %974 = vmatprep.subr.bf16.mxu0 0
      %975 = vmatpush2.bf16.msra.mxu0 0
      %976 = vmatprep.subr.bf16.mxu0 0
      %977 = vmatpush2.bf16.msra.mxu0 0
      %978 = vmatprep.mubr.bf16.mxu0 0
      %979 = vmatmul.mubr.bf16.gmra.mxu0 %v941
      %v980 = vpop.f32.mrf.mxu0
      %v981 = vadd.f32 0.0, %v980
      %v982 = vpop.f32.mrf.mxu0
      %v983 = vpop.f32.mrf.mxu0
      %v984 = vpop.f32.mrf.mxu0
      %985 = vdwg.mxu0
      %v986 = vadd.f32 %v825, %v981
      %v987 = vld [vmem:[%s5] sm:$0x1]
      %v989 = vlaneseq
      %v990 = vshrl.u32 %v989, 7
      %v991 = vsub.s32 0, %v990
      %v992 = vrot.slane %v987, %v991
      %v994 = vadd.f32 %v986, %v992
      %v995 = vld [vmem:[%s330] sm:$0xff]
      %v996 = vadd.f32 %v994, %v995
      %vm997 = vcmask 261120
      %v998 = vsel %vm997, %v996, 0.0
      %999 = vadd.xlane.f32.xlu0 %v998
      %v1000 = vpop.xlane.xlu0 %999
      %v1001 = vrcp.pop 32.0
      %v1002 = vmul.f32 %v1000, %v1001
      %v1003 = vsub.f32 %v996, %v1002
      %v1004 = vmul.f32 %v1003, %v1003
      %v1005 = vsel %vm997, %v1004, 0.0
      %1006 = vadd.xlane.f32.xlu0 %v1005
      %v1007 = vpop.xlane.xlu0 %1006
      %v1008 = vmul.f32 %v1007, %v1001
      %v1009 = vadd.f32 %v1008, 1e-05
      %v1010 = vrsqrt.pop %v1009
      %v1011 = vmul.f32 %v1003, %v1010
      %v1012 = vld [vmem:[%s6] sm:$0x1]
      %v1014 = vlaneseq
      %v1015 = vshrl.u32 %v1014, 7
      %v1016 = vsub.s32 0, %v1015
      %v1017 = vrot.slane %v1012, %v1016
      %v1019 = vmul.f32 %v1011, %v1017
      %v1020 = vld [vmem:[%s7] sm:$0x1]
      %v1022 = vlaneseq
      %v1023 = vshrl.u32 %v1022, 7
      %v1024 = vsub.s32 0, %v1023
      %v1025 = vrot.slane %v1020, %v1024
      %v1027 = vadd.f32 %v1019, %v1025
      %1028 = vst.msk [vmem:[%s334] sm:$0xff] %vm997, %v1027
      %p1029 = scmp.lt.s32.totalorder %s19, 1
      %s1030 = scalar_select %p1029, %s19, 1
      %s1031 = smul.addr %s1030, 8
      %s1032 = scalar_lea.vmem %s8, %s1031
      // Predicated region
      $region53: #{decoder_forward.19} parent=51 // pred_check
        %p1033 = pneg %p220
      $region54: #{decoder_forward.19} parent=51 // pred_check_branch
        %1035 = sbr.rel (%p1033) target = $region56
      $region55: #{decoder_forward.19} parent=51 // pred_region
        _
      $region56: #{decoder_forward.19} parent=51 // pred_fallthru
        _
    $region52: #{decoder_forward.19} parent=5 // pred_fallthru
      _
    %p1036 = scmp.le.s32.totalorder 2, %s14
    // Predicated region
    $region57: #{decoder_forward.19} parent=5 // pred_check
      %p1037 = pneg %p1036
    $region58: #{decoder_forward.19} parent=5 // pred_check_branch
      %1039 = sbr.rel (%p1037) target = $region60
    $region59: #{decoder_forward.19} parent=5 // pred_region
      %s1040 = ssub.s32 %s14, 2
      // Predicated region
      $region61: #{decoder_forward.19} parent=59 // pred_check
        %p1041 = pneg %p226
      $region62: #{decoder_forward.19} parent=59 // pred_check_branch
        %1043 = sbr.rel (%p1041) target = $region64
      $region63: #{decoder_forward.19} parent=59 // pred_region
        %p1044 = scmp.lt.s32.totalorder %s20, 1
        %s1045 = scalar_select %p1044, %s20, 1
        %s1046 = smul.addr %s1045, 8
        %s1047 = scalar_lea.vmem %s8, %s1046
      $region64: #{decoder_forward.19} parent=59 // pred_fallthru
        _
    $region60: #{decoder_forward.19} parent=5 // pred_fallthru
      _
  $region6: #{decoder_forward.19} parent=0 // loop_footer
    %s18 = sadd.s32 1, %s14
  $region7: #{decoder_forward.19} parent=0 // loop_footer_branch
    %13 = sbr.rel target = $region3
  $region8: #{decoder_forward.19} parent=0 // loop_exit
    _

// kernel: decoder_forward.27
$region0: #{decoder_forward.27}
  #allocation0 [shape = 'u32[]', space=smem, size = 0x4, offset = 0x4, fixed_abs, tag = 'smem constant byte address 0x4 - core index']
  #allocation1 [shape = 'u32[144,128]{1,0:T(1,128)}', space=vmem, size = 0x12000, scoped, tag = 'internal scratch']
  #allocation2 [shape = 'f32[16,16]{1,0:T(8,128)}', space=vmem, size = 0x2000, scoped, tag = 'scratch operand']
  %s0 = inlined_call_operand.vmem [shape: f32[16,32], index: 0, kind: input, shape index: {}]
  %s1 = inlined_call_operand.vmem [shape: f32[32,16], index: 1, kind: input, shape index: {}]
  %s2 = inlined_call_operand.vmem [shape: f32[1,16], index: 2, kind: input, shape index: {}]
  %s3 = inlined_call_operand.hbm [shape: f32[16,16], index: 3, kind: output, shape index: {}]
  %s4 = sld [smem:[#allocation0]]
  $region30: #{decoder_forward.27} parent=0
    _
  %s6 = ssub.s32 1, %s4
  %s7 = scalar_select 0, %s6, %s4
  $region1: #{decoder_forward.27} parent=0
    #allocation3 [shape = 'u8[8192]{0}', space=vmem, size = 0x2000, scoped, tag = 'output window, operand 0, single buffered']
    #allocation4 [shape = 's32[1]{0}', space=sflag, size = 0x4, scoped, tag = 'scoped memory for decoder_forward.27']
    %8 = vsyncpa [#allocation4], 0
    // Predicated region
    $region2: #{decoder_forward.27} parent=1 // pred_check
      _
    $region3: #{decoder_forward.27} parent=1 // pred_check_branch
      %10 = sbr.rel (0) target = $region5
    $region4: #{decoder_forward.27} parent=1 // pred_region
      _
    $region5: #{decoder_forward.27} parent=1 // pred_fallthru
      _
    // Predicated region
    $region6: #{decoder_forward.27} parent=1 // pred_check
      _
    $region7: #{decoder_forward.27} parent=1 // pred_check_branch
      %12 = sbr.rel (0) target = $region9
    $region8: #{decoder_forward.27} parent=1 // pred_region
      _
    $region9: #{decoder_forward.27} parent=1 // pred_fallthru
      _
    // Predicated region
    $region10: #{decoder_forward.27} parent=1 // pred_check
      _
    $region11: #{decoder_forward.27} parent=1 // pred_check_branch
      %14 = sbr.rel (0) target = $region13
    $region12: #{decoder_forward.27} parent=1 // pred_region
      _
    $region13: #{decoder_forward.27} parent=1 // pred_fallthru
      _
    %p16 = scmp.eq.s32.totalorder 0, 0
    // Predicated region
    $region14: #{decoder_forward.27} parent=1 // pred_check
      %p17 = pneg %p16
    $region15: #{decoder_forward.27} parent=1 // pred_check_branch
      %19 = sbr.rel (%p17) target = $region17
    $region16: #{decoder_forward.27} parent=1 // pred_region
      %vm20 = vcmask 130048
      %21 = vst.msk [vmem:[#allocation2] sm:$0xff] %vm20, 0.0
      %22 = vst.msk [vmem:[#allocation2 + $0x8] sm:$0xff] %vm20, 0.0
    $region17: #{decoder_forward.27} parent=1 // pred_fallthru
      _
    %v23 = vld [vmem:[#allocation2] sm:$0xff]
    %v24 = vld [vmem:[#allocation2 + $0x8] sm:$0xff]
    %v25 = vld [vmem:[%s0] sm:$0xff]
    %v26 = vld [vmem:[%s0 + $0x8] sm:$0xff]
    %v27 = vpack.c.bf16 %v26, %v25
    %v28 = vld [vmem:[%s1] sm:$0xff]
    %v29 = vld [vmem:[%s1 + $0x8] sm:$0xff]
    %v30 = vld [vmem:[%s1 + $0x10] sm:$0xff]
    %v31 = vld [vmem:[%s1 + $0x18] sm:$0xff]
    %v32 = vpack.c.bf16 %v29, %v28
    %v33 = vpack.c.bf16 %v31, %v30
    %vm34 = vcmask 261120
    %v36 = vsel %vm34, %v27, 0
    %38 = vmatprep.subr.bf16.mxu0 0
    %39 = vmatpush1.bf16.msra.mxu0 0
    %40 = vmatprep.subr.bf16.mxu0 0
    %41 = vmatpush1.bf16.msra.mxu0 0
    %42 = vmatprep.subr.bf16.mxu0 0
    %43 = vmatpush1.bf16.msra.mxu0 0
    %44 = vmatprep.subr.bf16.mxu0 0
    %45 = vmatpush1.bf16.msra.mxu0 0
    %46 = vmatprep.subr.bf16.mxu0 0
    %47 = vmatpush1.bf16.msra.mxu0 0
    %48 = vmatprep.subr.bf16.mxu0 0
    %49 = vmatpush1.bf16.msra.mxu0 0
    %50 = vmatprep.subr.bf16.mxu0 0
    %51 = vmatpush1.bf16.msra.mxu0 %v33
    %52 = vmatprep.subr.bf16.mxu0 0
    %53 = vmatpush1.bf16.msra.mxu0 %v32
    %54 = vmatprep.subr.bf16.mxu0 0
    %55 = vmatpush2.bf16.msra.mxu0 0
    %56 = vmatprep.subr.bf16.mxu0 0
    %57 = vmatpush2.bf16.msra.mxu0 0
    %58 = vmatprep.subr.bf16.mxu0 0
    %59 = vmatpush2.bf16.msra.mxu0 0
    %60 = vmatprep.subr.bf16.mxu0 0
    %61 = vmatpush2.bf16.msra.mxu0 0
    %62 = vmatprep.subr.bf16.mxu0 0
    %63 = vmatpush2.bf16.msra.mxu0 0
    %64 = vmatprep.subr.bf16.mxu0 0
    %65 = vmatpush2.bf16.msra.mxu0 0
    %66 = vmatprep.subr.bf16.mxu0 0
    %67 = vmatpush2.bf16.msra.mxu0 0
    %68 = vmatprep.subr.bf16.mxu0 0
    %69 = vmatpush2.bf16.msra.mxu0 0
    %70 = vmatprep.mubr.bf16.mxu0 0
    %71 = vmatmul.mubr.bf16.gmra.mxu0 %v36
    %v72 = vpop.f32.mrf.mxu0
    %v73 = vadd.f32 0.0, %v72
    %v74 = vpop.f32.mrf.mxu0
    %v75 = vpop.f32.mrf.mxu0
    %v76 = vadd.f32 0.0, %v75
    %v77 = vpop.f32.mrf.mxu0
    %78 = vdwg.mxu0
    %v79 = vadd.f32 %v23, %v73
    %v80 = vadd.f32 %v24, %v76
    %vm81 = vcmask 130048
    %82 = vst.msk [vmem:[#allocation2] sm:$0xff] %vm81, %v79
    %83 = vst.msk [vmem:[#allocation2 + $0x8] sm:$0xff] %vm81, %v80
    // Predicated region
    $region18: #{decoder_forward.27} parent=1 // pred_check
      %p84 = pneg %p16
    $region19: #{decoder_forward.27} parent=1 // pred_check_branch
      %86 = sbr.rel (%p84) target = $region21
    $region20: #{decoder_forward.27} parent=1 // pred_region
      %v87 = vld [vmem:[#allocation2] sm:$0xff]
      %v88 = vld [vmem:[#allocation2 + $0x8] sm:$0xff]
      %v89 = vld [vmem:[%s2] sm:$0x1]
      %v91 = vlaneseq
      %v92 = vshrl.u32 %v91, 7
      %v93 = vsub.s32 0, %v92
      %v94 = vrot.slane %v89, %v93
      %v96 = vadd.f32 %v87, %v94
      %v97 = vadd.f32 %v88, %v94
      %98 = vst.msk [vmem:[#allocation3] sm:$0xff] %vm81, %v96
      %99 = vst.msk [vmem:[#allocation3 + $0x8] sm:$0xff] %vm81, %v97
    $region21: #{decoder_forward.27} parent=1 // pred_fallthru
      _
    // Predicated region
    $region22: #{decoder_forward.27} parent=1 // pred_check
      _
    $region23: #{decoder_forward.27} parent=1 // pred_check_branch
      %101 = sbr.rel (0) target = $region25
    $region24: #{decoder_forward.27} parent=1 // pred_region
      %s103 = ssub.s32 256, 256
      %104 = vsyncadd [#allocation4], %s103
      %s105 = sshll.u32 [#allocation3], 4
      %s106 = int_to_ptr.vmem [resolvable:$true] %s105
      %111 = dma.vmem_to_hbm [thread:$0]  %s106, 256, %s3, [#allocation4], 128, 128, 8
    $region25: #{decoder_forward.27} parent=1 // pred_fallthru
      _
    // Predicated region
    $region26: #{decoder_forward.27} parent=1 // pred_check
      _
    $region27: #{decoder_forward.27} parent=1 // pred_check_branch
      %113 = sbr.rel (0) target = $region29
    $region28: #{decoder_forward.27} parent=1 // pred_region
      %114 = dma.done [#allocation4], 256
    $region29: #{decoder_forward.27} parent=1 // pred_fallthru
      _
    %115 = vsyncpa [#allocation4], 1

</llo_original>
